<compile_context>
chip_gen: v6e
topology: v6e:2x2x1
jax: 0.10.0
libtpu: 0.0.40
codegen_flags: <defaults>
</compile_context>

<pallas_src>
import functools

import jax
import jax.numpy as jnp
from jax import lax
from jax.experimental import pallas as pl
from jax.experimental.pallas import tpu as pltpu

# ---------------- small ViT config (consistent with the module) ----------------
IMG = 16          # img_size
PATCH = 4         # patch_size
IN_CH = 3         # in_channels
EMBED = 32        # embed_dim
LAYERS = 2        # num_layers
HEADS = 4         # num_heads
CLASSES = 10      # num_classes
MLP_RATIO = 4

N_PATCHES = (IMG // PATCH) ** 2          # 16
SEQ = N_PATCHES + 1                      # 17 (cls token + patches)
HEAD_DIM = EMBED // HEADS                # 8
HIDDEN = EMBED * MLP_RATIO               # 128
PATCH_DIM = IN_CH * PATCH * PATCH        # 48
LN_EPS = 1e-5

_INV_SQRT2 = 0.7071067811865476
_ATTN_SCALE = 1.0 / float(HEAD_DIM) ** 0.5


# ------------------------------- kernel helpers --------------------------------
def _layernorm(x, gamma, beta):
    mu = jnp.mean(x, axis=-1, keepdims=True)
    var = jnp.mean((x - mu) ** 2, axis=-1, keepdims=True)
    return (x - mu) * lax.rsqrt(var + LN_EPS) * gamma + beta


def _erf(x):
    # Abramowitz & Stegun 7.1.26 polynomial erf (max abs err ~1.5e-7): uses only
    # exp / div / select, all of which lower on Mosaic.  Matches torch's exact
    # erf-GELU to well below bf16 matmul noise.
    a1, a2, a3, a4, a5 = 0.254829592, -0.284496736, 1.421413741, -1.453152027, 1.061405429
    pp = 0.3275911
    ax = jnp.abs(x)
    t = 1.0 / (1.0 + pp * ax)
    poly = ((((a5 * t + a4) * t + a3) * t + a2) * t + a1) * t
    y = 1.0 - poly * jnp.exp(-ax * ax)
    return jnp.where(x >= 0.0, y, -y)


def _gelu_exact(x):
    # matches torch.nn.GELU() default (erf formulation)
    return 0.5 * x * (1.0 + _erf(x * _INV_SQRT2))


def _bf16_dot(a, w_bf16):
    # bf16 MXU operands, f32 accumulation (LN/softmax/residual stay f32).
    return jnp.dot(a.astype(jnp.bfloat16), w_bf16, preferred_element_type=jnp.float32)


# ------------------------------ fused ViT kernel -------------------------------
def vit_fused_kernel(patches_ref, patch_w, consts, pos_emb,
                     wqkv, bqkv, wo, w1, b1, w2, lnvecs,
                     head_w, head_b, o_ref, *, b_tile):
    """One grid step = B_TILE sequences, full forward pass, everything in VMEM.

    consts  : (4, E)  = [cls_token, patch_bias, final_norm_gamma, final_norm_beta]
    lnvecs  : (L, 6, E) = [ln1_g, ln1_b, attn_proj_bias, ln2_g, ln2_b, mlp_fc2_bias]
    wqkv    : (L, E, 3E) fused q|k|v projection (bf16), bqkv: (L, 1, 3E)
    """
    m = b_tile * SEQ

    # ---- patch embedding (host-side padded dummy row 0 is overwritten below) ----
    p = patches_ref[...].reshape(m, PATCH_DIM)
    emb = _bf16_dot(p, patch_w[...]) + consts[1:2, :]              # (M, E)

    # ---- cls token into row 0 of every sequence + positional embedding ----
    emb3 = emb.reshape(b_tile, SEQ, EMBED)
    seq_ids = lax.broadcasted_iota(jnp.int32, (b_tile, SEQ, EMBED), 1)
    cls_row = consts[0:1, :].reshape(1, 1, EMBED)
    x = (jnp.where(seq_ids == 0, cls_row, emb3)
         + pos_emb[...].reshape(1, SEQ, EMBED)).reshape(m, EMBED)  # (M, E), f32

    for l in range(LAYERS):                                        # static unroll
        lv = lnvecs[l]                                             # (6, E)

        # ----- attention branch: fused lane-dense QKV, per-head lane slices -----
        xn = _layernorm(x, lv[0:1, :], lv[1:2, :])                 # (M, E)
        qkv = _bf16_dot(xn, wqkv[l]) + bqkv[l]                     # (M, 3E)
        qkv3 = qkv.reshape(b_tile, SEQ, 3 * EMBED)

        ctx_heads = []
        for h in range(HEADS):                                     # static unroll
            q_h = qkv3[:, :, h * HEAD_DIM:(h + 1) * HEAD_DIM]
            k_h = qkv3[:, :, EMBED + h * HEAD_DIM:EMBED + (h + 1) * HEAD_DIM]
            v_h = qkv3[:, :, 2 * EMBED + h * HEAD_DIM:2 * EMBED + (h + 1) * HEAD_DIM]

            s = jnp.einsum('bqd,bkd->bqk', q_h, k_h,
                           preferred_element_type=jnp.float32) * _ATTN_SCALE
            s = s - jnp.max(s, axis=-1, keepdims=True)
            e = jnp.exp(s)
            p_attn = e * pl.reciprocal(jnp.sum(e, axis=-1, keepdims=True), approx=True)
            ctx_heads.append(jnp.einsum('bqk,bkd->bqd', p_attn, v_h,
                                        preferred_element_type=jnp.float32))

        # heads concatenated along lanes == torch's transpose(1,2).reshape(B,S,E)
        ctx = jnp.concatenate(ctx_heads, axis=-1).reshape(m, EMBED)
        x = x + _bf16_dot(ctx, wo[l]) + lv[2:3, :]                 # single K=32 out-proj

        # ----- MLP branch -----
        xn2 = _layernorm(x, lv[3:4, :], lv[4:5, :])
        hdn = _gelu_exact(_bf16_dot(xn2, w1[l]) + b1[l])
        x = x + _bf16_dot(hdn, w2[l]) + lv[5:6, :]

    # ---- final layernorm on cls tokens + classifier head ----
    x3 = x.reshape(b_tile, SEQ, EMBED)
    cls_tok = x3[:, 0:1, :].reshape(b_tile, EMBED)                 # (B_TILE, E)
    cls_out = _layernorm(cls_tok, consts[2:3, :], consts[3:4, :])
    o_ref[0] = _bf16_dot(cls_out, head_w[...]) + head_b[...]       # (B_TILE, CLASSES)


# ------------------------------- host-side glue -------------------------------
def extract_patches(x):
    # x: (B, C, H, W) NCHW -> (B, n_patches, C*p*p), per-patch ordering (c, di, dj)
    B, C, H, W = x.shape
    hp, wp = H // PATCH, W // PATCH
    x = x.reshape(B, C, hp, PATCH, wp, PATCH)
    x = x.transpose(0, 2, 4, 1, 3, 5)
    return x.reshape(B, hp * wp, C * PATCH * PATCH)


def init_params(key):
    params = {}

    def nrm(k, shape, std=0.02):
        return jax.random.normal(k, shape, jnp.float32) * std

    keys = iter(jax.random.split(key, 8 + LAYERS * 8))
    params["patch_w"] = nrm(next(keys), (PATCH_DIM, EMBED))
    params["patch_b"] = jnp.zeros((1, EMBED), jnp.float32)
    params["cls_token"] = nrm(next(keys), (1, 1, EMBED))
    params["pos_embed"] = nrm(next(keys), (1, SEQ, EMBED))

    blocks = []
    for _ in range(LAYERS):
        blk = dict(
            ln1_g=jnp.ones((1, EMBED), jnp.float32),
            ln1_b=jnp.zeros((1, EMBED), jnp.float32),
            wq=nrm(next(keys), (EMBED, EMBED)), bq=jnp.zeros((1, EMBED), jnp.float32),
            wk=nrm(next(keys), (EMBED, EMBED)), bk=jnp.zeros((1, EMBED), jnp.float32),
            wv=nrm(next(keys), (EMBED, EMBED)), bv=jnp.zeros((1, EMBED), jnp.float32),
            wo=nrm(next(keys), (EMBED, EMBED)), bo=jnp.zeros((1, EMBED), jnp.float32),
            ln2_g=jnp.ones((1, EMBED), jnp.float32),
            ln2_b=jnp.zeros((1, EMBED), jnp.float32),
            w1=nrm(next(keys), (EMBED, HIDDEN)), b1=jnp.zeros((1, HIDDEN), jnp.float32),
            w2=nrm(next(keys), (HIDDEN, EMBED)), b2=jnp.zeros((1, EMBED), jnp.float32),
        )
        blocks.append(blk)
    params["blocks"] = blocks

    params["norm_g"] = jnp.ones((1, EMBED), jnp.float32)
    params["norm_b"] = jnp.zeros((1, EMBED), jnp.float32)
    params["head_w"] = nrm(next(keys), (EMBED, CLASSES))
    params["head_b"] = jnp.zeros((1, CLASSES), jnp.float32)
    return params


def _prepare_weights(params):
    """Pack weights: fused QKV slab, stacked per-layer LN/bias vectors, bf16
    pre-cast of all MXU weight slabs.  Q/K/V column order [q(h,d)|k(h,d)|v(h,d)]
    matches the kernel's lane-slice indexing and torch's (3,H,Dh) reshape."""
    blocks = params["blocks"]

    def stk(name):
        return jnp.stack([blk[name] for blk in blocks], axis=0)

    bf16 = jnp.bfloat16
    wqkv = jnp.concatenate([stk("wq"), stk("wk"), stk("wv")], axis=-1)   # (L, E, 3E)
    bqkv = jnp.concatenate([stk("bq"), stk("bk"), stk("bv")], axis=-1)   # (L, 1, 3E)
    lnvecs = jnp.concatenate([stk("ln1_g"), stk("ln1_b"), stk("bo"),
                              stk("ln2_g"), stk("ln2_b"), stk("b2")], axis=1)  # (L, 6, E)
    consts = jnp.concatenate([params["cls_token"].reshape(1, EMBED),
                              params["patch_b"].reshape(1, EMBED),
                              params["norm_g"].reshape(1, EMBED),
                              params["norm_b"].reshape(1, EMBED)], axis=0)      # (4, E)

    return (
        params["patch_w"].astype(bf16),
        consts,
        params["pos_embed"].reshape(SEQ, EMBED),
        wqkv.astype(bf16), bqkv,
        stk("wo").astype(bf16),
        stk("w1").astype(bf16), stk("b1"),
        stk("w2").astype(bf16),
        lnvecs,
        params["head_w"].astype(bf16), params["head_b"],
    )


def _pick_btile(batch):
    # Target M = B_TILE*SEQ >= 256 (fills MXU rows on v6e/v7x, >=128 for v5e)
    # while keeping the grid length >= 2 when the batch allows (v7x megacore).
    target = 16                      # 16 * 17 = 272 rows
    if batch >= 2 * target:
        return target
    return max(1, batch // 2) if batch >= 2 else 1


def _const_spec(arr):
    nd = arr.ndim
    return pl.BlockSpec(arr.shape, lambda b, _nd=nd: (0,) * _nd)


@jax.jit
def vit_forward(x, params):
    batch = x.shape[0]
    bt = _pick_btile(batch)
    steps = pl.cdiv(batch, bt)
    bp = steps * bt

    patches = extract_patches(x)                                   # (B, N_PATCHES, PD)
    # leading dummy row = slot for the cls token (overwritten in-kernel),
    # plus zero-pad the batch up to a multiple of B_TILE.
    patches = jnp.pad(patches, ((0, bp - batch), (1, 0), (0, 0)))  # (Bp, SEQ, PD)

    weights = _prepare_weights(params)
    kernel = functools.partial(vit_fused_kernel, b_tile=bt)

    out = pl.pallas_call(
        kernel,
        out_shape=jax.ShapeDtypeStruct((steps, bt, CLASSES), jnp.float32),
        grid=(steps,),
        in_specs=[pl.BlockSpec((bt, SEQ, PATCH_DIM), lambda b: (b, 0, 0))]
                 + [_const_spec(w) for w in weights],
        out_specs=pl.BlockSpec((1, bt, CLASSES), lambda b: (b, 0, 0)),
        compiler_params=pltpu.CompilerParams(
            dimension_semantics=("parallel",)),   # v7x: shard batch tiles over both TCs
    )(patches, *weights)

    return out.reshape(bp, CLASSES)[:batch]


if __name__ == "__main__":
    key = jax.random.PRNGKey(0)
    kx, kp = jax.random.split(key)
    x = jax.random.normal(kx, (2, IN_CH, IMG, IMG), jnp.float32)   # NCHW, batch=2
    params = init_params(kp)

    logits = vit_forward(x, params)
    jax.block_until_ready(logits)
    assert logits.shape == (2, CLASSES)
    print("KERNEL_OK")
</pallas_src>

<mosaic_0001>
module attributes {stable_mosaic.version = 11 : i64} {
  func.func @vit_fused_kernel(%arg0: i32, %arg1: memref<1x17x48xf32, #tpu.memory_space<vmem>>, %arg2: memref<48x32xbf16, #tpu.memory_space<vmem>>, %arg3: memref<4x32xf32, #tpu.memory_space<vmem>>, %arg4: memref<17x32xf32, #tpu.memory_space<vmem>>, %arg5: memref<2x32x96xbf16, #tpu.memory_space<vmem>>, %arg6: memref<2x1x96xf32, #tpu.memory_space<vmem>>, %arg7: memref<2x32x32xbf16, #tpu.memory_space<vmem>>, %arg8: memref<2x32x128xbf16, #tpu.memory_space<vmem>>, %arg9: memref<2x1x128xf32, #tpu.memory_space<vmem>>, %arg10: memref<2x128x32xbf16, #tpu.memory_space<vmem>>, %arg11: memref<2x6x32xf32, #tpu.memory_space<vmem>>, %arg12: memref<32x10xbf16, #tpu.memory_space<vmem>>, %arg13: memref<1x10xf32, #tpu.memory_space<vmem>>, %arg14: memref<1x1x10xf32, #tpu.memory_space<vmem>>) attributes {dimension_semantics = [#tpu.dimension_semantics<parallel>], iteration_bounds = array<i64: 2>, scalar_prefetch = 0 : i64, scratch_operands = 0 : i64, tpu.core_type = #tpu.core_type<tc>, window_params = [{transform_indices = @transform_0, window_bounds = array<i64: 1, 17, 48>}, {pipeline_mode = #tpu.pipeline_mode<synchronous>, transform_indices = @transform_1, window_bounds = array<i64: 48, 32>}, {pipeline_mode = #tpu.pipeline_mode<synchronous>, transform_indices = @transform_2, window_bounds = array<i64: 4, 32>}, {pipeline_mode = #tpu.pipeline_mode<synchronous>, transform_indices = @transform_3, window_bounds = array<i64: 17, 32>}, {pipeline_mode = #tpu.pipeline_mode<synchronous>, transform_indices = @transform_4, window_bounds = array<i64: 2, 32, 96>}, {pipeline_mode = #tpu.pipeline_mode<synchronous>, transform_indices = @transform_5, window_bounds = array<i64: 2, 1, 96>}, {pipeline_mode = #tpu.pipeline_mode<synchronous>, transform_indices = @transform_6, window_bounds = array<i64: 2, 32, 32>}, {pipeline_mode = #tpu.pipeline_mode<synchronous>, transform_indices = @transform_7, window_bounds = array<i64: 2, 32, 128>}, {pipeline_mode = #tpu.pipeline_mode<synchronous>, transform_indices = @transform_8, window_bounds = array<i64: 2, 1, 128>}, {pipeline_mode = #tpu.pipeline_mode<synchronous>, transform_indices = @transform_9, window_bounds = array<i64: 2, 128, 32>}, {pipeline_mode = #tpu.pipeline_mode<synchronous>, transform_indices = @transform_10, window_bounds = array<i64: 2, 6, 32>}, {pipeline_mode = #tpu.pipeline_mode<synchronous>, transform_indices = @transform_11, window_bounds = array<i64: 32, 10>}, {pipeline_mode = #tpu.pipeline_mode<synchronous>, transform_indices = @transform_12, window_bounds = array<i64: 1, 10>}, {transform_indices = @transform_13, window_bounds = array<i64: 1, 1, 10>}]} {
    %c0 = arith.constant 0 : index
    %c0_0 = arith.constant 0 : index
    %c0_1 = arith.constant 0 : index
    %0 = vector.load %arg1[%c0, %c0_0, %c0_1] : memref<1x17x48xf32, #tpu.memory_space<vmem>>, vector<1x17x48xf32>
    %1 = vector.shape_cast %0 : vector<1x17x48xf32> to vector<17x48xf32>
    %c0_2 = arith.constant 0 : index
    %c0_3 = arith.constant 0 : index
    %2 = vector.load %arg2[%c0_2, %c0_3] : memref<48x32xbf16, #tpu.memory_space<vmem>>, vector<48x32xbf16>
    %3 = arith.truncf %1 : vector<17x48xf32> to vector<17x48xbf16>
    %cst = arith.constant dense<0.000000e+00> : vector<17x32xf32>
    %4 = tpu.matmul %3, %2, %cst {dimension_numbers = #tpu.dot_dimension_numbers<[1], [0], [0], [1], [0, 0, 1, 1], [], []>} : vector<17x48xbf16>, vector<48x32xbf16>, vector<17x32xf32> -> vector<17x32xf32>
    %c1 = arith.constant 1 : index
    %c0_4 = arith.constant 0 : index
    %5 = vector.load %arg3[%c1, %c0_4] : memref<4x32xf32, #tpu.memory_space<vmem>>, vector<1x32xf32>
    %6 = vector.broadcast %5 : vector<1x32xf32> to vector<17x32xf32>
    %7 = arith.addf %4, %6 : vector<17x32xf32>
    %8 = vector.shape_cast %7 : vector<17x32xf32> to vector<1x17x32xf32>
    %9 = tpu.iota {dimensions = array<i32: 1>} : vector<1x17x32xi32>
    %c0_5 = arith.constant 0 : index
    %c0_6 = arith.constant 0 : index
    %10 = vector.load %arg3[%c0_5, %c0_6] : memref<4x32xf32, #tpu.memory_space<vmem>>, vector<1x32xf32>
    %11 = vector.shape_cast %10 : vector<1x32xf32> to vector<1x1x32xf32>
    %c0_i32 = arith.constant 0 : i32
    %12 = vector.broadcast %c0_i32 : i32 to vector<1x17x32xi32>
    %13 = arith.cmpi eq, %9, %12 : vector<1x17x32xi32>
    %14 = vector.shape_cast %11 : vector<1x1x32xf32> to vector<1x1x32xf32>
    %15 = vector.broadcast %14 : vector<1x1x32xf32> to vector<1x17x32xf32>
    %16 = arith.select %13, %15, %8 : vector<1x17x32xi1>, vector<1x17x32xf32>
    %c0_7 = arith.constant 0 : index
    %c0_8 = arith.constant 0 : index
    %17 = vector.load %arg4[%c0_7, %c0_8] : memref<17x32xf32, #tpu.memory_space<vmem>>, vector<17x32xf32>
    %18 = vector.shape_cast %17 : vector<17x32xf32> to vector<1x17x32xf32>
    %19 = arith.addf %16, %18 : vector<1x17x32xf32>
    %20 = vector.shape_cast %19 : vector<1x17x32xf32> to vector<17x32xf32>
    %c0_9 = arith.constant 0 : index
    %c0_10 = arith.constant 0 : index
    %c0_11 = arith.constant 0 : index
    %21 = vector.load %arg11[%c0_9, %c0_10, %c0_11] : memref<2x6x32xf32, #tpu.memory_space<vmem>>, vector<1x6x32xf32>
    %22 = vector.shape_cast %21 : vector<1x6x32xf32> to vector<6x32xf32>
    %23 = vector.extract_strided_slice %22 {offsets = [0, 0], sizes = [1, 32], strides = [1, 1]} : vector<6x32xf32> to vector<1x32xf32>
    %24 = vector.extract_strided_slice %22 {offsets = [1, 0], sizes = [1, 32], strides = [1, 1]} : vector<6x32xf32> to vector<1x32xf32>
    %cst_12 = arith.constant dense<0.000000e+00> : vector<17xf32>
    %25 = vector.multi_reduction <add>, %20, %cst_12 [1] : vector<17x32xf32> to vector<17xf32>
    %26 = vector.shape_cast %25 : vector<17xf32> to vector<17x1xf32>
    %cst_13 = arith.constant 3.200000e+01 : f32
    %27 = vector.broadcast %cst_13 : f32 to vector<17x1xf32>
    %28 = arith.divf %26, %27 : vector<17x1xf32>
    %29 = vector.broadcast %28 : vector<17x1xf32> to vector<17x32xf32>
    %30 = arith.subf %20, %29 : vector<17x32xf32>
    %31 = arith.mulf %30, %30 : vector<17x32xf32>
    %cst_14 = arith.constant dense<0.000000e+00> : vector<17xf32>
    %32 = vector.multi_reduction <add>, %31, %cst_14 [1] : vector<17x32xf32> to vector<17xf32>
    %33 = vector.shape_cast %32 : vector<17xf32> to vector<17x1xf32>
    %cst_15 = arith.constant 3.200000e+01 : f32
    %34 = vector.broadcast %cst_15 : f32 to vector<17x1xf32>
    %35 = arith.divf %33, %34 : vector<17x1xf32>
    %36 = vector.broadcast %28 : vector<17x1xf32> to vector<17x32xf32>
    %37 = arith.subf %20, %36 : vector<17x32xf32>
    %cst_16 = arith.constant 9.99999974E-6 : f32
    %38 = vector.broadcast %cst_16 : f32 to vector<17x1xf32>
    %39 = arith.addf %35, %38 : vector<17x1xf32>
    %40 = math.rsqrt %39 : vector<17x1xf32>
    %41 = vector.broadcast %40 : vector<17x1xf32> to vector<17x32xf32>
    %42 = arith.mulf %37, %41 : vector<17x32xf32>
    %43 = vector.broadcast %23 : vector<1x32xf32> to vector<17x32xf32>
    %44 = arith.mulf %42, %43 : vector<17x32xf32>
    %45 = vector.broadcast %24 : vector<1x32xf32> to vector<17x32xf32>
    %46 = arith.addf %44, %45 : vector<17x32xf32>
    %c0_17 = arith.constant 0 : index
    %c0_18 = arith.constant 0 : index
    %c0_19 = arith.constant 0 : index
    %47 = vector.load %arg5[%c0_17, %c0_18, %c0_19] : memref<2x32x96xbf16, #tpu.memory_space<vmem>>, vector<1x32x96xbf16>
    %48 = vector.shape_cast %47 : vector<1x32x96xbf16> to vector<32x96xbf16>
    %49 = arith.truncf %46 : vector<17x32xf32> to vector<17x32xbf16>
    %cst_20 = arith.constant dense<0.000000e+00> : vector<17x96xf32>
    %50 = tpu.matmul %49, %48, %cst_20 {dimension_numbers = #tpu.dot_dimension_numbers<[1], [0], [0], [1], [0, 0, 1, 1], [], []>} : vector<17x32xbf16>, vector<32x96xbf16>, vector<17x96xf32> -> vector<17x96xf32>
    %c0_21 = arith.constant 0 : index
    %c0_22 = arith.constant 0 : index
    %c0_23 = arith.constant 0 : index
    %51 = vector.load %arg6[%c0_21, %c0_22, %c0_23] : memref<2x1x96xf32, #tpu.memory_space<vmem>>, vector<1x1x96xf32>
    %52 = vector.shape_cast %51 : vector<1x1x96xf32> to vector<1x96xf32>
    %53 = vector.broadcast %52 : vector<1x96xf32> to vector<17x96xf32>
    %54 = arith.addf %50, %53 : vector<17x96xf32>
    %55 = vector.shape_cast %54 : vector<17x96xf32> to vector<1x17x96xf32>
    %56 = vector.extract_strided_slice %55 {offsets = [0, 0, 0], sizes = [1, 17, 8], strides = [1, 1, 1]} : vector<1x17x96xf32> to vector<1x17x8xf32>
    %57 = vector.extract_strided_slice %55 {offsets = [0, 0, 32], sizes = [1, 17, 8], strides = [1, 1, 1]} : vector<1x17x96xf32> to vector<1x17x8xf32>
    %58 = vector.extract_strided_slice %55 {offsets = [0, 0, 64], sizes = [1, 17, 8], strides = [1, 1, 1]} : vector<1x17x96xf32> to vector<1x17x8xf32>
    "tpu.trace_start"() <{level = 10 : i32, message = "bqd,bkd->bqk"}> : () -> ()
    %cst_24 = arith.constant dense<0.000000e+00> : vector<1x17x17xf32>
    %59 = tpu.matmul %56, %57, %cst_24 {dimension_numbers = #tpu.dot_dimension_numbers<[2], [2], [1], [1], [0, 0, 0, 1, 1, 1], [0], [0]>} : vector<1x17x8xf32>, vector<1x17x8xf32>, vector<1x17x17xf32> -> vector<1x17x17xf32>
    "tpu.trace_stop"() : () -> ()
    %cst_25 = arith.constant 0.353553385 : f32
    %60 = vector.broadcast %cst_25 : f32 to vector<1x17x17xf32>
    %61 = arith.mulf %59, %60 : vector<1x17x17xf32>
    %cst_26 = arith.constant dense<0xFF800000> : vector<1x17xf32>
    %62 = vector.multi_reduction <maximumf>, %61, %cst_26 [2] : vector<1x17x17xf32> to vector<1x17xf32>
    %63 = vector.shape_cast %62 : vector<1x17xf32> to vector<1x17x1xf32>
    %64 = vector.broadcast %63 : vector<1x17x1xf32> to vector<1x17x17xf32>
    %65 = arith.subf %61, %64 : vector<1x17x17xf32>
    %66 = math.exp %65 : vector<1x17x17xf32>
    %cst_27 = arith.constant dense<0.000000e+00> : vector<1x17xf32>
    %67 = vector.multi_reduction <add>, %66, %cst_27 [2] : vector<1x17x17xf32> to vector<1x17xf32>
    %68 = vector.shape_cast %67 : vector<1x17xf32> to vector<1x17x1xf32>
    %69 = tpu.reciprocal %68 {approx = true} : vector<1x17x1xf32> -> vector<1x17x1xf32>
    %70 = vector.broadcast %69 : vector<1x17x1xf32> to vector<1x17x17xf32>
    %71 = arith.mulf %66, %70 : vector<1x17x17xf32>
    "tpu.trace_start"() <{level = 10 : i32, message = "bqk,bkd->bqd"}> : () -> ()
    %cst_28 = arith.constant dense<0.000000e+00> : vector<1x17x8xf32>
    %72 = tpu.matmul %71, %58, %cst_28 {dimension_numbers = #tpu.dot_dimension_numbers<[2], [1], [1], [2], [0, 0, 0, 1, 1, 2], [0], [0]>} : vector<1x17x17xf32>, vector<1x17x8xf32>, vector<1x17x8xf32> -> vector<1x17x8xf32>
    "tpu.trace_stop"() : () -> ()
    %73 = vector.extract_strided_slice %55 {offsets = [0, 0, 8], sizes = [1, 17, 8], strides = [1, 1, 1]} : vector<1x17x96xf32> to vector<1x17x8xf32>
    %74 = vector.extract_strided_slice %55 {offsets = [0, 0, 40], sizes = [1, 17, 8], strides = [1, 1, 1]} : vector<1x17x96xf32> to vector<1x17x8xf32>
    %75 = vector.extract_strided_slice %55 {offsets = [0, 0, 72], sizes = [1, 17, 8], strides = [1, 1, 1]} : vector<1x17x96xf32> to vector<1x17x8xf32>
    "tpu.trace_start"() <{level = 10 : i32, message = "bqd,bkd->bqk"}> : () -> ()
    %cst_29 = arith.constant dense<0.000000e+00> : vector<1x17x17xf32>
    %76 = tpu.matmul %73, %74, %cst_29 {dimension_numbers = #tpu.dot_dimension_numbers<[2], [2], [1], [1], [0, 0, 0, 1, 1, 1], [0], [0]>} : vector<1x17x8xf32>, vector<1x17x8xf32>, vector<1x17x17xf32> -> vector<1x17x17xf32>
    "tpu.trace_stop"() : () -> ()
    %cst_30 = arith.constant 0.353553385 : f32
    %77 = vector.broadcast %cst_30 : f32 to vector<1x17x17xf32>
    %78 = arith.mulf %76, %77 : vector<1x17x17xf32>
    %cst_31 = arith.constant dense<0xFF800000> : vector<1x17xf32>
    %79 = vector.multi_reduction <maximumf>, %78, %cst_31 [2] : vector<1x17x17xf32> to vector<1x17xf32>
    %80 = vector.shape_cast %79 : vector<1x17xf32> to vector<1x17x1xf32>
    %81 = vector.broadcast %80 : vector<1x17x1xf32> to vector<1x17x17xf32>
    %82 = arith.subf %78, %81 : vector<1x17x17xf32>
    %83 = math.exp %82 : vector<1x17x17xf32>
    %cst_32 = arith.constant dense<0.000000e+00> : vector<1x17xf32>
    %84 = vector.multi_reduction <add>, %83, %cst_32 [2] : vector<1x17x17xf32> to vector<1x17xf32>
    %85 = vector.shape_cast %84 : vector<1x17xf32> to vector<1x17x1xf32>
    %86 = tpu.reciprocal %85 {approx = true} : vector<1x17x1xf32> -> vector<1x17x1xf32>
    %87 = vector.broadcast %86 : vector<1x17x1xf32> to vector<1x17x17xf32>
    %88 = arith.mulf %83, %87 : vector<1x17x17xf32>
    "tpu.trace_start"() <{level = 10 : i32, message = "bqk,bkd->bqd"}> : () -> ()
    %cst_33 = arith.constant dense<0.000000e+00> : vector<1x17x8xf32>
    %89 = tpu.matmul %88, %75, %cst_33 {dimension_numbers = #tpu.dot_dimension_numbers<[2], [1], [1], [2], [0, 0, 0, 1, 1, 2], [0], [0]>} : vector<1x17x17xf32>, vector<1x17x8xf32>, vector<1x17x8xf32> -> vector<1x17x8xf32>
    "tpu.trace_stop"() : () -> ()
    %90 = vector.extract_strided_slice %55 {offsets = [0, 0, 16], sizes = [1, 17, 8], strides = [1, 1, 1]} : vector<1x17x96xf32> to vector<1x17x8xf32>
    %91 = vector.extract_strided_slice %55 {offsets = [0, 0, 48], sizes = [1, 17, 8], strides = [1, 1, 1]} : vector<1x17x96xf32> to vector<1x17x8xf32>
    %92 = vector.extract_strided_slice %55 {offsets = [0, 0, 80], sizes = [1, 17, 8], strides = [1, 1, 1]} : vector<1x17x96xf32> to vector<1x17x8xf32>
    "tpu.trace_start"() <{level = 10 : i32, message = "bqd,bkd->bqk"}> : () -> ()
    %cst_34 = arith.constant dense<0.000000e+00> : vector<1x17x17xf32>
    %93 = tpu.matmul %90, %91, %cst_34 {dimension_numbers = #tpu.dot_dimension_numbers<[2], [2], [1], [1], [0, 0, 0, 1, 1, 1], [0], [0]>} : vector<1x17x8xf32>, vector<1x17x8xf32>, vector<1x17x17xf32> -> vector<1x17x17xf32>
    "tpu.trace_stop"() : () -> ()
    %cst_35 = arith.constant 0.353553385 : f32
    %94 = vector.broadcast %cst_35 : f32 to vector<1x17x17xf32>
    %95 = arith.mulf %93, %94 : vector<1x17x17xf32>
    %cst_36 = arith.constant dense<0xFF800000> : vector<1x17xf32>
    %96 = vector.multi_reduction <maximumf>, %95, %cst_36 [2] : vector<1x17x17xf32> to vector<1x17xf32>
    %97 = vector.shape_cast %96 : vector<1x17xf32> to vector<1x17x1xf32>
    %98 = vector.broadcast %97 : vector<1x17x1xf32> to vector<1x17x17xf32>
    %99 = arith.subf %95, %98 : vector<1x17x17xf32>
    %100 = math.exp %99 : vector<1x17x17xf32>
    %cst_37 = arith.constant dense<0.000000e+00> : vector<1x17xf32>
    %101 = vector.multi_reduction <add>, %100, %cst_37 [2] : vector<1x17x17xf32> to vector<1x17xf32>
    %102 = vector.shape_cast %101 : vector<1x17xf32> to vector<1x17x1xf32>
    %103 = tpu.reciprocal %102 {approx = true} : vector<1x17x1xf32> -> vector<1x17x1xf32>
    %104 = vector.broadcast %103 : vector<1x17x1xf32> to vector<1x17x17xf32>
    %105 = arith.mulf %100, %104 : vector<1x17x17xf32>
    "tpu.trace_start"() <{level = 10 : i32, message = "bqk,bkd->bqd"}> : () -> ()
    %cst_38 = arith.constant dense<0.000000e+00> : vector<1x17x8xf32>
    %106 = tpu.matmul %105, %92, %cst_38 {dimension_numbers = #tpu.dot_dimension_numbers<[2], [1], [1], [2], [0, 0, 0, 1, 1, 2], [0], [0]>} : vector<1x17x17xf32>, vector<1x17x8xf32>, vector<1x17x8xf32> -> vector<1x17x8xf32>
    "tpu.trace_stop"() : () -> ()
    %107 = vector.extract_strided_slice %55 {offsets = [0, 0, 24], sizes = [1, 17, 8], strides = [1, 1, 1]} : vector<1x17x96xf32> to vector<1x17x8xf32>
    %108 = vector.extract_strided_slice %55 {offsets = [0, 0, 56], sizes = [1, 17, 8], strides = [1, 1, 1]} : vector<1x17x96xf32> to vector<1x17x8xf32>
    %109 = vector.extract_strided_slice %55 {offsets = [0, 0, 88], sizes = [1, 17, 8], strides = [1, 1, 1]} : vector<1x17x96xf32> to vector<1x17x8xf32>
    "tpu.trace_start"() <{level = 10 : i32, message = "bqd,bkd->bqk"}> : () -> ()
    %cst_39 = arith.constant dense<0.000000e+00> : vector<1x17x17xf32>
    %110 = tpu.matmul %107, %108, %cst_39 {dimension_numbers = #tpu.dot_dimension_numbers<[2], [2], [1], [1], [0, 0, 0, 1, 1, 1], [0], [0]>} : vector<1x17x8xf32>, vector<1x17x8xf32>, vector<1x17x17xf32> -> vector<1x17x17xf32>
    "tpu.trace_stop"() : () -> ()
    %cst_40 = arith.constant 0.353553385 : f32
    %111 = vector.broadcast %cst_40 : f32 to vector<1x17x17xf32>
    %112 = arith.mulf %110, %111 : vector<1x17x17xf32>
    %cst_41 = arith.constant dense<0xFF800000> : vector<1x17xf32>
    %113 = vector.multi_reduction <maximumf>, %112, %cst_41 [2] : vector<1x17x17xf32> to vector<1x17xf32>
    %114 = vector.shape_cast %113 : vector<1x17xf32> to vector<1x17x1xf32>
    %115 = vector.broadcast %114 : vector<1x17x1xf32> to vector<1x17x17xf32>
    %116 = arith.subf %112, %115 : vector<1x17x17xf32>
    %117 = math.exp %116 : vector<1x17x17xf32>
    %cst_42 = arith.constant dense<0.000000e+00> : vector<1x17xf32>
    %118 = vector.multi_reduction <add>, %117, %cst_42 [2] : vector<1x17x17xf32> to vector<1x17xf32>
    %119 = vector.shape_cast %118 : vector<1x17xf32> to vector<1x17x1xf32>
    %120 = tpu.reciprocal %119 {approx = true} : vector<1x17x1xf32> -> vector<1x17x1xf32>
    %121 = vector.broadcast %120 : vector<1x17x1xf32> to vector<1x17x17xf32>
    %122 = arith.mulf %117, %121 : vector<1x17x17xf32>
    "tpu.trace_start"() <{level = 10 : i32, message = "bqk,bkd->bqd"}> : () -> ()
    %cst_43 = arith.constant dense<0.000000e+00> : vector<1x17x8xf32>
    %123 = tpu.matmul %122, %109, %cst_43 {dimension_numbers = #tpu.dot_dimension_numbers<[2], [1], [1], [2], [0, 0, 0, 1, 1, 2], [0], [0]>} : vector<1x17x17xf32>, vector<1x17x8xf32>, vector<1x17x8xf32> -> vector<1x17x8xf32>
    "tpu.trace_stop"() : () -> ()
    %124 = tpu.concatenate %72, %89, %106, %123 in 2 : vector<1x17x8xf32>, vector<1x17x8xf32>, vector<1x17x8xf32>, vector<1x17x8xf32> -> vector<1x17x32xf32>
    %125 = vector.shape_cast %124 : vector<1x17x32xf32> to vector<17x32xf32>
    %c0_44 = arith.constant 0 : index
    %c0_45 = arith.constant 0 : index
    %c0_46 = arith.constant 0 : index
    %126 = vector.load %arg7[%c0_44, %c0_45, %c0_46] : memref<2x32x32xbf16, #tpu.memory_space<vmem>>, vector<1x32x32xbf16>
    %127 = vector.shape_cast %126 : vector<1x32x32xbf16> to vector<32x32xbf16>
    %128 = arith.truncf %125 : vector<17x32xf32> to vector<17x32xbf16>
    %cst_47 = arith.constant dense<0.000000e+00> : vector<17x32xf32>
    %129 = tpu.matmul %128, %127, %cst_47 {dimension_numbers = #tpu.dot_dimension_numbers<[1], [0], [0], [1], [0, 0, 1, 1], [], []>} : vector<17x32xbf16>, vector<32x32xbf16>, vector<17x32xf32> -> vector<17x32xf32>
    %130 = arith.addf %20, %129 : vector<17x32xf32>
    %131 = vector.extract_strided_slice %22 {offsets = [2, 0], sizes = [1, 32], strides = [1, 1]} : vector<6x32xf32> to vector<1x32xf32>
    %132 = vector.broadcast %131 : vector<1x32xf32> to vector<17x32xf32>
    %133 = arith.addf %130, %132 : vector<17x32xf32>
    %134 = vector.extract_strided_slice %22 {offsets = [3, 0], sizes = [1, 32], strides = [1, 1]} : vector<6x32xf32> to vector<1x32xf32>
    %135 = vector.extract_strided_slice %22 {offsets = [4, 0], sizes = [1, 32], strides = [1, 1]} : vector<6x32xf32> to vector<1x32xf32>
    %cst_48 = arith.constant dense<0.000000e+00> : vector<17xf32>
    %136 = vector.multi_reduction <add>, %133, %cst_48 [1] : vector<17x32xf32> to vector<17xf32>
    %137 = vector.shape_cast %136 : vector<17xf32> to vector<17x1xf32>
    %cst_49 = arith.constant 3.200000e+01 : f32
    %138 = vector.broadcast %cst_49 : f32 to vector<17x1xf32>
    %139 = arith.divf %137, %138 : vector<17x1xf32>
    %140 = vector.broadcast %139 : vector<17x1xf32> to vector<17x32xf32>
    %141 = arith.subf %133, %140 : vector<17x32xf32>
    %142 = arith.mulf %141, %141 : vector<17x32xf32>
    %cst_50 = arith.constant dense<0.000000e+00> : vector<17xf32>
    %143 = vector.multi_reduction <add>, %142, %cst_50 [1] : vector<17x32xf32> to vector<17xf32>
    %144 = vector.shape_cast %143 : vector<17xf32> to vector<17x1xf32>
    %cst_51 = arith.constant 3.200000e+01 : f32
    %145 = vector.broadcast %cst_51 : f32 to vector<17x1xf32>
    %146 = arith.divf %144, %145 : vector<17x1xf32>
    %147 = vector.broadcast %139 : vector<17x1xf32> to vector<17x32xf32>
    %148 = arith.subf %133, %147 : vector<17x32xf32>
    %cst_52 = arith.constant 9.99999974E-6 : f32
    %149 = vector.broadcast %cst_52 : f32 to vector<17x1xf32>
    %150 = arith.addf %146, %149 : vector<17x1xf32>
    %151 = math.rsqrt %150 : vector<17x1xf32>
    %152 = vector.broadcast %151 : vector<17x1xf32> to vector<17x32xf32>
    %153 = arith.mulf %148, %152 : vector<17x32xf32>
    %154 = vector.broadcast %134 : vector<1x32xf32> to vector<17x32xf32>
    %155 = arith.mulf %153, %154 : vector<17x32xf32>
    %156 = vector.broadcast %135 : vector<1x32xf32> to vector<17x32xf32>
    %157 = arith.addf %155, %156 : vector<17x32xf32>
    %c0_53 = arith.constant 0 : index
    %c0_54 = arith.constant 0 : index
    %c0_55 = arith.constant 0 : index
    %158 = vector.load %arg8[%c0_53, %c0_54, %c0_55] : memref<2x32x128xbf16, #tpu.memory_space<vmem>>, vector<1x32x128xbf16>
    %159 = vector.shape_cast %158 : vector<1x32x128xbf16> to vector<32x128xbf16>
    %160 = arith.truncf %157 : vector<17x32xf32> to vector<17x32xbf16>
    %cst_56 = arith.constant dense<0.000000e+00> : vector<17x128xf32>
    %161 = tpu.matmul %160, %159, %cst_56 {dimension_numbers = #tpu.dot_dimension_numbers<[1], [0], [0], [1], [0, 0, 1, 1], [], []>} : vector<17x32xbf16>, vector<32x128xbf16>, vector<17x128xf32> -> vector<17x128xf32>
    %c0_57 = arith.constant 0 : index
    %c0_58 = arith.constant 0 : index
    %c0_59 = arith.constant 0 : index
    %162 = vector.load %arg9[%c0_57, %c0_58, %c0_59] : memref<2x1x128xf32, #tpu.memory_space<vmem>>, vector<1x1x128xf32>
    %163 = vector.shape_cast %162 : vector<1x1x128xf32> to vector<1x128xf32>
    %164 = vector.broadcast %163 : vector<1x128xf32> to vector<17x128xf32>
    %165 = arith.addf %161, %164 : vector<17x128xf32>
    %cst_60 = arith.constant 5.000000e-01 : f32
    %166 = vector.broadcast %cst_60 : f32 to vector<17x128xf32>
    %167 = arith.mulf %166, %165 : vector<17x128xf32>
    %cst_61 = arith.constant 0.707106769 : f32
    %168 = vector.broadcast %cst_61 : f32 to vector<17x128xf32>
    %169 = arith.mulf %165, %168 : vector<17x128xf32>
    %170 = math.absf %169 : vector<17x128xf32>
    %cst_62 = arith.constant 0.327591091 : f32
    %171 = vector.broadcast %cst_62 : f32 to vector<17x128xf32>
    %172 = arith.mulf %171, %170 : vector<17x128xf32>
    %cst_63 = arith.constant 1.000000e+00 : f32
    %173 = vector.broadcast %cst_63 : f32 to vector<17x128xf32>
    %174 = arith.addf %173, %172 : vector<17x128xf32>
    %cst_64 = arith.constant 1.000000e+00 : f32
    %175 = vector.broadcast %cst_64 : f32 to vector<17x128xf32>
    %176 = arith.divf %175, %174 : vector<17x128xf32>
    %cst_65 = arith.constant 1.06140542 : f32
    %177 = vector.broadcast %cst_65 : f32 to vector<17x128xf32>
    %178 = arith.mulf %177, %176 : vector<17x128xf32>
    %cst_66 = arith.constant -1.45315206 : f32
    %179 = vector.broadcast %cst_66 : f32 to vector<17x128xf32>
    %180 = arith.addf %178, %179 : vector<17x128xf32>
    %181 = arith.mulf %180, %176 : vector<17x128xf32>
    %cst_67 = arith.constant 1.42141378 : f32
    %182 = vector.broadcast %cst_67 : f32 to vector<17x128xf32>
    %183 = arith.addf %181, %182 : vector<17x128xf32>
    %184 = arith.mulf %183, %176 : vector<17x128xf32>
    %cst_68 = arith.constant -0.284496725 : f32
    %185 = vector.broadcast %cst_68 : f32 to vector<17x128xf32>
    %186 = arith.addf %184, %185 : vector<17x128xf32>
    %187 = arith.mulf %186, %176 : vector<17x128xf32>
    %cst_69 = arith.constant 0.254829586 : f32
    %188 = vector.broadcast %cst_69 : f32 to vector<17x128xf32>
    %189 = arith.addf %187, %188 : vector<17x128xf32>
    %190 = arith.mulf %189, %176 : vector<17x128xf32>
    %cst_70 = arith.constant 0.000000e+00 : f32
    %191 = vector.broadcast %cst_70 : f32 to vector<17x128xf32>
    %192 = arith.subf %191, %170 : vector<17x128xf32>
    %193 = arith.mulf %192, %170 : vector<17x128xf32>
    %194 = math.exp %193 : vector<17x128xf32>
    %195 = arith.mulf %190, %194 : vector<17x128xf32>
    %cst_71 = arith.constant 1.000000e+00 : f32
    %196 = vector.broadcast %cst_71 : f32 to vector<17x128xf32>
    %197 = arith.subf %196, %195 : vector<17x128xf32>
    %cst_72 = arith.constant 0.000000e+00 : f32
    %198 = vector.broadcast %cst_72 : f32 to vector<17x128xf32>
    %199 = arith.cmpf oge, %169, %198 : vector<17x128xf32>
    %cst_73 = arith.constant 0.000000e+00 : f32
    %200 = vector.broadcast %cst_73 : f32 to vector<17x128xf32>
    %201 = arith.subf %200, %197 : vector<17x128xf32>
    %202 = arith.select %199, %197, %201 : vector<17x128xi1>, vector<17x128xf32>
    %cst_74 = arith.constant 1.000000e+00 : f32
    %203 = vector.broadcast %cst_74 : f32 to vector<17x128xf32>
    %204 = arith.addf %203, %202 : vector<17x128xf32>
    %205 = arith.mulf %167, %204 : vector<17x128xf32>
    %c0_75 = arith.constant 0 : index
    %c0_76 = arith.constant 0 : index
    %c0_77 = arith.constant 0 : index
    %206 = vector.load %arg10[%c0_75, %c0_76, %c0_77] : memref<2x128x32xbf16, #tpu.memory_space<vmem>>, vector<1x128x32xbf16>
    %207 = vector.shape_cast %206 : vector<1x128x32xbf16> to vector<128x32xbf16>
    %208 = arith.truncf %205 : vector<17x128xf32> to vector<17x128xbf16>
    %cst_78 = arith.constant dense<0.000000e+00> : vector<17x32xf32>
    %209 = tpu.matmul %208, %207, %cst_78 {dimension_numbers = #tpu.dot_dimension_numbers<[1], [0], [0], [1], [0, 0, 1, 1], [], []>} : vector<17x128xbf16>, vector<128x32xbf16>, vector<17x32xf32> -> vector<17x32xf32>
    %210 = arith.addf %133, %209 : vector<17x32xf32>
    %211 = vector.extract_strided_slice %22 {offsets = [5, 0], sizes = [1, 32], strides = [1, 1]} : vector<6x32xf32> to vector<1x32xf32>
    %212 = vector.broadcast %211 : vector<1x32xf32> to vector<17x32xf32>
    %213 = arith.addf %210, %212 : vector<17x32xf32>
    %c1_79 = arith.constant 1 : index
    %c0_80 = arith.constant 0 : index
    %c0_81 = arith.constant 0 : index
    %214 = vector.load %arg11[%c1_79, %c0_80, %c0_81] : memref<2x6x32xf32, #tpu.memory_space<vmem>>, vector<1x6x32xf32>
    %215 = vector.shape_cast %214 : vector<1x6x32xf32> to vector<6x32xf32>
    %216 = vector.extract_strided_slice %215 {offsets = [0, 0], sizes = [1, 32], strides = [1, 1]} : vector<6x32xf32> to vector<1x32xf32>
    %217 = vector.extract_strided_slice %215 {offsets = [1, 0], sizes = [1, 32], strides = [1, 1]} : vector<6x32xf32> to vector<1x32xf32>
    %cst_82 = arith.constant dense<0.000000e+00> : vector<17xf32>
    %218 = vector.multi_reduction <add>, %213, %cst_82 [1] : vector<17x32xf32> to vector<17xf32>
    %219 = vector.shape_cast %218 : vector<17xf32> to vector<17x1xf32>
    %cst_83 = arith.constant 3.200000e+01 : f32
    %220 = vector.broadcast %cst_83 : f32 to vector<17x1xf32>
    %221 = arith.divf %219, %220 : vector<17x1xf32>
    %222 = vector.broadcast %221 : vector<17x1xf32> to vector<17x32xf32>
    %223 = arith.subf %213, %222 : vector<17x32xf32>
    %224 = arith.mulf %223, %223 : vector<17x32xf32>
    %cst_84 = arith.constant dense<0.000000e+00> : vector<17xf32>
    %225 = vector.multi_reduction <add>, %224, %cst_84 [1] : vector<17x32xf32> to vector<17xf32>
    %226 = vector.shape_cast %225 : vector<17xf32> to vector<17x1xf32>
    %cst_85 = arith.constant 3.200000e+01 : f32
    %227 = vector.broadcast %cst_85 : f32 to vector<17x1xf32>
    %228 = arith.divf %226, %227 : vector<17x1xf32>
    %229 = vector.broadcast %221 : vector<17x1xf32> to vector<17x32xf32>
    %230 = arith.subf %213, %229 : vector<17x32xf32>
    %cst_86 = arith.constant 9.99999974E-6 : f32
    %231 = vector.broadcast %cst_86 : f32 to vector<17x1xf32>
    %232 = arith.addf %228, %231 : vector<17x1xf32>
    %233 = math.rsqrt %232 : vector<17x1xf32>
    %234 = vector.broadcast %233 : vector<17x1xf32> to vector<17x32xf32>
    %235 = arith.mulf %230, %234 : vector<17x32xf32>
    %236 = vector.broadcast %216 : vector<1x32xf32> to vector<17x32xf32>
    %237 = arith.mulf %235, %236 : vector<17x32xf32>
    %238 = vector.broadcast %217 : vector<1x32xf32> to vector<17x32xf32>
    %239 = arith.addf %237, %238 : vector<17x32xf32>
    %c1_87 = arith.constant 1 : index
    %c0_88 = arith.constant 0 : index
    %c0_89 = arith.constant 0 : index
    %240 = vector.load %arg5[%c1_87, %c0_88, %c0_89] : memref<2x32x96xbf16, #tpu.memory_space<vmem>>, vector<1x32x96xbf16>
    %241 = vector.shape_cast %240 : vector<1x32x96xbf16> to vector<32x96xbf16>
    %242 = arith.truncf %239 : vector<17x32xf32> to vector<17x32xbf16>
    %cst_90 = arith.constant dense<0.000000e+00> : vector<17x96xf32>
    %243 = tpu.matmul %242, %241, %cst_90 {dimension_numbers = #tpu.dot_dimension_numbers<[1], [0], [0], [1], [0, 0, 1, 1], [], []>} : vector<17x32xbf16>, vector<32x96xbf16>, vector<17x96xf32> -> vector<17x96xf32>
    %c1_91 = arith.constant 1 : index
    %c0_92 = arith.constant 0 : index
    %c0_93 = arith.constant 0 : index
    %244 = vector.load %arg6[%c1_91, %c0_92, %c0_93] : memref<2x1x96xf32, #tpu.memory_space<vmem>>, vector<1x1x96xf32>
    %245 = vector.shape_cast %244 : vector<1x1x96xf32> to vector<1x96xf32>
    %246 = vector.broadcast %245 : vector<1x96xf32> to vector<17x96xf32>
    %247 = arith.addf %243, %246 : vector<17x96xf32>
    %248 = vector.shape_cast %247 : vector<17x96xf32> to vector<1x17x96xf32>
    %249 = vector.extract_strided_slice %248 {offsets = [0, 0, 0], sizes = [1, 17, 8], strides = [1, 1, 1]} : vector<1x17x96xf32> to vector<1x17x8xf32>
    %250 = vector.extract_strided_slice %248 {offsets = [0, 0, 32], sizes = [1, 17, 8], strides = [1, 1, 1]} : vector<1x17x96xf32> to vector<1x17x8xf32>
    %251 = vector.extract_strided_slice %248 {offsets = [0, 0, 64], sizes = [1, 17, 8], strides = [1, 1, 1]} : vector<1x17x96xf32> to vector<1x17x8xf32>
    "tpu.trace_start"() <{level = 10 : i32, message = "bqd,bkd->bqk"}> : () -> ()
    %cst_94 = arith.constant dense<0.000000e+00> : vector<1x17x17xf32>
    %252 = tpu.matmul %249, %250, %cst_94 {dimension_numbers = #tpu.dot_dimension_numbers<[2], [2], [1], [1], [0, 0, 0, 1, 1, 1], [0], [0]>} : vector<1x17x8xf32>, vector<1x17x8xf32>, vector<1x17x17xf32> -> vector<1x17x17xf32>
    "tpu.trace_stop"() : () -> ()
    %cst_95 = arith.constant 0.353553385 : f32
    %253 = vector.broadcast %cst_95 : f32 to vector<1x17x17xf32>
    %254 = arith.mulf %252, %253 : vector<1x17x17xf32>
    %cst_96 = arith.constant dense<0xFF800000> : vector<1x17xf32>
    %255 = vector.multi_reduction <maximumf>, %254, %cst_96 [2] : vector<1x17x17xf32> to vector<1x17xf32>
    %256 = vector.shape_cast %255 : vector<1x17xf32> to vector<1x17x1xf32>
    %257 = vector.broadcast %256 : vector<1x17x1xf32> to vector<1x17x17xf32>
    %258 = arith.subf %254, %257 : vector<1x17x17xf32>
    %259 = math.exp %258 : vector<1x17x17xf32>
    %cst_97 = arith.constant dense<0.000000e+00> : vector<1x17xf32>
    %260 = vector.multi_reduction <add>, %259, %cst_97 [2] : vector<1x17x17xf32> to vector<1x17xf32>
    %261 = vector.shape_cast %260 : vector<1x17xf32> to vector<1x17x1xf32>
    %262 = tpu.reciprocal %261 {approx = true} : vector<1x17x1xf32> -> vector<1x17x1xf32>
    %263 = vector.broadcast %262 : vector<1x17x1xf32> to vector<1x17x17xf32>
    %264 = arith.mulf %259, %263 : vector<1x17x17xf32>
    "tpu.trace_start"() <{level = 10 : i32, message = "bqk,bkd->bqd"}> : () -> ()
    %cst_98 = arith.constant dense<0.000000e+00> : vector<1x17x8xf32>
    %265 = tpu.matmul %264, %251, %cst_98 {dimension_numbers = #tpu.dot_dimension_numbers<[2], [1], [1], [2], [0, 0, 0, 1, 1, 2], [0], [0]>} : vector<1x17x17xf32>, vector<1x17x8xf32>, vector<1x17x8xf32> -> vector<1x17x8xf32>
    "tpu.trace_stop"() : () -> ()
    %266 = vector.extract_strided_slice %248 {offsets = [0, 0, 8], sizes = [1, 17, 8], strides = [1, 1, 1]} : vector<1x17x96xf32> to vector<1x17x8xf32>
    %267 = vector.extract_strided_slice %248 {offsets = [0, 0, 40], sizes = [1, 17, 8], strides = [1, 1, 1]} : vector<1x17x96xf32> to vector<1x17x8xf32>
    %268 = vector.extract_strided_slice %248 {offsets = [0, 0, 72], sizes = [1, 17, 8], strides = [1, 1, 1]} : vector<1x17x96xf32> to vector<1x17x8xf32>
    "tpu.trace_start"() <{level = 10 : i32, message = "bqd,bkd->bqk"}> : () -> ()
    %cst_99 = arith.constant dense<0.000000e+00> : vector<1x17x17xf32>
    %269 = tpu.matmul %266, %267, %cst_99 {dimension_numbers = #tpu.dot_dimension_numbers<[2], [2], [1], [1], [0, 0, 0, 1, 1, 1], [0], [0]>} : vector<1x17x8xf32>, vector<1x17x8xf32>, vector<1x17x17xf32> -> vector<1x17x17xf32>
    "tpu.trace_stop"() : () -> ()
    %cst_100 = arith.constant 0.353553385 : f32
    %270 = vector.broadcast %cst_100 : f32 to vector<1x17x17xf32>
    %271 = arith.mulf %269, %270 : vector<1x17x17xf32>
    %cst_101 = arith.constant dense<0xFF800000> : vector<1x17xf32>
    %272 = vector.multi_reduction <maximumf>, %271, %cst_101 [2] : vector<1x17x17xf32> to vector<1x17xf32>
    %273 = vector.shape_cast %272 : vector<1x17xf32> to vector<1x17x1xf32>
    %274 = vector.broadcast %273 : vector<1x17x1xf32> to vector<1x17x17xf32>
    %275 = arith.subf %271, %274 : vector<1x17x17xf32>
    %276 = math.exp %275 : vector<1x17x17xf32>
    %cst_102 = arith.constant dense<0.000000e+00> : vector<1x17xf32>
    %277 = vector.multi_reduction <add>, %276, %cst_102 [2] : vector<1x17x17xf32> to vector<1x17xf32>
    %278 = vector.shape_cast %277 : vector<1x17xf32> to vector<1x17x1xf32>
    %279 = tpu.reciprocal %278 {approx = true} : vector<1x17x1xf32> -> vector<1x17x1xf32>
    %280 = vector.broadcast %279 : vector<1x17x1xf32> to vector<1x17x17xf32>
    %281 = arith.mulf %276, %280 : vector<1x17x17xf32>
    "tpu.trace_start"() <{level = 10 : i32, message = "bqk,bkd->bqd"}> : () -> ()
    %cst_103 = arith.constant dense<0.000000e+00> : vector<1x17x8xf32>
    %282 = tpu.matmul %281, %268, %cst_103 {dimension_numbers = #tpu.dot_dimension_numbers<[2], [1], [1], [2], [0, 0, 0, 1, 1, 2], [0], [0]>} : vector<1x17x17xf32>, vector<1x17x8xf32>, vector<1x17x8xf32> -> vector<1x17x8xf32>
    "tpu.trace_stop"() : () -> ()
    %283 = vector.extract_strided_slice %248 {offsets = [0, 0, 16], sizes = [1, 17, 8], strides = [1, 1, 1]} : vector<1x17x96xf32> to vector<1x17x8xf32>
    %284 = vector.extract_strided_slice %248 {offsets = [0, 0, 48], sizes = [1, 17, 8], strides = [1, 1, 1]} : vector<1x17x96xf32> to vector<1x17x8xf32>
    %285 = vector.extract_strided_slice %248 {offsets = [0, 0, 80], sizes = [1, 17, 8], strides = [1, 1, 1]} : vector<1x17x96xf32> to vector<1x17x8xf32>
    "tpu.trace_start"() <{level = 10 : i32, message = "bqd,bkd->bqk"}> : () -> ()
    %cst_104 = arith.constant dense<0.000000e+00> : vector<1x17x17xf32>
    %286 = tpu.matmul %283, %284, %cst_104 {dimension_numbers = #tpu.dot_dimension_numbers<[2], [2], [1], [1], [0, 0, 0, 1, 1, 1], [0], [0]>} : vector<1x17x8xf32>, vector<1x17x8xf32>, vector<1x17x17xf32> -> vector<1x17x17xf32>
    "tpu.trace_stop"() : () -> ()
    %cst_105 = arith.constant 0.353553385 : f32
    %287 = vector.broadcast %cst_105 : f32 to vector<1x17x17xf32>
    %288 = arith.mulf %286, %287 : vector<1x17x17xf32>
    %cst_106 = arith.constant dense<0xFF800000> : vector<1x17xf32>
    %289 = vector.multi_reduction <maximumf>, %288, %cst_106 [2] : vector<1x17x17xf32> to vector<1x17xf32>
    %290 = vector.shape_cast %289 : vector<1x17xf32> to vector<1x17x1xf32>
    %291 = vector.broadcast %290 : vector<1x17x1xf32> to vector<1x17x17xf32>
    %292 = arith.subf %288, %291 : vector<1x17x17xf32>
    %293 = math.exp %292 : vector<1x17x17xf32>
    %cst_107 = arith.constant dense<0.000000e+00> : vector<1x17xf32>
    %294 = vector.multi_reduction <add>, %293, %cst_107 [2] : vector<1x17x17xf32> to vector<1x17xf32>
    %295 = vector.shape_cast %294 : vector<1x17xf32> to vector<1x17x1xf32>
    %296 = tpu.reciprocal %295 {approx = true} : vector<1x17x1xf32> -> vector<1x17x1xf32>
    %297 = vector.broadcast %296 : vector<1x17x1xf32> to vector<1x17x17xf32>
    %298 = arith.mulf %293, %297 : vector<1x17x17xf32>
    "tpu.trace_start"() <{level = 10 : i32, message = "bqk,bkd->bqd"}> : () -> ()
    %cst_108 = arith.constant dense<0.000000e+00> : vector<1x17x8xf32>
    %299 = tpu.matmul %298, %285, %cst_108 {dimension_numbers = #tpu.dot_dimension_numbers<[2], [1], [1], [2], [0, 0, 0, 1, 1, 2], [0], [0]>} : vector<1x17x17xf32>, vector<1x17x8xf32>, vector<1x17x8xf32> -> vector<1x17x8xf32>
    "tpu.trace_stop"() : () -> ()
    %300 = vector.extract_strided_slice %248 {offsets = [0, 0, 24], sizes = [1, 17, 8], strides = [1, 1, 1]} : vector<1x17x96xf32> to vector<1x17x8xf32>
    %301 = vector.extract_strided_slice %248 {offsets = [0, 0, 56], sizes = [1, 17, 8], strides = [1, 1, 1]} : vector<1x17x96xf32> to vector<1x17x8xf32>
    %302 = vector.extract_strided_slice %248 {offsets = [0, 0, 88], sizes = [1, 17, 8], strides = [1, 1, 1]} : vector<1x17x96xf32> to vector<1x17x8xf32>
    "tpu.trace_start"() <{level = 10 : i32, message = "bqd,bkd->bqk"}> : () -> ()
    %cst_109 = arith.constant dense<0.000000e+00> : vector<1x17x17xf32>
    %303 = tpu.matmul %300, %301, %cst_109 {dimension_numbers = #tpu.dot_dimension_numbers<[2], [2], [1], [1], [0, 0, 0, 1, 1, 1], [0], [0]>} : vector<1x17x8xf32>, vector<1x17x8xf32>, vector<1x17x17xf32> -> vector<1x17x17xf32>
    "tpu.trace_stop"() : () -> ()
    %cst_110 = arith.constant 0.353553385 : f32
    %304 = vector.broadcast %cst_110 : f32 to vector<1x17x17xf32>
    %305 = arith.mulf %303, %304 : vector<1x17x17xf32>
    %cst_111 = arith.constant dense<0xFF800000> : vector<1x17xf32>
    %306 = vector.multi_reduction <maximumf>, %305, %cst_111 [2] : vector<1x17x17xf32> to vector<1x17xf32>
    %307 = vector.shape_cast %306 : vector<1x17xf32> to vector<1x17x1xf32>
    %308 = vector.broadcast %307 : vector<1x17x1xf32> to vector<1x17x17xf32>
    %309 = arith.subf %305, %308 : vector<1x17x17xf32>
    %310 = math.exp %309 : vector<1x17x17xf32>
    %cst_112 = arith.constant dense<0.000000e+00> : vector<1x17xf32>
    %311 = vector.multi_reduction <add>, %310, %cst_112 [2] : vector<1x17x17xf32> to vector<1x17xf32>
    %312 = vector.shape_cast %311 : vector<1x17xf32> to vector<1x17x1xf32>
    %313 = tpu.reciprocal %312 {approx = true} : vector<1x17x1xf32> -> vector<1x17x1xf32>
    %314 = vector.broadcast %313 : vector<1x17x1xf32> to vector<1x17x17xf32>
    %315 = arith.mulf %310, %314 : vector<1x17x17xf32>
    "tpu.trace_start"() <{level = 10 : i32, message = "bqk,bkd->bqd"}> : () -> ()
    %cst_113 = arith.constant dense<0.000000e+00> : vector<1x17x8xf32>
    %316 = tpu.matmul %315, %302, %cst_113 {dimension_numbers = #tpu.dot_dimension_numbers<[2], [1], [1], [2], [0, 0, 0, 1, 1, 2], [0], [0]>} : vector<1x17x17xf32>, vector<1x17x8xf32>, vector<1x17x8xf32> -> vector<1x17x8xf32>
    "tpu.trace_stop"() : () -> ()
    %317 = tpu.concatenate %265, %282, %299, %316 in 2 : vector<1x17x8xf32>, vector<1x17x8xf32>, vector<1x17x8xf32>, vector<1x17x8xf32> -> vector<1x17x32xf32>
    %318 = vector.shape_cast %317 : vector<1x17x32xf32> to vector<17x32xf32>
    %c1_114 = arith.constant 1 : index
    %c0_115 = arith.constant 0 : index
    %c0_116 = arith.constant 0 : index
    %319 = vector.load %arg7[%c1_114, %c0_115, %c0_116] : memref<2x32x32xbf16, #tpu.memory_space<vmem>>, vector<1x32x32xbf16>
    %320 = vector.shape_cast %319 : vector<1x32x32xbf16> to vector<32x32xbf16>
    %321 = arith.truncf %318 : vector<17x32xf32> to vector<17x32xbf16>
    %cst_117 = arith.constant dense<0.000000e+00> : vector<17x32xf32>
    %322 = tpu.matmul %321, %320, %cst_117 {dimension_numbers = #tpu.dot_dimension_numbers<[1], [0], [0], [1], [0, 0, 1, 1], [], []>} : vector<17x32xbf16>, vector<32x32xbf16>, vector<17x32xf32> -> vector<17x32xf32>
    %323 = arith.addf %213, %322 : vector<17x32xf32>
    %324 = vector.extract_strided_slice %215 {offsets = [2, 0], sizes = [1, 32], strides = [1, 1]} : vector<6x32xf32> to vector<1x32xf32>
    %325 = vector.broadcast %324 : vector<1x32xf32> to vector<17x32xf32>
    %326 = arith.addf %323, %325 : vector<17x32xf32>
    %327 = vector.extract_strided_slice %215 {offsets = [3, 0], sizes = [1, 32], strides = [1, 1]} : vector<6x32xf32> to vector<1x32xf32>
    %328 = vector.extract_strided_slice %215 {offsets = [4, 0], sizes = [1, 32], strides = [1, 1]} : vector<6x32xf32> to vector<1x32xf32>
    %cst_118 = arith.constant dense<0.000000e+00> : vector<17xf32>
    %329 = vector.multi_reduction <add>, %326, %cst_118 [1] : vector<17x32xf32> to vector<17xf32>
    %330 = vector.shape_cast %329 : vector<17xf32> to vector<17x1xf32>
    %cst_119 = arith.constant 3.200000e+01 : f32
    %331 = vector.broadcast %cst_119 : f32 to vector<17x1xf32>
    %332 = arith.divf %330, %331 : vector<17x1xf32>
    %333 = vector.broadcast %332 : vector<17x1xf32> to vector<17x32xf32>
    %334 = arith.subf %326, %333 : vector<17x32xf32>
    %335 = arith.mulf %334, %334 : vector<17x32xf32>
    %cst_120 = arith.constant dense<0.000000e+00> : vector<17xf32>
    %336 = vector.multi_reduction <add>, %335, %cst_120 [1] : vector<17x32xf32> to vector<17xf32>
    %337 = vector.shape_cast %336 : vector<17xf32> to vector<17x1xf32>
    %cst_121 = arith.constant 3.200000e+01 : f32
    %338 = vector.broadcast %cst_121 : f32 to vector<17x1xf32>
    %339 = arith.divf %337, %338 : vector<17x1xf32>
    %340 = vector.broadcast %332 : vector<17x1xf32> to vector<17x32xf32>
    %341 = arith.subf %326, %340 : vector<17x32xf32>
    %cst_122 = arith.constant 9.99999974E-6 : f32
    %342 = vector.broadcast %cst_122 : f32 to vector<17x1xf32>
    %343 = arith.addf %339, %342 : vector<17x1xf32>
    %344 = math.rsqrt %343 : vector<17x1xf32>
    %345 = vector.broadcast %344 : vector<17x1xf32> to vector<17x32xf32>
    %346 = arith.mulf %341, %345 : vector<17x32xf32>
    %347 = vector.broadcast %327 : vector<1x32xf32> to vector<17x32xf32>
    %348 = arith.mulf %346, %347 : vector<17x32xf32>
    %349 = vector.broadcast %328 : vector<1x32xf32> to vector<17x32xf32>
    %350 = arith.addf %348, %349 : vector<17x32xf32>
    %c1_123 = arith.constant 1 : index
    %c0_124 = arith.constant 0 : index
    %c0_125 = arith.constant 0 : index
    %351 = vector.load %arg8[%c1_123, %c0_124, %c0_125] : memref<2x32x128xbf16, #tpu.memory_space<vmem>>, vector<1x32x128xbf16>
    %352 = vector.shape_cast %351 : vector<1x32x128xbf16> to vector<32x128xbf16>
    %353 = arith.truncf %350 : vector<17x32xf32> to vector<17x32xbf16>
    %cst_126 = arith.constant dense<0.000000e+00> : vector<17x128xf32>
    %354 = tpu.matmul %353, %352, %cst_126 {dimension_numbers = #tpu.dot_dimension_numbers<[1], [0], [0], [1], [0, 0, 1, 1], [], []>} : vector<17x32xbf16>, vector<32x128xbf16>, vector<17x128xf32> -> vector<17x128xf32>
    %c1_127 = arith.constant 1 : index
    %c0_128 = arith.constant 0 : index
    %c0_129 = arith.constant 0 : index
    %355 = vector.load %arg9[%c1_127, %c0_128, %c0_129] : memref<2x1x128xf32, #tpu.memory_space<vmem>>, vector<1x1x128xf32>
    %356 = vector.shape_cast %355 : vector<1x1x128xf32> to vector<1x128xf32>
    %357 = vector.broadcast %356 : vector<1x128xf32> to vector<17x128xf32>
    %358 = arith.addf %354, %357 : vector<17x128xf32>
    %cst_130 = arith.constant 5.000000e-01 : f32
    %359 = vector.broadcast %cst_130 : f32 to vector<17x128xf32>
    %360 = arith.mulf %359, %358 : vector<17x128xf32>
    %cst_131 = arith.constant 0.707106769 : f32
    %361 = vector.broadcast %cst_131 : f32 to vector<17x128xf32>
    %362 = arith.mulf %358, %361 : vector<17x128xf32>
    %363 = math.absf %362 : vector<17x128xf32>
    %cst_132 = arith.constant 0.327591091 : f32
    %364 = vector.broadcast %cst_132 : f32 to vector<17x128xf32>
    %365 = arith.mulf %364, %363 : vector<17x128xf32>
    %cst_133 = arith.constant 1.000000e+00 : f32
    %366 = vector.broadcast %cst_133 : f32 to vector<17x128xf32>
    %367 = arith.addf %366, %365 : vector<17x128xf32>
    %cst_134 = arith.constant 1.000000e+00 : f32
    %368 = vector.broadcast %cst_134 : f32 to vector<17x128xf32>
    %369 = arith.divf %368, %367 : vector<17x128xf32>
    %cst_135 = arith.constant 1.06140542 : f32
    %370 = vector.broadcast %cst_135 : f32 to vector<17x128xf32>
    %371 = arith.mulf %370, %369 : vector<17x128xf32>
    %cst_136 = arith.constant -1.45315206 : f32
    %372 = vector.broadcast %cst_136 : f32 to vector<17x128xf32>
    %373 = arith.addf %371, %372 : vector<17x128xf32>
    %374 = arith.mulf %373, %369 : vector<17x128xf32>
    %cst_137 = arith.constant 1.42141378 : f32
    %375 = vector.broadcast %cst_137 : f32 to vector<17x128xf32>
    %376 = arith.addf %374, %375 : vector<17x128xf32>
    %377 = arith.mulf %376, %369 : vector<17x128xf32>
    %cst_138 = arith.constant -0.284496725 : f32
    %378 = vector.broadcast %cst_138 : f32 to vector<17x128xf32>
    %379 = arith.addf %377, %378 : vector<17x128xf32>
    %380 = arith.mulf %379, %369 : vector<17x128xf32>
    %cst_139 = arith.constant 0.254829586 : f32
    %381 = vector.broadcast %cst_139 : f32 to vector<17x128xf32>
    %382 = arith.addf %380, %381 : vector<17x128xf32>
    %383 = arith.mulf %382, %369 : vector<17x128xf32>
    %cst_140 = arith.constant 0.000000e+00 : f32
    %384 = vector.broadcast %cst_140 : f32 to vector<17x128xf32>
    %385 = arith.subf %384, %363 : vector<17x128xf32>
    %386 = arith.mulf %385, %363 : vector<17x128xf32>
    %387 = math.exp %386 : vector<17x128xf32>
    %388 = arith.mulf %383, %387 : vector<17x128xf32>
    %cst_141 = arith.constant 1.000000e+00 : f32
    %389 = vector.broadcast %cst_141 : f32 to vector<17x128xf32>
    %390 = arith.subf %389, %388 : vector<17x128xf32>
    %cst_142 = arith.constant 0.000000e+00 : f32
    %391 = vector.broadcast %cst_142 : f32 to vector<17x128xf32>
    %392 = arith.cmpf oge, %362, %391 : vector<17x128xf32>
    %cst_143 = arith.constant 0.000000e+00 : f32
    %393 = vector.broadcast %cst_143 : f32 to vector<17x128xf32>
    %394 = arith.subf %393, %390 : vector<17x128xf32>
    %395 = arith.select %392, %390, %394 : vector<17x128xi1>, vector<17x128xf32>
    %cst_144 = arith.constant 1.000000e+00 : f32
    %396 = vector.broadcast %cst_144 : f32 to vector<17x128xf32>
    %397 = arith.addf %396, %395 : vector<17x128xf32>
    %398 = arith.mulf %360, %397 : vector<17x128xf32>
    %c1_145 = arith.constant 1 : index
    %c0_146 = arith.constant 0 : index
    %c0_147 = arith.constant 0 : index
    %399 = vector.load %arg10[%c1_145, %c0_146, %c0_147] : memref<2x128x32xbf16, #tpu.memory_space<vmem>>, vector<1x128x32xbf16>
    %400 = vector.shape_cast %399 : vector<1x128x32xbf16> to vector<128x32xbf16>
    %401 = arith.truncf %398 : vector<17x128xf32> to vector<17x128xbf16>
    %cst_148 = arith.constant dense<0.000000e+00> : vector<17x32xf32>
    %402 = tpu.matmul %401, %400, %cst_148 {dimension_numbers = #tpu.dot_dimension_numbers<[1], [0], [0], [1], [0, 0, 1, 1], [], []>} : vector<17x128xbf16>, vector<128x32xbf16>, vector<17x32xf32> -> vector<17x32xf32>
    %403 = arith.addf %326, %402 : vector<17x32xf32>
    %404 = vector.extract_strided_slice %215 {offsets = [5, 0], sizes = [1, 32], strides = [1, 1]} : vector<6x32xf32> to vector<1x32xf32>
    %405 = vector.broadcast %404 : vector<1x32xf32> to vector<17x32xf32>
    %406 = arith.addf %403, %405 : vector<17x32xf32>
    %407 = vector.shape_cast %406 : vector<17x32xf32> to vector<1x17x32xf32>
    %408 = vector.extract_strided_slice %407 {offsets = [0, 0, 0], sizes = [1, 1, 32], strides = [1, 1, 1]} : vector<1x17x32xf32> to vector<1x1x32xf32>
    %409 = vector.shape_cast %408 : vector<1x1x32xf32> to vector<1x32xf32>
    %c2 = arith.constant 2 : index
    %c0_149 = arith.constant 0 : index
    %410 = vector.load %arg3[%c2, %c0_149] : memref<4x32xf32, #tpu.memory_space<vmem>>, vector<1x32xf32>
    %c3 = arith.constant 3 : index
    %c0_150 = arith.constant 0 : index
    %411 = vector.load %arg3[%c3, %c0_150] : memref<4x32xf32, #tpu.memory_space<vmem>>, vector<1x32xf32>
    %cst_151 = arith.constant dense<0.000000e+00> : vector<1xf32>
    %412 = vector.multi_reduction <add>, %409, %cst_151 [1] : vector<1x32xf32> to vector<1xf32>
    %413 = vector.shape_cast %412 : vector<1xf32> to vector<1x1xf32>
    %cst_152 = arith.constant 3.200000e+01 : f32
    %414 = vector.broadcast %cst_152 : f32 to vector<1x1xf32>
    %415 = arith.divf %413, %414 : vector<1x1xf32>
    %416 = vector.broadcast %415 : vector<1x1xf32> to vector<1x32xf32>
    %417 = arith.subf %409, %416 : vector<1x32xf32>
    %418 = arith.mulf %417, %417 : vector<1x32xf32>
    %cst_153 = arith.constant dense<0.000000e+00> : vector<1xf32>
    %419 = vector.multi_reduction <add>, %418, %cst_153 [1] : vector<1x32xf32> to vector<1xf32>
    %420 = vector.shape_cast %419 : vector<1xf32> to vector<1x1xf32>
    %cst_154 = arith.constant 3.200000e+01 : f32
    %421 = vector.broadcast %cst_154 : f32 to vector<1x1xf32>
    %422 = arith.divf %420, %421 : vector<1x1xf32>
    %423 = vector.broadcast %415 : vector<1x1xf32> to vector<1x32xf32>
    %424 = arith.subf %409, %423 : vector<1x32xf32>
    %cst_155 = arith.constant 9.99999974E-6 : f32
    %425 = vector.broadcast %cst_155 : f32 to vector<1x1xf32>
    %426 = arith.addf %422, %425 : vector<1x1xf32>
    %427 = math.rsqrt %426 : vector<1x1xf32>
    %428 = vector.broadcast %427 : vector<1x1xf32> to vector<1x32xf32>
    %429 = arith.mulf %424, %428 : vector<1x32xf32>
    %430 = arith.mulf %429, %410 : vector<1x32xf32>
    %431 = arith.addf %430, %411 : vector<1x32xf32>
    %c0_156 = arith.constant 0 : index
    %c0_157 = arith.constant 0 : index
    %432 = vector.load %arg12[%c0_156, %c0_157] : memref<32x10xbf16, #tpu.memory_space<vmem>>, vector<32x10xbf16>
    %433 = arith.truncf %431 : vector<1x32xf32> to vector<1x32xbf16>
    %cst_158 = arith.constant dense<0.000000e+00> : vector<1x10xf32>
    %434 = tpu.matmul %433, %432, %cst_158 {dimension_numbers = #tpu.dot_dimension_numbers<[1], [0], [0], [1], [0, 0, 1, 1], [], []>} : vector<1x32xbf16>, vector<32x10xbf16>, vector<1x10xf32> -> vector<1x10xf32>
    %c0_159 = arith.constant 0 : index
    %c0_160 = arith.constant 0 : index
    %435 = vector.load %arg13[%c0_159, %c0_160] : memref<1x10xf32, #tpu.memory_space<vmem>>, vector<1x10xf32>
    %436 = arith.addf %434, %435 : vector<1x10xf32>
    %c0_161 = arith.constant 0 : index
    %c0_162 = arith.constant 0 : index
    %c0_163 = arith.constant 0 : index
    %437 = vector.load %arg14[%c0_161, %c0_162, %c0_163] : memref<1x1x10xf32, #tpu.memory_space<vmem>>, vector<1x1x10xf32>
    %438 = vector.shape_cast %437 : vector<1x1x10xf32> to vector<1x10xf32>
    %439 = vector.shape_cast %436 : vector<1x10xf32> to vector<1x1x10xf32>
    tpu.vector_store %arg14[%c0_161, %c0_162, %c0_163], %439 {strides = array<i32>} : memref<1x1x10xf32, #tpu.memory_space<vmem>>, vector<1x1x10xf32>,
    return
  }
  func.func @transform_0(%arg0: i32) -> (i32, i32, i32) {
    %c0_i32 = arith.constant 0 : i32
    %c0_i32_0 = arith.constant 0 : i32
    %c0_i32_1 = arith.constant 0 : i32
    return %arg0, %c0_i32, %c0_i32_0 : i32, i32, i32
  }
  func.func @transform_1(%arg0: i32) -> (i32, i32) {
    %c0_i32 = arith.constant 0 : i32
    %c0_i32_0 = arith.constant 0 : i32
    %c0_i32_1 = arith.constant 0 : i32
    return %c0_i32, %c0_i32_0 : i32, i32
  }
  func.func @transform_2(%arg0: i32) -> (i32, i32) {
    %c0_i32 = arith.constant 0 : i32
    %c0_i32_0 = arith.constant 0 : i32
    %c0_i32_1 = arith.constant 0 : i32
    return %c0_i32, %c0_i32_0 : i32, i32
  }
  func.func @transform_3(%arg0: i32) -> (i32, i32) {
    %c0_i32 = arith.constant 0 : i32
    %c0_i32_0 = arith.constant 0 : i32
    %c0_i32_1 = arith.constant 0 : i32
    return %c0_i32, %c0_i32_0 : i32, i32
  }
  func.func @transform_4(%arg0: i32) -> (i32, i32, i32) {
    %c0_i32 = arith.constant 0 : i32
    %c0_i32_0 = arith.constant 0 : i32
    %c0_i32_1 = arith.constant 0 : i32
    %c0_i32_2 = arith.constant 0 : i32
    return %c0_i32, %c0_i32_0, %c0_i32_1 : i32, i32, i32
  }
  func.func @transform_5(%arg0: i32) -> (i32, i32, i32) {
    %c0_i32 = arith.constant 0 : i32
    %c0_i32_0 = arith.constant 0 : i32
    %c0_i32_1 = arith.constant 0 : i32
    %c0_i32_2 = arith.constant 0 : i32
    return %c0_i32, %c0_i32_0, %c0_i32_1 : i32, i32, i32
  }
  func.func @transform_6(%arg0: i32) -> (i32, i32, i32) {
    %c0_i32 = arith.constant 0 : i32
    %c0_i32_0 = arith.constant 0 : i32
    %c0_i32_1 = arith.constant 0 : i32
    %c0_i32_2 = arith.constant 0 : i32
    return %c0_i32, %c0_i32_0, %c0_i32_1 : i32, i32, i32
  }
  func.func @transform_7(%arg0: i32) -> (i32, i32, i32) {
    %c0_i32 = arith.constant 0 : i32
    %c0_i32_0 = arith.constant 0 : i32
    %c0_i32_1 = arith.constant 0 : i32
    %c0_i32_2 = arith.constant 0 : i32
    return %c0_i32, %c0_i32_0, %c0_i32_1 : i32, i32, i32
  }
  func.func @transform_8(%arg0: i32) -> (i32, i32, i32) {
    %c0_i32 = arith.constant 0 : i32
    %c0_i32_0 = arith.constant 0 : i32
    %c0_i32_1 = arith.constant 0 : i32
    %c0_i32_2 = arith.constant 0 : i32
    return %c0_i32, %c0_i32_0, %c0_i32_1 : i32, i32, i32
  }
  func.func @transform_9(%arg0: i32) -> (i32, i32, i32) {
    %c0_i32 = arith.constant 0 : i32
    %c0_i32_0 = arith.constant 0 : i32
    %c0_i32_1 = arith.constant 0 : i32
    %c0_i32_2 = arith.constant 0 : i32
    return %c0_i32, %c0_i32_0, %c0_i32_1 : i32, i32, i32
  }
  func.func @transform_10(%arg0: i32) -> (i32, i32, i32) {
    %c0_i32 = arith.constant 0 : i32
    %c0_i32_0 = arith.constant 0 : i32
    %c0_i32_1 = arith.constant 0 : i32
    %c0_i32_2 = arith.constant 0 : i32
    return %c0_i32, %c0_i32_0, %c0_i32_1 : i32, i32, i32
  }
  func.func @transform_11(%arg0: i32) -> (i32, i32) {
    %c0_i32 = arith.constant 0 : i32
    %c0_i32_0 = arith.constant 0 : i32
    %c0_i32_1 = arith.constant 0 : i32
    return %c0_i32, %c0_i32_0 : i32, i32
  }
  func.func @transform_12(%arg0: i32) -> (i32, i32) {
    %c0_i32 = arith.constant 0 : i32
    %c0_i32_0 = arith.constant 0 : i32
    %c0_i32_1 = arith.constant 0 : i32
    return %c0_i32, %c0_i32_0 : i32, i32
  }
  func.func @transform_13(%arg0: i32) -> (i32, i32, i32) {
    %c0_i32 = arith.constant 0 : i32
    %c0_i32_0 = arith.constant 0 : i32
    %c0_i32_1 = arith.constant 0 : i32
    return %arg0, %c0_i32, %c0_i32_0 : i32, i32, i32
  }
}

</mosaic_0001>

<llo_original>
// kernel: vit_forward.1
$region0: #{vit_forward.1}
  #allocation0 [shape = 'u32[]', space=smem, size = 0x4, offset = 0x4, fixed_abs, tag = 'smem constant byte address 0x4 - core index']
  #allocation1 [shape = 'u32[144,128]{1,0:T(1,128)}', space=vmem, size = 0x12000, scoped, tag = 'internal scratch']
  %s0 = inlined_call_operand.vmem [shape: f32[2,17,48], index: 0, kind: input, shape index: {}]
  %s1 = inlined_call_operand.vmem [shape: bf16[48,32], index: 1, kind: input, shape index: {}]
  %s2 = inlined_call_operand.vmem [shape: f32[4,32], index: 2, kind: input, shape index: {}]
  %s3 = inlined_call_operand.vmem [shape: f32[17,32], index: 3, kind: input, shape index: {}]
  %s4 = inlined_call_operand.vmem [shape: bf16[2,32,96], index: 4, kind: input, shape index: {}]
  %s5 = inlined_call_operand.vmem [shape: f32[2,1,96], index: 5, kind: input, shape index: {}]
  %s6 = inlined_call_operand.vmem [shape: bf16[2,32,32], index: 6, kind: input, shape index: {}]
  %s7 = inlined_call_operand.vmem [shape: bf16[2,32,128], index: 7, kind: input, shape index: {}]
  %s8 = inlined_call_operand.vmem [shape: f32[2,1,128], index: 8, kind: input, shape index: {}]
  %s9 = inlined_call_operand.vmem [shape: bf16[2,128,32], index: 9, kind: input, shape index: {}]
  %s10 = inlined_call_operand.vmem [shape: f32[2,6,32], index: 10, kind: input, shape index: {}]
  %s11 = inlined_call_operand.vmem [shape: bf16[32,10], index: 11, kind: input, shape index: {}]
  %s12 = inlined_call_operand.vmem [shape: f32[1,10], index: 12, kind: input, shape index: {}]
  %s13 = inlined_call_operand.hbm [shape: f32[2,1,10], index: 13, kind: output, shape index: {}]
  %s14 = sld [smem:[#allocation0]]
  $region85: #{vit_forward.1} parent=0
    _
  %s16 = ssub.s32 1, %s14
  %s17 = scalar_select 0, %s16, %s14
  $region1: #{vit_forward.1} parent=0
    #allocation2 [shape = 'u8[1024]{0}', space=vmem, size = 0x400, scoped, tag = 'output window, operand 0']
    #allocation3 [shape = 's32[2]{0}', space=sflag, size = 0x8, scoped, tag = 'scoped memory for vit_forward.1']
    %18 = vsyncpa [#allocation3], 0
    %s19 = scalar_lea.sflag [#allocation3], 1
    %20 = vsyncpa %s19, 0
    loop: start=0, step=1, limit=4
    $region2: #{vit_forward.1} parent=1 // loop_pre_header
      _
    $region3: #{vit_forward.1} parent=1 // loop_header
      %s22 = sphi 0, %s26
      %p23 = scmp.ge.s32.totalorder %s22, 4
      %s32 = sphi 0, %s34
      %s35 = sphi 0, %s32
      %s36 = sphi 0, %s35
      %s52 = sphi 0, %s36
      %s56 = sphi 0, %s56
      %s58 = sphi 0, %s56
      %s59 = sphi 0, %s58
      %s73 = sphi 0, %s59
      %s77 = sphi 0, %s77
      %s79 = sphi 0, %s77
      %s80 = sphi 0, %s79
      %s94 = sphi 0, %s80
      %s98 = sphi 0, %s98
      %s100 = sphi 0, %s98
      %s101 = sphi 0, %s100
      %s115 = sphi 0, %s101
      %s119 = sphi 0, %s119
      %s121 = sphi 0, %s119
      %s122 = sphi 0, %s121
      %s136 = sphi 0, %s122
      %s140 = sphi 0, %s140
      %s142 = sphi 0, %s140
      %s143 = sphi 0, %s142
      %s157 = sphi 0, %s143
      %s161 = sphi 0, %s161
      %s163 = sphi 0, %s161
      %s164 = sphi 0, %s163
      %s178 = sphi 0, %s164
      %s182 = sphi 0, %s182
      %s184 = sphi 0, %s182
      %s185 = sphi 0, %s184
      %s199 = sphi 0, %s185
      %s203 = sphi 0, %s203
      %s205 = sphi 0, %s203
      %s206 = sphi 0, %s205
      %s220 = sphi 0, %s206
      %s224 = sphi 0, %s224
      %s226 = sphi 0, %s224
      %s227 = sphi 0, %s226
      %s241 = sphi 0, %s227
      %s245 = sphi 0, %s245
      %s247 = sphi 0, %s245
      %s248 = sphi 0, %s247
      %s262 = sphi 0, %s248
      %s266 = sphi 0, %s266
      %s268 = sphi 0, %s266
      %s269 = sphi 0, %s268
      %s283 = sphi 0, %s269
      %s287 = sphi 0, %s287
      %s289 = sphi 0, %s287
      %s290 = sphi 0, %s289
      %s304 = sphi 0, %s290
      %s310 = sphi 0, %s312
      %s313 = sphi 0, %s310
      %s314 = sphi 0, %s313
      %s330 = sphi 0, %s314
    $region4: #{vit_forward.1} parent=1 // loop_header_branch
      %25 = sbr.rel (%p23) target = $region8
    $region5: #{vit_forward.1} parent=1 // loop_body
      %s27 = ssub.s32 %s22, 1
      %s28 = ssub.s32 %s22, 2
      %s29 = sadd.s32 %s22, 1
      %s30 = ssub.s32 %s22, %s29
      %p31 = scmp.eq.s32.totalorder %s30, 0
      %s33 = sadd.s32 %s32, 1
      %s34 = scalar_select %p31, %s32, %s33
      %p37 = pneg %p31
      %p38 = scmp.eq.s32.totalorder %s22, 1
      %p39 = por %p37, %p38
      %p40 = scmp.ne.s32.totalorder %s32, %s35
      %p41 = scmp.eq.s32.totalorder %s22, 0
      %p42 = por %p40, %p41
      %p43 = scmp.ne.s32.totalorder %s32, %s35
      %p44 = scmp.eq.s32.totalorder %s27, 1
      %p45 = por %p43, %p44
      %p46 = scmp.ne.s32.totalorder %s35, %s36
      %p47 = scmp.eq.s32.totalorder %s27, 0
      %p48 = por %p46, %p47
      %p49 = scmp.ne.s32.totalorder %s35, %s36
      %p50 = scmp.eq.s32.totalorder %s28, 1
      %p51 = por %p49, %p50
      %p53 = scmp.ne.s32.totalorder %s36, %s52
      %p54 = scmp.eq.s32.totalorder %s28, 0
      %p55 = por %p53, %p54
      %s57 = sadd.s32 %s56, 1
      %p60 = scmp.eq.s32.totalorder %s22, 1
      %p61 = scmp.ne.s32.totalorder %s56, %s58
      %p62 = scmp.eq.s32.totalorder %s22, 0
      %p63 = por %p61, %p62
      %p64 = scmp.ne.s32.totalorder %s56, %s58
      %p65 = scmp.eq.s32.totalorder %s27, 1
      %p66 = por %p64, %p65
      %p67 = scmp.ne.s32.totalorder %s58, %s59
      %p68 = scmp.eq.s32.totalorder %s27, 0
      %p69 = por %p67, %p68
      %p70 = scmp.ne.s32.totalorder %s58, %s59
      %p71 = scmp.eq.s32.totalorder %s28, 1
      %p72 = por %p70, %p71
      %p74 = scmp.ne.s32.totalorder %s59, %s73
      %p75 = scmp.eq.s32.totalorder %s28, 0
      %p76 = por %p74, %p75
      %s78 = sadd.s32 %s77, 1
      %p81 = scmp.eq.s32.totalorder %s22, 1
      %p82 = scmp.ne.s32.totalorder %s77, %s79
      %p83 = scmp.eq.s32.totalorder %s22, 0
      %p84 = por %p82, %p83
      %p85 = scmp.ne.s32.totalorder %s77, %s79
      %p86 = scmp.eq.s32.totalorder %s27, 1
      %p87 = por %p85, %p86
      %p88 = scmp.ne.s32.totalorder %s79, %s80
      %p89 = scmp.eq.s32.totalorder %s27, 0
      %p90 = por %p88, %p89
      %p91 = scmp.ne.s32.totalorder %s79, %s80
      %p92 = scmp.eq.s32.totalorder %s28, 1
      %p93 = por %p91, %p92
      %p95 = scmp.ne.s32.totalorder %s80, %s94
      %p96 = scmp.eq.s32.totalorder %s28, 0
      %p97 = por %p95, %p96
      %s99 = sadd.s32 %s98, 1
      %p102 = scmp.eq.s32.totalorder %s22, 1
      %p103 = scmp.ne.s32.totalorder %s98, %s100
      %p104 = scmp.eq.s32.totalorder %s22, 0
      %p105 = por %p103, %p104
      %p106 = scmp.ne.s32.totalorder %s98, %s100
      %p107 = scmp.eq.s32.totalorder %s27, 1
      %p108 = por %p106, %p107
      %p109 = scmp.ne.s32.totalorder %s100, %s101
      %p110 = scmp.eq.s32.totalorder %s27, 0
      %p111 = por %p109, %p110
      %p112 = scmp.ne.s32.totalorder %s100, %s101
      %p113 = scmp.eq.s32.totalorder %s28, 1
      %p114 = por %p112, %p113
      %p116 = scmp.ne.s32.totalorder %s101, %s115
      %p117 = scmp.eq.s32.totalorder %s28, 0
      %p118 = por %p116, %p117
      %s120 = sadd.s32 %s119, 1
      %p123 = scmp.eq.s32.totalorder %s22, 1
      %p124 = scmp.ne.s32.totalorder %s119, %s121
      %p125 = scmp.eq.s32.totalorder %s22, 0
      %p126 = por %p124, %p125
      %p127 = scmp.ne.s32.totalorder %s119, %s121
      %p128 = scmp.eq.s32.totalorder %s27, 1
      %p129 = por %p127, %p128
      %p130 = scmp.ne.s32.totalorder %s121, %s122
      %p131 = scmp.eq.s32.totalorder %s27, 0
      %p132 = por %p130, %p131
      %p133 = scmp.ne.s32.totalorder %s121, %s122
      %p134 = scmp.eq.s32.totalorder %s28, 1
      %p135 = por %p133, %p134
      %p137 = scmp.ne.s32.totalorder %s122, %s136
      %p138 = scmp.eq.s32.totalorder %s28, 0
      %p139 = por %p137, %p138
      %s141 = sadd.s32 %s140, 1
      %p144 = scmp.eq.s32.totalorder %s22, 1
      %p145 = scmp.ne.s32.totalorder %s140, %s142
      %p146 = scmp.eq.s32.totalorder %s22, 0
      %p147 = por %p145, %p146
      %p148 = scmp.ne.s32.totalorder %s140, %s142
      %p149 = scmp.eq.s32.totalorder %s27, 1
      %p150 = por %p148, %p149
      %p151 = scmp.ne.s32.totalorder %s142, %s143
      %p152 = scmp.eq.s32.totalorder %s27, 0
      %p153 = por %p151, %p152
      %p154 = scmp.ne.s32.totalorder %s142, %s143
      %p155 = scmp.eq.s32.totalorder %s28, 1
      %p156 = por %p154, %p155
      %p158 = scmp.ne.s32.totalorder %s143, %s157
      %p159 = scmp.eq.s32.totalorder %s28, 0
      %p160 = por %p158, %p159
      %s162 = sadd.s32 %s161, 1
      %p165 = scmp.eq.s32.totalorder %s22, 1
      %p166 = scmp.ne.s32.totalorder %s161, %s163
      %p167 = scmp.eq.s32.totalorder %s22, 0
      %p168 = por %p166, %p167
      %p169 = scmp.ne.s32.totalorder %s161, %s163
      %p170 = scmp.eq.s32.totalorder %s27, 1
      %p171 = por %p169, %p170
      %p172 = scmp.ne.s32.totalorder %s163, %s164
      %p173 = scmp.eq.s32.totalorder %s27, 0
      %p174 = por %p172, %p173
      %p175 = scmp.ne.s32.totalorder %s163, %s164
      %p176 = scmp.eq.s32.totalorder %s28, 1
      %p177 = por %p175, %p176
      %p179 = scmp.ne.s32.totalorder %s164, %s178
      %p180 = scmp.eq.s32.totalorder %s28, 0
      %p181 = por %p179, %p180
      %s183 = sadd.s32 %s182, 1
      %p186 = scmp.eq.s32.totalorder %s22, 1
      %p187 = scmp.ne.s32.totalorder %s182, %s184
      %p188 = scmp.eq.s32.totalorder %s22, 0
      %p189 = por %p187, %p188
      %p190 = scmp.ne.s32.totalorder %s182, %s184
      %p191 = scmp.eq.s32.totalorder %s27, 1
      %p192 = por %p190, %p191
      %p193 = scmp.ne.s32.totalorder %s184, %s185
      %p194 = scmp.eq.s32.totalorder %s27, 0
      %p195 = por %p193, %p194
      %p196 = scmp.ne.s32.totalorder %s184, %s185
      %p197 = scmp.eq.s32.totalorder %s28, 1
      %p198 = por %p196, %p197
      %p200 = scmp.ne.s32.totalorder %s185, %s199
      %p201 = scmp.eq.s32.totalorder %s28, 0
      %p202 = por %p200, %p201
      %s204 = sadd.s32 %s203, 1
      %p207 = scmp.eq.s32.totalorder %s22, 1
      %p208 = scmp.ne.s32.totalorder %s203, %s205
      %p209 = scmp.eq.s32.totalorder %s22, 0
      %p210 = por %p208, %p209
      %p211 = scmp.ne.s32.totalorder %s203, %s205
      %p212 = scmp.eq.s32.totalorder %s27, 1
      %p213 = por %p211, %p212
      %p214 = scmp.ne.s32.totalorder %s205, %s206
      %p215 = scmp.eq.s32.totalorder %s27, 0
      %p216 = por %p214, %p215
      %p217 = scmp.ne.s32.totalorder %s205, %s206
      %p218 = scmp.eq.s32.totalorder %s28, 1
      %p219 = por %p217, %p218
      %p221 = scmp.ne.s32.totalorder %s206, %s220
      %p222 = scmp.eq.s32.totalorder %s28, 0
      %p223 = por %p221, %p222
      %s225 = sadd.s32 %s224, 1
      %p228 = scmp.eq.s32.totalorder %s22, 1
      %p229 = scmp.ne.s32.totalorder %s224, %s226
      %p230 = scmp.eq.s32.totalorder %s22, 0
      %p231 = por %p229, %p230
      %p232 = scmp.ne.s32.totalorder %s224, %s226
      %p233 = scmp.eq.s32.totalorder %s27, 1
      %p234 = por %p232, %p233
      %p235 = scmp.ne.s32.totalorder %s226, %s227
      %p236 = scmp.eq.s32.totalorder %s27, 0
      %p237 = por %p235, %p236
      %p238 = scmp.ne.s32.totalorder %s226, %s227
      %p239 = scmp.eq.s32.totalorder %s28, 1
      %p240 = por %p238, %p239
      %p242 = scmp.ne.s32.totalorder %s227, %s241
      %p243 = scmp.eq.s32.totalorder %s28, 0
      %p244 = por %p242, %p243
      %s246 = sadd.s32 %s245, 1
      %p249 = scmp.eq.s32.totalorder %s22, 1
      %p250 = scmp.ne.s32.totalorder %s245, %s247
      %p251 = scmp.eq.s32.totalorder %s22, 0
      %p252 = por %p250, %p251
      %p253 = scmp.ne.s32.totalorder %s245, %s247
      %p254 = scmp.eq.s32.totalorder %s27, 1
      %p255 = por %p253, %p254
      %p256 = scmp.ne.s32.totalorder %s247, %s248
      %p257 = scmp.eq.s32.totalorder %s27, 0
      %p258 = por %p256, %p257
      %p259 = scmp.ne.s32.totalorder %s247, %s248
      %p260 = scmp.eq.s32.totalorder %s28, 1
      %p261 = por %p259, %p260
      %p263 = scmp.ne.s32.totalorder %s248, %s262
      %p264 = scmp.eq.s32.totalorder %s28, 0
      %p265 = por %p263, %p264
      %s267 = sadd.s32 %s266, 1
      %p270 = scmp.eq.s32.totalorder %s22, 1
      %p271 = scmp.ne.s32.totalorder %s266, %s268
      %p272 = scmp.eq.s32.totalorder %s22, 0
      %p273 = por %p271, %p272
      %p274 = scmp.ne.s32.totalorder %s266, %s268
      %p275 = scmp.eq.s32.totalorder %s27, 1
      %p276 = por %p274, %p275
      %p277 = scmp.ne.s32.totalorder %s268, %s269
      %p278 = scmp.eq.s32.totalorder %s27, 0
      %p279 = por %p277, %p278
      %p280 = scmp.ne.s32.totalorder %s268, %s269
      %p281 = scmp.eq.s32.totalorder %s28, 1
      %p282 = por %p280, %p281
      %p284 = scmp.ne.s32.totalorder %s269, %s283
      %p285 = scmp.eq.s32.totalorder %s28, 0
      %p286 = por %p284, %p285
      %s288 = sadd.s32 %s287, 1
      %p291 = scmp.eq.s32.totalorder %s22, 1
      %p292 = scmp.ne.s32.totalorder %s287, %s289
      %p293 = scmp.eq.s32.totalorder %s22, 0
      %p294 = por %p292, %p293
      %p295 = scmp.ne.s32.totalorder %s287, %s289
      %p296 = scmp.eq.s32.totalorder %s27, 1
      %p297 = por %p295, %p296
      %p298 = scmp.ne.s32.totalorder %s289, %s290
      %p299 = scmp.eq.s32.totalorder %s27, 0
      %p300 = por %p298, %p299
      %p301 = scmp.ne.s32.totalorder %s289, %s290
      %p302 = scmp.eq.s32.totalorder %s28, 1
      %p303 = por %p301, %p302
      %p305 = scmp.ne.s32.totalorder %s290, %s304
      %p306 = scmp.eq.s32.totalorder %s28, 0
      %p307 = por %p305, %p306
      %s308 = ssub.s32 %s22, %s29
      %p309 = scmp.eq.s32.totalorder %s308, 0
      %s311 = sadd.s32 %s310, 1
      %s312 = scalar_select %p309, %s310, %s311
      %p315 = pneg %p309
      %p316 = scmp.eq.s32.totalorder %s22, 1
      %p317 = por %p315, %p316
      %p318 = scmp.ne.s32.totalorder %s310, %s313
      %p319 = scmp.eq.s32.totalorder %s22, 0
      %p320 = por %p318, %p319
      %p321 = scmp.ne.s32.totalorder %s310, %s313
      %p322 = scmp.eq.s32.totalorder %s27, 1
      %p323 = por %p321, %p322
      %p324 = scmp.ne.s32.totalorder %s313, %s314
      %p325 = scmp.eq.s32.totalorder %s27, 0
      %p326 = por %p324, %p325
      %p327 = scmp.ne.s32.totalorder %s313, %s314
      %p328 = scmp.eq.s32.totalorder %s28, 1
      %p329 = por %p327, %p328
      %p331 = scmp.ne.s32.totalorder %s314, %s330
      %p332 = scmp.eq.s32.totalorder %s28, 0
      %p333 = por %p331, %p332
      %p334 = scmp.le.s32.totalorder 1, %s22
      %p335 = scmp.lt.s32.totalorder %s22, 3
      %p336 = pnand %p334, %p335
      %p337 = pneg %p336
      // Predicated region
      $region9: #{vit_forward.1} parent=5 // pred_check
        _
      $region10: #{vit_forward.1} parent=5 // pred_check_branch
        %339 = sbr.rel (%p336) target = $region12
      $region11: #{vit_forward.1} parent=5 // pred_region
        %s340 = ssub.s32 %s22, 1
        // Predicated region
        $region13: #{vit_forward.1} parent=11 // pred_check
          %p341 = pneg %p69
        $region14: #{vit_forward.1} parent=11 // pred_check_branch
          %343 = sbr.rel (%p341) target = $region16
        $region15: #{vit_forward.1} parent=11 // pred_region
          _
        $region16: #{vit_forward.1} parent=11 // pred_fallthru
          _
        // Predicated region
        $region17: #{vit_forward.1} parent=11 // pred_check
          %p344 = pneg %p90
        $region18: #{vit_forward.1} parent=11 // pred_check_branch
          %346 = sbr.rel (%p344) target = $region20
        $region19: #{vit_forward.1} parent=11 // pred_region
          _
        $region20: #{vit_forward.1} parent=11 // pred_fallthru
          _
        // Predicated region
        $region21: #{vit_forward.1} parent=11 // pred_check
          %p347 = pneg %p111
        $region22: #{vit_forward.1} parent=11 // pred_check_branch
          %349 = sbr.rel (%p347) target = $region24
        $region23: #{vit_forward.1} parent=11 // pred_region
          _
        $region24: #{vit_forward.1} parent=11 // pred_fallthru
          _
        // Predicated region
        $region25: #{vit_forward.1} parent=11 // pred_check
          %p350 = pneg %p132
        $region26: #{vit_forward.1} parent=11 // pred_check_branch
          %352 = sbr.rel (%p350) target = $region28
        $region27: #{vit_forward.1} parent=11 // pred_region
          _
        $region28: #{vit_forward.1} parent=11 // pred_fallthru
          _
        // Predicated region
        $region29: #{vit_forward.1} parent=11 // pred_check
          %p353 = pneg %p153
        $region30: #{vit_forward.1} parent=11 // pred_check_branch
          %355 = sbr.rel (%p353) target = $region32
        $region31: #{vit_forward.1} parent=11 // pred_region
          _
        $region32: #{vit_forward.1} parent=11 // pred_fallthru
          _
        // Predicated region
        $region33: #{vit_forward.1} parent=11 // pred_check
          %p356 = pneg %p174
        $region34: #{vit_forward.1} parent=11 // pred_check_branch
          %358 = sbr.rel (%p356) target = $region36
        $region35: #{vit_forward.1} parent=11 // pred_region
          _
        $region36: #{vit_forward.1} parent=11 // pred_fallthru
          _
        // Predicated region
        $region37: #{vit_forward.1} parent=11 // pred_check
          %p359 = pneg %p195
        $region38: #{vit_forward.1} parent=11 // pred_check_branch
          %361 = sbr.rel (%p359) target = $region40
        $region39: #{vit_forward.1} parent=11 // pred_region
          _
        $region40: #{vit_forward.1} parent=11 // pred_fallthru
          _
        // Predicated region
        $region41: #{vit_forward.1} parent=11 // pred_check
          %p362 = pneg %p216
        $region42: #{vit_forward.1} parent=11 // pred_check_branch
          %364 = sbr.rel (%p362) target = $region44
        $region43: #{vit_forward.1} parent=11 // pred_region
          _
        $region44: #{vit_forward.1} parent=11 // pred_fallthru
          _
        // Predicated region
        $region45: #{vit_forward.1} parent=11 // pred_check
          %p365 = pneg %p237
        $region46: #{vit_forward.1} parent=11 // pred_check_branch
          %367 = sbr.rel (%p365) target = $region48
        $region47: #{vit_forward.1} parent=11 // pred_region
          _
        $region48: #{vit_forward.1} parent=11 // pred_fallthru
          _
        // Predicated region
        $region49: #{vit_forward.1} parent=11 // pred_check
          %p368 = pneg %p258
        $region50: #{vit_forward.1} parent=11 // pred_check_branch
          %370 = sbr.rel (%p368) target = $region52
        $region51: #{vit_forward.1} parent=11 // pred_region
          _
        $region52: #{vit_forward.1} parent=11 // pred_fallthru
          _
        // Predicated region
        $region53: #{vit_forward.1} parent=11 // pred_check
          %p371 = pneg %p279
        $region54: #{vit_forward.1} parent=11 // pred_check_branch
          %373 = sbr.rel (%p371) target = $region56
        $region55: #{vit_forward.1} parent=11 // pred_region
          _
        $region56: #{vit_forward.1} parent=11 // pred_fallthru
          _
        // Predicated region
        $region57: #{vit_forward.1} parent=11 // pred_check
          %p374 = pneg %p300
        $region58: #{vit_forward.1} parent=11 // pred_check_branch
          %376 = sbr.rel (%p374) target = $region60
        $region59: #{vit_forward.1} parent=11 // pred_region
          _
        $region60: #{vit_forward.1} parent=11 // pred_fallthru
          _
      $region12: #{vit_forward.1} parent=5 // pred_fallthru
        _
      %p377 = scmp.lt.s32.totalorder %s22, 2
      // Predicated region
      $region61: #{vit_forward.1} parent=5 // pred_check
        %p378 = pneg %p377
      $region62: #{vit_forward.1} parent=5 // pred_check_branch
        %380 = sbr.rel (%p378) target = $region64
      $region63: #{vit_forward.1} parent=5 // pred_region
        // Predicated region
        $region65: #{vit_forward.1} parent=63 // pred_check
          %p381 = pneg %p42
        $region66: #{vit_forward.1} parent=63 // pred_check_branch
          %383 = sbr.rel (%p381) target = $region68
        $region67: #{vit_forward.1} parent=63 // pred_region
          %p384 = scmp.lt.s32.totalorder %s22, 1
          %s385 = scalar_select %p384, %s22, 1
          %s386 = smul.addr %s385, 3
          %s387 = smul.addr %s386, 8
          %s388 = scalar_lea.vmem %s0, %s387
        $region68: #{vit_forward.1} parent=63 // pred_fallthru
          _
      $region64: #{vit_forward.1} parent=5 // pred_fallthru
        _
      %p389 = scmp.le.s32.totalorder 1, %s22
      %p390 = scmp.lt.s32.totalorder %s22, 3
      %p391 = pnand %p389, %p390
      %p392 = pneg %p391
      // Predicated region
      $region69: #{vit_forward.1} parent=5 // pred_check
        _
      $region70: #{vit_forward.1} parent=5 // pred_check_branch
        %394 = sbr.rel (%p391) target = $region72
      $region71: #{vit_forward.1} parent=5 // pred_region
        %s395 = ssub.s32 %s22, 1
        %p396 = scmp.lt.s32.totalorder %s27, 1
        %s397 = scalar_select %p396, %s27, 1
        %s398 = smul.addr %s397, 3
        %s399 = smul.addr %s398, 8
        %s400 = scalar_lea.vmem %s0, %s399
        %p401 = pneg %p48
        %p402 = pneg %p45
        %p403 = pneg %p69
        %p404 = pneg %p66
        %p405 = pneg %p90
        %p406 = pneg %p87
        %p407 = pneg %p111
        %p408 = pneg %p108
        %p409 = pneg %p132
        %p410 = pneg %p129
        %p411 = pneg %p153
        %p412 = pneg %p150
        %p413 = pneg %p174
        %p414 = pneg %p171
        %p415 = pneg %p195
        %p416 = pneg %p192
        %p417 = pneg %p216
        %p418 = pneg %p213
        %p419 = pneg %p237
        %p420 = pneg %p234
        %p421 = pneg %p258
        %p422 = pneg %p255
        %p423 = pneg %p279
        %p424 = pneg %p276
        %p425 = pneg %p300
        %p426 = pneg %p297
        %p427 = pneg %p326
        %p428 = pneg %p323
        %s429 = sand.u32 %s313, 1
        %s430 = scalar_lea.sflag [#allocation3], %s429
        %s431 = sand.u32 %s313, 1
        %s432 = scalar_lea.vmem [#allocation2], %s431
        %p433 = scmp.lt.s32.totalorder %s27, 1
        %s434 = scalar_select %p433, %s27, 1
        %s435 = smul.addr %s434, 3
        %s436 = smul.addr %s435, 8
        %s437 = scalar_lea.vmem %s0, %s436
        %v439 = vld [vmem:[%s437] sm:$0xff]
        %v440 = vld [vmem:[%s437 + $0x8] sm:$0xff]
        %v441 = vld [vmem:[%s437 + $0x10] sm:$0x1]
        %v442 = vld [vmem:[%s1] sm:$0xf]
        %v443 = vld [vmem:[%s1 + $0x4] sm:$0xf]
        %v444 = vld [vmem:[%s1 + $0x8] sm:$0xf]
        %v445 = vld [vmem:[%s1 + $0xc] sm:$0xf]
        %v446 = vld [vmem:[%s1 + $0x10] sm:$0xf]
        %v447 = vld [vmem:[%s1 + $0x14] sm:$0xf]
        %v448 = vpack.c.bf16 %v440, %v439
        %v449 = vpack.c.bf16 %v441, %v441
        %v450 = vld [vmem:[%s2 + $0x1] sm:$0x1]
        %v451 = vlaneseq
        %v452 = vshrl.u32 %v451, 7
        %v453 = vsub.s32 0, %v452
        %v454 = vrot.slane %v450, %v453
        %v461 = vunpack.c.l.b16 %v442
        %v462 = vunpack.c.l.b16 %v443
        %v463 = vunpack.c.l.b16 %v444
        %v464 = vunpack.c.l.b16 %v445
        %v465 = vunpack.c.l.b16 %v446
        %v466 = vunpack.c.l.b16 %v447
        %v467 = vpack.c.b16 %v462, %v461
        %v468 = vpack.c.b16 %v464, %v463
        %v469 = vpack.c.b16 %v466, %v465
        %vm473 = vcmask 392192
        %v475 = vsel %vm473, %v448, 0
        %v478 = vsel %vm473, %v449, 0
        %480 = vmatprep.subr.bf16.mxu0 0
        %481 = vmatpush1.bf16.msra.mxu0 0
        %482 = vmatprep.subr.bf16.mxu0 0
        %483 = vmatpush1.bf16.msra.mxu0 0
        %484 = vmatprep.subr.bf16.mxu0 0
        %485 = vmatpush1.bf16.msra.mxu0 0
        %486 = vmatprep.subr.bf16.mxu0 0
        %487 = vmatpush1.bf16.msra.mxu0 0
        %488 = vmatprep.subr.bf16.mxu0 0
        %489 = vmatpush1.bf16.msra.mxu0 0
        %490 = vmatprep.subr.bf16.mxu0 0
        %491 = vmatpush1.bf16.msra.mxu0 %v469
        %492 = vmatprep.subr.bf16.mxu0 0
        %493 = vmatpush1.bf16.msra.mxu0 %v468
        %494 = vmatprep.subr.bf16.mxu0 0
        %495 = vmatpush1.bf16.msra.mxu0 %v467
        %496 = vmatprep.subr.bf16.mxu0 0
        %497 = vmatpush2.bf16.msra.mxu0 0
        %498 = vmatprep.subr.bf16.mxu0 0
        %499 = vmatpush2.bf16.msra.mxu0 0
        %500 = vmatprep.subr.bf16.mxu0 0
        %501 = vmatpush2.bf16.msra.mxu0 0
        %502 = vmatprep.subr.bf16.mxu0 0
        %503 = vmatpush2.bf16.msra.mxu0 0
        %504 = vmatprep.subr.bf16.mxu0 0
        %505 = vmatpush2.bf16.msra.mxu0 0
        %506 = vmatprep.subr.bf16.mxu0 0
        %507 = vmatpush2.bf16.msra.mxu0 0
        %508 = vmatprep.subr.bf16.mxu0 0
        %509 = vmatpush2.bf16.msra.mxu0 0
        %510 = vmatprep.subr.bf16.mxu0 0
        %511 = vmatpush2.bf16.msra.mxu0 0
        %512 = vmatprep.mubr.bf16.mxu0 0
        %513 = vmatmul.mubr.bf16.gmra.mxu0 %v475
        %v514 = vpop.f32.mrf.mxu0
        %v515 = vadd.f32 %v454, %v514
        %v516 = vpop.f32.mrf.mxu0
        %v517 = vpop.f32.mrf.mxu0
        %v518 = vadd.f32 %v454, %v517
        %v519 = vpop.f32.mrf.mxu0
        %520 = vmatprep.mubr.bf16.mxu0 0
        %521 = vmatmul.mubr.bf16.gmra.mxu0 %v478
        %v522 = vpop.f32.mrf.mxu0
        %v523 = vadd.f32 %v454, %v522
        %v524 = vpop.f32.mrf.mxu0
        %v525 = vpop.f32.mrf.mxu0
        %v526 = vpop.f32.mrf.mxu0
        %527 = vdwg.mxu0
        %v528 = vlaneseq
        %v529 = vshrl.u32 %v528, 7
        %v530 = vadd.s32 %v529, 8
        %v531 = vadd.s32 %v529, 16
        %v532 = vld [vmem:[%s2] sm:$0x1]
        %vm533 = vcmp.eq.s32.totalorder %v529, 0
        %vm534 = vcmp.eq.s32.totalorder %v530, 0
        %vm535 = vcmp.eq.s32.totalorder %v531, 0
        %v536 = vlaneseq
        %v537 = vshrl.u32 %v536, 7
        %v538 = vsub.s32 0, %v537
        %v539 = vrot.slane %v532, %v538
        %v540 = vsel %vm533, %v539, %v515
        %v541 = vsel %vm534, %v539, %v518
        %v542 = vsel %vm535, %v539, %v523
        %v543 = vld [vmem:[%s3] sm:$0xff]
        %v544 = vld [vmem:[%s3 + $0x8] sm:$0xff]
        %v545 = vld [vmem:[%s3 + $0x10] sm:$0x1]
        %v546 = vadd.f32 %v540, %v543
        %v547 = vadd.f32 %v541, %v544
        %v548 = vadd.f32 %v542, %v545
        %v549 = vld [vmem:[%s10] sm:$0x3f]
        %vm550 = vcmask 261120
        %v551 = vsel %vm550, %v546, 0.0
        %552 = vadd.xlane.f32.xlu0 %v551
        %v553 = vpop.xlane.xlu0 %552
        %v554 = vsel %vm550, %v547, 0.0
        %555 = vadd.xlane.f32.xlu0 %v554
        %v556 = vpop.xlane.xlu0 %555
        %vm557 = vcmask 253952
        %v558 = vsel %vm557, %v548, 0.0
        %559 = vadd.xlane.f32.xlu0 %v558
        %v560 = vpop.xlane.xlu0 %559
        %v561 = vrcp.pop 32.0
        %v562 = vmul.f32 %v553, %v561
        %v563 = vmul.f32 %v556, %v561
        %v564 = vmul.f32 %v560, %v561
        %v565 = vsub.f32 %v546, %v562
        %v566 = vsub.f32 %v547, %v563
        %v567 = vsub.f32 %v548, %v564
        %v568 = vmul.f32 %v565, %v565
        %v569 = vmul.f32 %v566, %v566
        %v570 = vmul.f32 %v567, %v567
        %v571 = vsel %vm550, %v568, 0.0
        %572 = vadd.xlane.f32.xlu0 %v571
        %v573 = vpop.xlane.xlu0 %572
        %v574 = vsel %vm550, %v569, 0.0
        %575 = vadd.xlane.f32.xlu0 %v574
        %v576 = vpop.xlane.xlu0 %575
        %v577 = vsel %vm557, %v570, 0.0
        %578 = vadd.xlane.f32.xlu0 %v577
        %v579 = vpop.xlane.xlu0 %578
        %v580 = vmul.f32 %v573, %v561
        %v581 = vmul.f32 %v576, %v561
        %v582 = vmul.f32 %v579, %v561
        %v583 = vadd.f32 %v580, 1e-05
        %v584 = vadd.f32 %v581, 1e-05
        %v585 = vadd.f32 %v582, 1e-05
        %v586 = vrsqrt.pop %v583
        %v587 = vrsqrt.pop %v584
        %v588 = vrsqrt.pop %v585
        %v589 = vmul.f32 %v565, %v586
        %v590 = vmul.f32 %v566, %v587
        %v591 = vmul.f32 %v567, %v588
        %v592 = vlaneseq
        %v593 = vshrl.u32 %v592, 7
        %v594 = vsub.s32 0, %v593
        %v595 = vrot.slane %v549, %v594
        %v596 = vmul.f32 %v589, %v595
        %v597 = vmul.f32 %v590, %v595
        %v598 = vmul.f32 %v591, %v595
        %v599 = vlaneseq
        %v600 = vshrl.u32 %v599, 7
        %v601 = vsub.s32 1, %v600
        %v602 = vrot.slane %v549, %v601
        %v603 = vadd.f32 %v596, %v602
        %v604 = vadd.f32 %v597, %v602
        %v605 = vadd.f32 %v598, %v602
        %v606 = vld [vmem:[%s4] sm:$0xf]
        %v607 = vld [vmem:[%s4 + $0x4] sm:$0xf]
        %v608 = vld [vmem:[%s4 + $0x8] sm:$0xf]
        %v609 = vld [vmem:[%s4 + $0xc] sm:$0xf]
        %v610 = vpack.c.bf16 %v604, %v603
        %v611 = vpack.c.bf16 %v605, %v605
        %v612 = vld [vmem:[%s5] sm:$0x1]
        %v614 = vlaneseq
        %v615 = vshrl.u32 %v614, 7
        %v616 = vsub.s32 0, %v615
        %v617 = vrot.slane %v612, %v616
        %v623 = vunpack.c.l.b16 %v606
        %v624 = vunpack.c.l.b16 %v607
        %v625 = vunpack.c.l.b16 %v608
        %v626 = vunpack.c.l.b16 %v609
        %v627 = vpack.c.b16 %v624, %v623
        %v628 = vpack.c.b16 %v626, %v625
        %v632 = vsel %vm550, %v610, 0
        %v635 = vsel %vm550, %v611, 0
        %637 = vmatprep.subr.bf16.mxu0 0
        %638 = vmatpush1.bf16.msra.mxu0 0
        %639 = vmatprep.subr.bf16.mxu0 0
        %640 = vmatpush1.bf16.msra.mxu0 0
        %641 = vmatprep.subr.bf16.mxu0 0
        %642 = vmatpush1.bf16.msra.mxu0 0
        %643 = vmatprep.subr.bf16.mxu0 0
        %644 = vmatpush1.bf16.msra.mxu0 0
        %645 = vmatprep.subr.bf16.mxu0 0
        %646 = vmatpush1.bf16.msra.mxu0 0
        %647 = vmatprep.subr.bf16.mxu0 0
        %648 = vmatpush1.bf16.msra.mxu0 0
        %649 = vmatprep.subr.bf16.mxu0 0
        %650 = vmatpush1.bf16.msra.mxu0 %v628
        %651 = vmatprep.subr.bf16.mxu0 0
        %652 = vmatpush1.bf16.msra.mxu0 %v627
        %653 = vmatprep.subr.bf16.mxu0 0
        %654 = vmatpush2.bf16.msra.mxu0 0
        %655 = vmatprep.subr.bf16.mxu0 0
        %656 = vmatpush2.bf16.msra.mxu0 0
        %657 = vmatprep.subr.bf16.mxu0 0
        %658 = vmatpush2.bf16.msra.mxu0 0
        %659 = vmatprep.subr.bf16.mxu0 0
        %660 = vmatpush2.bf16.msra.mxu0 0
        %661 = vmatprep.subr.bf16.mxu0 0
        %662 = vmatpush2.bf16.msra.mxu0 0
        %663 = vmatprep.subr.bf16.mxu0 0
        %664 = vmatpush2.bf16.msra.mxu0 0
        %665 = vmatprep.subr.bf16.mxu0 0
        %666 = vmatpush2.bf16.msra.mxu0 0
        %667 = vmatprep.subr.bf16.mxu0 0
        %668 = vmatpush2.bf16.msra.mxu0 0
        %669 = vmatprep.mubr.bf16.mxu0 0
        %670 = vmatmul.mubr.bf16.gmra.mxu0 %v632
        %v671 = vpop.f32.mrf.mxu0
        %v672 = vadd.f32 %v617, %v671
        %v673 = vpop.f32.mrf.mxu0
        %v674 = vpop.f32.mrf.mxu0
        %v675 = vadd.f32 %v617, %v674
        %v676 = vpop.f32.mrf.mxu0
        %677 = vmatprep.mubr.bf16.mxu0 0
        %678 = vmatmul.mubr.bf16.gmra.mxu0 %v635
        %v679 = vpop.f32.mrf.mxu0
        %v680 = vadd.f32 %v617, %v679
        %v681 = vpop.f32.mrf.mxu0
        %v682 = vpop.f32.mrf.mxu0
        %v683 = vpop.f32.mrf.mxu0
        %684 = vdwg.mxu0
        %688 = vrot.lane.b32.xlu0 %v672, 96
        %v689 = vpop.permute.xlu0 %688
        %690 = vrot.lane.b32.xlu0 %v675, 96
        %v691 = vpop.permute.xlu0 %690
        %692 = vrot.lane.b32.xlu0 %v680, 96
        %v693 = vpop.permute.xlu0 %692
        %vm694 = vcmask 64512
        %v695 = vsel %vm694, %v672, 0
        %v697 = vsel %vm694, %v675, 0
        %v699 = vsel %vm694, %v680, 0
        %v701 = vsel %vm694, %v689, 0
        %v703 = vsel %vm694, %v691, 0
        %v705 = vsel %vm694, %v693, 0
        %707 = vmatprep.subr.mxu0 0.0
        %708 = vmatpush1.xpose.msra.mxu0 0.0
        %709 = vmatprep.subr.mxu0 0.0
        %710 = vmatpush1.xpose.msra.mxu0 0.0
        %711 = vmatprep.subr.mxu0 0.0
        %712 = vmatpush1.xpose.msra.mxu0 0.0
        %713 = vmatprep.subr.mxu0 0.0
        %714 = vmatpush1.xpose.msra.mxu0 0.0
        %715 = vmatprep.subr.mxu0 0.0
        %716 = vmatpush1.xpose.msra.mxu0 0.0
        %717 = vmatprep.subr.mxu0 0.0
        %718 = vmatpush1.xpose.msra.mxu0 0.0
        %719 = vmatprep.subr.mxu0 0.0
        %720 = vmatpush1.xpose.msra.mxu0 0.0
        %721 = vmatprep.subr.mxu0 0.0
        %722 = vmatpush1.xpose.msra.mxu0 0.0
        %723 = vmatprep.subr.mxu0 0.0
        %724 = vmatpush1.xpose.msra.mxu0 0.0
        %725 = vmatprep.subr.mxu0 0.0
        %726 = vmatpush1.xpose.msra.mxu0 0.0
        %727 = vmatprep.subr.mxu0 0.0
        %728 = vmatpush1.xpose.msra.mxu0 0.0
        %729 = vmatprep.subr.mxu0 0.0
        %730 = vmatpush1.xpose.msra.mxu0 0.0
        %731 = vmatprep.subr.mxu0 0.0
        %732 = vmatpush1.xpose.msra.mxu0 0.0
        %733 = vmatprep.subr.mxu0 0.0
        %734 = vmatpush1.xpose.msra.mxu0 %v705
        %735 = vmatprep.subr.mxu0 0.0
        %736 = vmatpush1.xpose.msra.mxu0 %v703
        %737 = vmatprep.subr.mxu0 0.0
        %738 = vmatpush1.xpose.msra.mxu0 %v701
        %739 = vmatprep.subr.mxu0 0.0
        %740 = vmatpush2.xpose.msra.mxu0 0.0
        %741 = vmatprep.subr.mxu0 0.0
        %742 = vmatpush2.xpose.msra.mxu0 0.0
        %743 = vmatprep.subr.mxu0 0.0
        %744 = vmatpush2.xpose.msra.mxu0 0.0
        %745 = vmatprep.subr.mxu0 0.0
        %746 = vmatpush2.xpose.msra.mxu0 0.0
        %747 = vmatprep.subr.mxu0 0.0
        %748 = vmatpush2.xpose.msra.mxu0 0.0
        %749 = vmatprep.subr.mxu0 0.0
        %750 = vmatpush2.xpose.msra.mxu0 0.0
        %751 = vmatprep.subr.mxu0 0.0
        %752 = vmatpush2.xpose.msra.mxu0 0.0
        %753 = vmatprep.subr.mxu0 0.0
        %754 = vmatpush2.xpose.msra.mxu0 0.0
        %755 = vmatprep.subr.mxu0 0.0
        %756 = vmatpush2.xpose.msra.mxu0 0.0
        %757 = vmatprep.subr.mxu0 0.0
        %758 = vmatpush2.xpose.msra.mxu0 0.0
        %759 = vmatprep.subr.mxu0 0.0
        %760 = vmatpush2.xpose.msra.mxu0 0.0
        %761 = vmatprep.subr.mxu0 0.0
        %762 = vmatpush2.xpose.msra.mxu0 0.0
        %763 = vmatprep.subr.mxu0 0.0
        %764 = vmatpush2.xpose.msra.mxu0 0.0
        %765 = vmatprep.subr.mxu0 0.0
        %766 = vmatpush2.xpose.msra.mxu0 0.0
        %767 = vmatprep.subr.mxu0 0.0
        %768 = vmatpush2.xpose.msra.mxu0 0.0
        %769 = vmatprep.subr.mxu0 0.0
        %770 = vmatpush2.xpose.msra.mxu0 0.0
        %771 = vmatprep.mubr.f32.mxu0 0.0
        %772 = vmatmul.mubr.f32.gmra.mxu0 %v695
        %v773 = vpop.f32.mrf.mxu0
        %v774 = vadd.f32 0.0, %v773
        %v775 = vpop.f32.mrf.mxu0
        %776 = vmatprep.mubr.f32.mxu0 0.0
        %777 = vmatmul.mubr.f32.gmra.mxu0 %v697
        %v778 = vpop.f32.mrf.mxu0
        %v779 = vadd.f32 0.0, %v778
        %v780 = vpop.f32.mrf.mxu0
        %781 = vmatprep.mubr.f32.mxu0 0.0
        %782 = vmatmul.mubr.f32.gmra.mxu0 %v699
        %v783 = vpop.f32.mrf.mxu0
        %v784 = vadd.f32 0.0, %v783
        %v785 = vpop.f32.mrf.mxu0
        %786 = vdwg.mxu0
        %v787 = vmul.f32 %v774, 0.35355338
        %v788 = vmul.f32 %v779, 0.35355338
        %v789 = vmul.f32 %v784, 0.35355338
        %vm790 = vcmask 138240
        %v791 = vsel %vm790, %v787, -inf
        %792 = vmax.xlane.f32.xlu0 %v791
        %v793 = vpop.xlane.xlu0 %792
        %v794 = vsel %vm790, %v788, -inf
        %795 = vmax.xlane.f32.xlu0 %v794
        %v796 = vpop.xlane.xlu0 %795
        %vm797 = vcmask 131072
        %v798 = vsel %vm797, %v789, -inf
        %799 = vmax.xlane.f32.xlu0 %v798
        %v800 = vpop.xlane.xlu0 %799
        %v801 = vsub.f32 %v787, %v793
        %v802 = vsub.f32 %v788, %v796
        %v803 = vsub.f32 %v789, %v800
        %v804 = vmul.f32 %v801, 1.442695
        %v805 = vpow.pop %v804
        %v806 = vmul.f32 %v802, 1.442695
        %v807 = vpow.pop %v806
        %v808 = vmul.f32 %v803, 1.442695
        %v809 = vpow.pop %v808
        %v810 = vsel %vm790, %v805, 0.0
        %811 = vadd.xlane.f32.xlu0 %v810
        %v812 = vpop.xlane.xlu0 %811
        %v813 = vsel %vm790, %v807, 0.0
        %814 = vadd.xlane.f32.xlu0 %v813
        %v815 = vpop.xlane.xlu0 %814
        %v816 = vsel %vm797, %v809, 0.0
        %817 = vadd.xlane.f32.xlu0 %v816
        %v818 = vpop.xlane.xlu0 %817
        %v819 = vrcp.pop %v812
        %v820 = vrcp.pop %v815
        %v821 = vrcp.pop %v818
        %v822 = vmul.f32 %v805, %v819
        %v823 = vmul.f32 %v807, %v820
        %v824 = vmul.f32 %v809, %v821
        %825 = vrot.lane.b32.xlu0 %v672, 64
        %v826 = vpop.permute.xlu0 %825
        %827 = vrot.lane.b32.xlu0 %v675, 64
        %v828 = vpop.permute.xlu0 %827
        %829 = vrot.lane.b32.xlu0 %v680, 64
        %v830 = vpop.permute.xlu0 %829
        %v834 = vsel %vm790, %v822, 0
        %v837 = vsel %vm790, %v823, 0
        %v840 = vsel %vm790, %v824, 0
        %vm842 = vcmask 1040384
        %v843 = vsel %vm842, %v830, 0
        %845 = vmatprep.subr.mxu0 0.0
        %846 = vmatpush1.msra.mxu0 0.0
        %847 = vmatprep.subr.mxu0 0.0
        %848 = vmatpush1.msra.mxu0 0.0
        %849 = vmatprep.subr.mxu0 0.0
        %850 = vmatpush1.msra.mxu0 0.0
        %851 = vmatprep.subr.mxu0 0.0
        %852 = vmatpush1.msra.mxu0 0.0
        %853 = vmatprep.subr.mxu0 0.0
        %854 = vmatpush1.msra.mxu0 0.0
        %855 = vmatprep.subr.mxu0 0.0
        %856 = vmatpush1.msra.mxu0 0.0
        %857 = vmatprep.subr.mxu0 0.0
        %858 = vmatpush1.msra.mxu0 0.0
        %859 = vmatprep.subr.mxu0 0.0
        %860 = vmatpush1.msra.mxu0 0.0
        %861 = vmatprep.subr.mxu0 0.0
        %862 = vmatpush1.msra.mxu0 0.0
        %863 = vmatprep.subr.mxu0 0.0
        %864 = vmatpush1.msra.mxu0 0.0
        %865 = vmatprep.subr.mxu0 0.0
        %866 = vmatpush1.msra.mxu0 0.0
        %867 = vmatprep.subr.mxu0 0.0
        %868 = vmatpush1.msra.mxu0 0.0
        %869 = vmatprep.subr.mxu0 0.0
        %870 = vmatpush1.msra.mxu0 0.0
        %871 = vmatprep.subr.mxu0 0.0
        %872 = vmatpush1.msra.mxu0 %v843
        %873 = vmatprep.subr.mxu0 0.0
        %874 = vmatpush1.msra.mxu0 %v828
        %875 = vmatprep.subr.mxu0 0.0
        %876 = vmatpush1.msra.mxu0 %v826
        %877 = vmatprep.subr.mxu0 0.0
        %878 = vmatpush2.msra.mxu0 0.0
        %879 = vmatprep.subr.mxu0 0.0
        %880 = vmatpush2.msra.mxu0 0.0
        %881 = vmatprep.subr.mxu0 0.0
        %882 = vmatpush2.msra.mxu0 0.0
        %883 = vmatprep.subr.mxu0 0.0
        %884 = vmatpush2.msra.mxu0 0.0
        %885 = vmatprep.subr.mxu0 0.0
        %886 = vmatpush2.msra.mxu0 0.0
        %887 = vmatprep.subr.mxu0 0.0
        %888 = vmatpush2.msra.mxu0 0.0
        %889 = vmatprep.subr.mxu0 0.0
        %890 = vmatpush2.msra.mxu0 0.0
        %891 = vmatprep.subr.mxu0 0.0
        %892 = vmatpush2.msra.mxu0 0.0
        %893 = vmatprep.subr.mxu0 0.0
        %894 = vmatpush2.msra.mxu0 0.0
        %895 = vmatprep.subr.mxu0 0.0
        %896 = vmatpush2.msra.mxu0 0.0
        %897 = vmatprep.subr.mxu0 0.0
        %898 = vmatpush2.msra.mxu0 0.0
        %899 = vmatprep.subr.mxu0 0.0
        %900 = vmatpush2.msra.mxu0 0.0
        %901 = vmatprep.subr.mxu0 0.0
        %902 = vmatpush2.msra.mxu0 0.0
        %903 = vmatprep.subr.mxu0 0.0
        %904 = vmatpush2.msra.mxu0 0.0
        %905 = vmatprep.subr.mxu0 0.0
        %906 = vmatpush2.msra.mxu0 0.0
        %907 = vmatprep.subr.mxu0 0.0
        %908 = vmatpush2.msra.mxu0 0.0
        %909 = vmatprep.mubr.f32.mxu0 0.0
        %910 = vmatmul.mubr.f32.gmra.mxu0 %v834
        %v911 = vpop.f32.mrf.mxu0
        %v912 = vadd.f32 0.0, %v911
        %v913 = vpop.f32.mrf.mxu0
        %914 = vmatprep.mubr.f32.mxu0 0.0
        %915 = vmatmul.mubr.f32.gmra.mxu0 %v837
        %v916 = vpop.f32.mrf.mxu0
        %v917 = vadd.f32 0.0, %v916
        %v918 = vpop.f32.mrf.mxu0
        %919 = vmatprep.mubr.f32.mxu0 0.0
        %920 = vmatmul.mubr.f32.gmra.mxu0 %v840
        %v921 = vpop.f32.mrf.mxu0
        %v922 = vadd.f32 0.0, %v921
        %v923 = vpop.f32.mrf.mxu0
        %924 = vdwg.mxu0
        %925 = vrot.lane.b32.xlu0 %v672, 120
        %v926 = vpop.permute.xlu0 %925
        %927 = vrot.lane.b32.xlu0 %v675, 120
        %v928 = vpop.permute.xlu0 %927
        %929 = vrot.lane.b32.xlu0 %v680, 120
        %v930 = vpop.permute.xlu0 %929
        %931 = vrot.lane.b32.xlu0 %v672, 88
        %v932 = vpop.permute.xlu0 %931
        %933 = vrot.lane.b32.xlu0 %v675, 88
        %v934 = vpop.permute.xlu0 %933
        %935 = vrot.lane.b32.xlu0 %v680, 88
        %v936 = vpop.permute.xlu0 %935
        %v937 = vsel %vm694, %v926, 0
        %v939 = vsel %vm694, %v928, 0
        %v941 = vsel %vm694, %v930, 0
        %v943 = vsel %vm694, %v932, 0
        %v945 = vsel %vm694, %v934, 0
        %v947 = vsel %vm694, %v936, 0
        %949 = vmatprep.subr.mxu0 0.0
        %950 = vmatpush1.xpose.msra.mxu0 0.0
        %951 = vmatprep.subr.mxu0 0.0
        %952 = vmatpush1.xpose.msra.mxu0 0.0
        %953 = vmatprep.subr.mxu0 0.0
        %954 = vmatpush1.xpose.msra.mxu0 0.0
        %955 = vmatprep.subr.mxu0 0.0
        %956 = vmatpush1.xpose.msra.mxu0 0.0
        %957 = vmatprep.subr.mxu0 0.0
        %958 = vmatpush1.xpose.msra.mxu0 0.0
        %959 = vmatprep.subr.mxu0 0.0
        %960 = vmatpush1.xpose.msra.mxu0 0.0
        %961 = vmatprep.subr.mxu0 0.0
        %962 = vmatpush1.xpose.msra.mxu0 0.0
        %963 = vmatprep.subr.mxu0 0.0
        %964 = vmatpush1.xpose.msra.mxu0 0.0
        %965 = vmatprep.subr.mxu0 0.0
        %966 = vmatpush1.xpose.msra.mxu0 0.0
        %967 = vmatprep.subr.mxu0 0.0
        %968 = vmatpush1.xpose.msra.mxu0 0.0
        %969 = vmatprep.subr.mxu0 0.0
        %970 = vmatpush1.xpose.msra.mxu0 0.0
        %971 = vmatprep.subr.mxu0 0.0
        %972 = vmatpush1.xpose.msra.mxu0 0.0
        %973 = vmatprep.subr.mxu0 0.0
        %974 = vmatpush1.xpose.msra.mxu0 0.0
        %975 = vmatprep.subr.mxu0 0.0
        %976 = vmatpush1.xpose.msra.mxu0 %v947
        %977 = vmatprep.subr.mxu0 0.0
        %978 = vmatpush1.xpose.msra.mxu0 %v945
        %979 = vmatprep.subr.mxu0 0.0
        %980 = vmatpush1.xpose.msra.mxu0 %v943
        %981 = vmatprep.subr.mxu0 0.0
        %982 = vmatpush2.xpose.msra.mxu0 0.0
        %983 = vmatprep.subr.mxu0 0.0
        %984 = vmatpush2.xpose.msra.mxu0 0.0
        %985 = vmatprep.subr.mxu0 0.0
        %986 = vmatpush2.xpose.msra.mxu0 0.0
        %987 = vmatprep.subr.mxu0 0.0
        %988 = vmatpush2.xpose.msra.mxu0 0.0
        %989 = vmatprep.subr.mxu0 0.0
        %990 = vmatpush2.xpose.msra.mxu0 0.0
        %991 = vmatprep.subr.mxu0 0.0
        %992 = vmatpush2.xpose.msra.mxu0 0.0
        %993 = vmatprep.subr.mxu0 0.0
        %994 = vmatpush2.xpose.msra.mxu0 0.0
        %995 = vmatprep.subr.mxu0 0.0
        %996 = vmatpush2.xpose.msra.mxu0 0.0
        %997 = vmatprep.subr.mxu0 0.0
        %998 = vmatpush2.xpose.msra.mxu0 0.0
        %999 = vmatprep.subr.mxu0 0.0
        %1000 = vmatpush2.xpose.msra.mxu0 0.0
        %1001 = vmatprep.subr.mxu0 0.0
        %1002 = vmatpush2.xpose.msra.mxu0 0.0
        %1003 = vmatprep.subr.mxu0 0.0
        %1004 = vmatpush2.xpose.msra.mxu0 0.0
        %1005 = vmatprep.subr.mxu0 0.0
        %1006 = vmatpush2.xpose.msra.mxu0 0.0
        %1007 = vmatprep.subr.mxu0 0.0
        %1008 = vmatpush2.xpose.msra.mxu0 0.0
        %1009 = vmatprep.subr.mxu0 0.0
        %1010 = vmatpush2.xpose.msra.mxu0 0.0
        %1011 = vmatprep.subr.mxu0 0.0
        %1012 = vmatpush2.xpose.msra.mxu0 0.0
        %1013 = vmatprep.mubr.f32.mxu0 0.0
        %1014 = vmatmul.mubr.f32.gmra.mxu0 %v937
        %v1015 = vpop.f32.mrf.mxu0
        %v1016 = vadd.f32 0.0, %v1015
        %v1017 = vpop.f32.mrf.mxu0
        %1018 = vmatprep.mubr.f32.mxu0 0.0
        %1019 = vmatmul.mubr.f32.gmra.mxu0 %v939
        %v1020 = vpop.f32.mrf.mxu0
        %v1021 = vadd.f32 0.0, %v1020
        %v1022 = vpop.f32.mrf.mxu0
        %1023 = vmatprep.mubr.f32.mxu0 0.0
        %1024 = vmatmul.mubr.f32.gmra.mxu0 %v941
        %v1025 = vpop.f32.mrf.mxu0
        %v1026 = vadd.f32 0.0, %v1025
        %v1027 = vpop.f32.mrf.mxu0
        %1028 = vdwg.mxu0
        %v1029 = vmul.f32 %v1016, 0.35355338
        %v1030 = vmul.f32 %v1021, 0.35355338
        %v1031 = vmul.f32 %v1026, 0.35355338
        %v1032 = vsel %vm790, %v1029, -inf
        %1033 = vmax.xlane.f32.xlu0 %v1032
        %v1034 = vpop.xlane.xlu0 %1033
        %v1035 = vsel %vm790, %v1030, -inf
        %1036 = vmax.xlane.f32.xlu0 %v1035
        %v1037 = vpop.xlane.xlu0 %1036
        %v1038 = vsel %vm797, %v1031, -inf
        %1039 = vmax.xlane.f32.xlu0 %v1038
        %v1040 = vpop.xlane.xlu0 %1039
        %v1041 = vsub.f32 %v1029, %v1034
        %v1042 = vsub.f32 %v1030, %v1037
        %v1043 = vsub.f32 %v1031, %v1040
        %v1044 = vmul.f32 %v1041, 1.442695
        %v1045 = vpow.pop %v1044
        %v1046 = vmul.f32 %v1042, 1.442695
        %v1047 = vpow.pop %v1046
        %v1048 = vmul.f32 %v1043, 1.442695
        %v1049 = vpow.pop %v1048
        %v1050 = vsel %vm790, %v1045, 0.0
        %1051 = vadd.xlane.f32.xlu0 %v1050
        %v1052 = vpop.xlane.xlu0 %1051
        %v1053 = vsel %vm790, %v1047, 0.0
        %1054 = vadd.xlane.f32.xlu0 %v1053
        %v1055 = vpop.xlane.xlu0 %1054
        %v1056 = vsel %vm797, %v1049, 0.0
        %1057 = vadd.xlane.f32.xlu0 %v1056
        %v1058 = vpop.xlane.xlu0 %1057
        %v1059 = vrcp.pop %v1052
        %v1060 = vrcp.pop %v1055
        %v1061 = vrcp.pop %v1058
        %v1062 = vmul.f32 %v1045, %v1059
        %v1063 = vmul.f32 %v1047, %v1060
        %v1064 = vmul.f32 %v1049, %v1061
        %1065 = vrot.lane.b32.xlu0 %v672, 56
        %v1066 = vpop.permute.xlu0 %1065
        %1067 = vrot.lane.b32.xlu0 %v675, 56
        %v1068 = vpop.permute.xlu0 %1067
        %1069 = vrot.lane.b32.xlu0 %v680, 56
        %v1070 = vpop.permute.xlu0 %1069
        %v1074 = vsel %vm790, %v1062, 0
        %v1077 = vsel %vm790, %v1063, 0
        %v1080 = vsel %vm790, %v1064, 0
        %v1082 = vsel %vm842, %v1070, 0
        %1084 = vmatprep.subr.mxu0 0.0
        %1085 = vmatpush1.msra.mxu0 0.0
        %1086 = vmatprep.subr.mxu0 0.0
        %1087 = vmatpush1.msra.mxu0 0.0
        %1088 = vmatprep.subr.mxu0 0.0
        %1089 = vmatpush1.msra.mxu0 0.0
        %1090 = vmatprep.subr.mxu0 0.0
        %1091 = vmatpush1.msra.mxu0 0.0
        %1092 = vmatprep.subr.mxu0 0.0
        %1093 = vmatpush1.msra.mxu0 0.0
        %1094 = vmatprep.subr.mxu0 0.0
        %1095 = vmatpush1.msra.mxu0 0.0
        %1096 = vmatprep.subr.mxu0 0.0
        %1097 = vmatpush1.msra.mxu0 0.0
        %1098 = vmatprep.subr.mxu0 0.0
        %1099 = vmatpush1.msra.mxu0 0.0
        %1100 = vmatprep.subr.mxu0 0.0
        %1101 = vmatpush1.msra.mxu0 0.0
        %1102 = vmatprep.subr.mxu0 0.0
        %1103 = vmatpush1.msra.mxu0 0.0
        %1104 = vmatprep.subr.mxu0 0.0
        %1105 = vmatpush1.msra.mxu0 0.0
        %1106 = vmatprep.subr.mxu0 0.0
        %1107 = vmatpush1.msra.mxu0 0.0
        %1108 = vmatprep.subr.mxu0 0.0
        %1109 = vmatpush1.msra.mxu0 0.0
        %1110 = vmatprep.subr.mxu0 0.0
        %1111 = vmatpush1.msra.mxu0 %v1082
        %1112 = vmatprep.subr.mxu0 0.0
        %1113 = vmatpush1.msra.mxu0 %v1068
        %1114 = vmatprep.subr.mxu0 0.0
        %1115 = vmatpush1.msra.mxu0 %v1066
        %1116 = vmatprep.subr.mxu0 0.0
        %1117 = vmatpush2.msra.mxu0 0.0
        %1118 = vmatprep.subr.mxu0 0.0
        %1119 = vmatpush2.msra.mxu0 0.0
        %1120 = vmatprep.subr.mxu0 0.0
        %1121 = vmatpush2.msra.mxu0 0.0
        %1122 = vmatprep.subr.mxu0 0.0
        %1123 = vmatpush2.msra.mxu0 0.0
        %1124 = vmatprep.subr.mxu0 0.0
        %1125 = vmatpush2.msra.mxu0 0.0
        %1126 = vmatprep.subr.mxu0 0.0
        %1127 = vmatpush2.msra.mxu0 0.0
        %1128 = vmatprep.subr.mxu0 0.0
        %1129 = vmatpush2.msra.mxu0 0.0
        %1130 = vmatprep.subr.mxu0 0.0
        %1131 = vmatpush2.msra.mxu0 0.0
        %1132 = vmatprep.subr.mxu0 0.0
        %1133 = vmatpush2.msra.mxu0 0.0
        %1134 = vmatprep.subr.mxu0 0.0
        %1135 = vmatpush2.msra.mxu0 0.0
        %1136 = vmatprep.subr.mxu0 0.0
        %1137 = vmatpush2.msra.mxu0 0.0
        %1138 = vmatprep.subr.mxu0 0.0
        %1139 = vmatpush2.msra.mxu0 0.0
        %1140 = vmatprep.subr.mxu0 0.0
        %1141 = vmatpush2.msra.mxu0 0.0
        %1142 = vmatprep.subr.mxu0 0.0
        %1143 = vmatpush2.msra.mxu0 0.0
        %1144 = vmatprep.subr.mxu0 0.0
        %1145 = vmatpush2.msra.mxu0 0.0
        %1146 = vmatprep.subr.mxu0 0.0
        %1147 = vmatpush2.msra.mxu0 0.0
        %1148 = vmatprep.mubr.f32.mxu0 0.0
        %1149 = vmatmul.mubr.f32.gmra.mxu0 %v1074
        %v1150 = vpop.f32.mrf.mxu0
        %v1151 = vadd.f32 0.0, %v1150
        %v1152 = vpop.f32.mrf.mxu0
        %1153 = vmatprep.mubr.f32.mxu0 0.0
        %1154 = vmatmul.mubr.f32.gmra.mxu0 %v1077
        %v1155 = vpop.f32.mrf.mxu0
        %v1156 = vadd.f32 0.0, %v1155
        %v1157 = vpop.f32.mrf.mxu0
        %1158 = vmatprep.mubr.f32.mxu0 0.0
        %1159 = vmatmul.mubr.f32.gmra.mxu0 %v1080
        %v1160 = vpop.f32.mrf.mxu0
        %v1161 = vadd.f32 0.0, %v1160
        %v1162 = vpop.f32.mrf.mxu0
        %1163 = vdwg.mxu0
        %1164 = vrot.lane.b32.xlu0 %v672, 112
        %v1165 = vpop.permute.xlu0 %1164
        %1166 = vrot.lane.b32.xlu0 %v675, 112
        %v1167 = vpop.permute.xlu0 %1166
        %1168 = vrot.lane.b32.xlu0 %v680, 112
        %v1169 = vpop.permute.xlu0 %1168
        %1170 = vrot.lane.b32.xlu0 %v672, 80
        %v1171 = vpop.permute.xlu0 %1170
        %1172 = vrot.lane.b32.xlu0 %v675, 80
        %v1173 = vpop.permute.xlu0 %1172
        %1174 = vrot.lane.b32.xlu0 %v680, 80
        %v1175 = vpop.permute.xlu0 %1174
        %v1176 = vsel %vm694, %v1165, 0
        %v1178 = vsel %vm694, %v1167, 0
        %v1180 = vsel %vm694, %v1169, 0
        %v1182 = vsel %vm694, %v1171, 0
        %v1184 = vsel %vm694, %v1173, 0
        %v1186 = vsel %vm694, %v1175, 0
        %1188 = vmatprep.subr.mxu0 0.0
        %1189 = vmatpush1.xpose.msra.mxu0 0.0
        %1190 = vmatprep.subr.mxu0 0.0
        %1191 = vmatpush1.xpose.msra.mxu0 0.0
        %1192 = vmatprep.subr.mxu0 0.0
        %1193 = vmatpush1.xpose.msra.mxu0 0.0
        %1194 = vmatprep.subr.mxu0 0.0
        %1195 = vmatpush1.xpose.msra.mxu0 0.0
        %1196 = vmatprep.subr.mxu0 0.0
        %1197 = vmatpush1.xpose.msra.mxu0 0.0
        %1198 = vmatprep.subr.mxu0 0.0
        %1199 = vmatpush1.xpose.msra.mxu0 0.0
        %1200 = vmatprep.subr.mxu0 0.0
        %1201 = vmatpush1.xpose.msra.mxu0 0.0
        %1202 = vmatprep.subr.mxu0 0.0
        %1203 = vmatpush1.xpose.msra.mxu0 0.0
        %1204 = vmatprep.subr.mxu0 0.0
        %1205 = vmatpush1.xpose.msra.mxu0 0.0
        %1206 = vmatprep.subr.mxu0 0.0
        %1207 = vmatpush1.xpose.msra.mxu0 0.0
        %1208 = vmatprep.subr.mxu0 0.0
        %1209 = vmatpush1.xpose.msra.mxu0 0.0
        %1210 = vmatprep.subr.mxu0 0.0
        %1211 = vmatpush1.xpose.msra.mxu0 0.0
        %1212 = vmatprep.subr.mxu0 0.0
        %1213 = vmatpush1.xpose.msra.mxu0 0.0
        %1214 = vmatprep.subr.mxu0 0.0
        %1215 = vmatpush1.xpose.msra.mxu0 %v1186
        %1216 = vmatprep.subr.mxu0 0.0
        %1217 = vmatpush1.xpose.msra.mxu0 %v1184
        %1218 = vmatprep.subr.mxu0 0.0
        %1219 = vmatpush1.xpose.msra.mxu0 %v1182
        %1220 = vmatprep.subr.mxu0 0.0
        %1221 = vmatpush2.xpose.msra.mxu0 0.0
        %1222 = vmatprep.subr.mxu0 0.0
        %1223 = vmatpush2.xpose.msra.mxu0 0.0
        %1224 = vmatprep.subr.mxu0 0.0
        %1225 = vmatpush2.xpose.msra.mxu0 0.0
        %1226 = vmatprep.subr.mxu0 0.0
        %1227 = vmatpush2.xpose.msra.mxu0 0.0
        %1228 = vmatprep.subr.mxu0 0.0
        %1229 = vmatpush2.xpose.msra.mxu0 0.0
        %1230 = vmatprep.subr.mxu0 0.0
        %1231 = vmatpush2.xpose.msra.mxu0 0.0
        %1232 = vmatprep.subr.mxu0 0.0
        %1233 = vmatpush2.xpose.msra.mxu0 0.0
        %1234 = vmatprep.subr.mxu0 0.0
        %1235 = vmatpush2.xpose.msra.mxu0 0.0
        %1236 = vmatprep.subr.mxu0 0.0
        %1237 = vmatpush2.xpose.msra.mxu0 0.0
        %1238 = vmatprep.subr.mxu0 0.0
        %1239 = vmatpush2.xpose.msra.mxu0 0.0
        %1240 = vmatprep.subr.mxu0 0.0
        %1241 = vmatpush2.xpose.msra.mxu0 0.0
        %1242 = vmatprep.subr.mxu0 0.0
        %1243 = vmatpush2.xpose.msra.mxu0 0.0
        %1244 = vmatprep.subr.mxu0 0.0
        %1245 = vmatpush2.xpose.msra.mxu0 0.0
        %1246 = vmatprep.subr.mxu0 0.0
        %1247 = vmatpush2.xpose.msra.mxu0 0.0
        %1248 = vmatprep.subr.mxu0 0.0
        %1249 = vmatpush2.xpose.msra.mxu0 0.0
        %1250 = vmatprep.subr.mxu0 0.0
        %1251 = vmatpush2.xpose.msra.mxu0 0.0
        %1252 = vmatprep.mubr.f32.mxu0 0.0
        %1253 = vmatmul.mubr.f32.gmra.mxu0 %v1176
        %v1254 = vpop.f32.mrf.mxu0
        %v1255 = vadd.f32 0.0, %v1254
        %v1256 = vpop.f32.mrf.mxu0
        %1257 = vmatprep.mubr.f32.mxu0 0.0
        %1258 = vmatmul.mubr.f32.gmra.mxu0 %v1178
        %v1259 = vpop.f32.mrf.mxu0
        %v1260 = vadd.f32 0.0, %v1259
        %v1261 = vpop.f32.mrf.mxu0
        %1262 = vmatprep.mubr.f32.mxu0 0.0
        %1263 = vmatmul.mubr.f32.gmra.mxu0 %v1180
        %v1264 = vpop.f32.mrf.mxu0
        %v1265 = vadd.f32 0.0, %v1264
        %v1266 = vpop.f32.mrf.mxu0
        %1267 = vdwg.mxu0
        %v1268 = vmul.f32 %v1255, 0.35355338
        %v1269 = vmul.f32 %v1260, 0.35355338
        %v1270 = vmul.f32 %v1265, 0.35355338
        %v1271 = vsel %vm790, %v1268, -inf
        %1272 = vmax.xlane.f32.xlu0 %v1271
        %v1273 = vpop.xlane.xlu0 %1272
        %v1274 = vsel %vm790, %v1269, -inf
        %1275 = vmax.xlane.f32.xlu0 %v1274
        %v1276 = vpop.xlane.xlu0 %1275
        %v1277 = vsel %vm797, %v1270, -inf
        %1278 = vmax.xlane.f32.xlu0 %v1277
        %v1279 = vpop.xlane.xlu0 %1278
        %v1280 = vsub.f32 %v1268, %v1273
        %v1281 = vsub.f32 %v1269, %v1276
        %v1282 = vsub.f32 %v1270, %v1279
        %v1283 = vmul.f32 %v1280, 1.442695
        %v1284 = vpow.pop %v1283
        %v1285 = vmul.f32 %v1281, 1.442695
        %v1286 = vpow.pop %v1285
        %v1287 = vmul.f32 %v1282, 1.442695
        %v1288 = vpow.pop %v1287
        %v1289 = vsel %vm790, %v1284, 0.0
        %1290 = vadd.xlane.f32.xlu0 %v1289
        %v1291 = vpop.xlane.xlu0 %1290
        %v1292 = vsel %vm790, %v1286, 0.0
        %1293 = vadd.xlane.f32.xlu0 %v1292
        %v1294 = vpop.xlane.xlu0 %1293
        %v1295 = vsel %vm797, %v1288, 0.0
        %1296 = vadd.xlane.f32.xlu0 %v1295
        %v1297 = vpop.xlane.xlu0 %1296
        %v1298 = vrcp.pop %v1291
        %v1299 = vrcp.pop %v1294
        %v1300 = vrcp.pop %v1297
        %v1301 = vmul.f32 %v1284, %v1298
        %v1302 = vmul.f32 %v1286, %v1299
        %v1303 = vmul.f32 %v1288, %v1300
        %1304 = vrot.lane.b32.xlu0 %v672, 48
        %v1305 = vpop.permute.xlu0 %1304
        %1306 = vrot.lane.b32.xlu0 %v675, 48
        %v1307 = vpop.permute.xlu0 %1306
        %1308 = vrot.lane.b32.xlu0 %v680, 48
        %v1309 = vpop.permute.xlu0 %1308
        %v1313 = vsel %vm790, %v1301, 0
        %v1316 = vsel %vm790, %v1302, 0
        %v1319 = vsel %vm790, %v1303, 0
        %v1321 = vsel %vm842, %v1309, 0
        %1323 = vmatprep.subr.mxu0 0.0
        %1324 = vmatpush1.msra.mxu0 0.0
        %1325 = vmatprep.subr.mxu0 0.0
        %1326 = vmatpush1.msra.mxu0 0.0
        %1327 = vmatprep.subr.mxu0 0.0
        %1328 = vmatpush1.msra.mxu0 0.0
        %1329 = vmatprep.subr.mxu0 0.0
        %1330 = vmatpush1.msra.mxu0 0.0
        %1331 = vmatprep.subr.mxu0 0.0
        %1332 = vmatpush1.msra.mxu0 0.0
        %1333 = vmatprep.subr.mxu0 0.0
        %1334 = vmatpush1.msra.mxu0 0.0
        %1335 = vmatprep.subr.mxu0 0.0
        %1336 = vmatpush1.msra.mxu0 0.0
        %1337 = vmatprep.subr.mxu0 0.0
        %1338 = vmatpush1.msra.mxu0 0.0
        %1339 = vmatprep.subr.mxu0 0.0
        %1340 = vmatpush1.msra.mxu0 0.0
        %1341 = vmatprep.subr.mxu0 0.0
        %1342 = vmatpush1.msra.mxu0 0.0
        %1343 = vmatprep.subr.mxu0 0.0
        %1344 = vmatpush1.msra.mxu0 0.0
        %1345 = vmatprep.subr.mxu0 0.0
        %1346 = vmatpush1.msra.mxu0 0.0
        %1347 = vmatprep.subr.mxu0 0.0
        %1348 = vmatpush1.msra.mxu0 0.0
        %1349 = vmatprep.subr.mxu0 0.0
        %1350 = vmatpush1.msra.mxu0 %v1321
        %1351 = vmatprep.subr.mxu0 0.0
        %1352 = vmatpush1.msra.mxu0 %v1307
        %1353 = vmatprep.subr.mxu0 0.0
        %1354 = vmatpush1.msra.mxu0 %v1305
        %1355 = vmatprep.subr.mxu0 0.0
        %1356 = vmatpush2.msra.mxu0 0.0
        %1357 = vmatprep.subr.mxu0 0.0
        %1358 = vmatpush2.msra.mxu0 0.0
        %1359 = vmatprep.subr.mxu0 0.0
        %1360 = vmatpush2.msra.mxu0 0.0
        %1361 = vmatprep.subr.mxu0 0.0
        %1362 = vmatpush2.msra.mxu0 0.0
        %1363 = vmatprep.subr.mxu0 0.0
        %1364 = vmatpush2.msra.mxu0 0.0
        %1365 = vmatprep.subr.mxu0 0.0
        %1366 = vmatpush2.msra.mxu0 0.0
        %1367 = vmatprep.subr.mxu0 0.0
        %1368 = vmatpush2.msra.mxu0 0.0
        %1369 = vmatprep.subr.mxu0 0.0
        %1370 = vmatpush2.msra.mxu0 0.0
        %1371 = vmatprep.subr.mxu0 0.0
        %1372 = vmatpush2.msra.mxu0 0.0
        %1373 = vmatprep.subr.mxu0 0.0
        %1374 = vmatpush2.msra.mxu0 0.0
        %1375 = vmatprep.subr.mxu0 0.0
        %1376 = vmatpush2.msra.mxu0 0.0
        %1377 = vmatprep.subr.mxu0 0.0
        %1378 = vmatpush2.msra.mxu0 0.0
        %1379 = vmatprep.subr.mxu0 0.0
        %1380 = vmatpush2.msra.mxu0 0.0
        %1381 = vmatprep.subr.mxu0 0.0
        %1382 = vmatpush2.msra.mxu0 0.0
        %1383 = vmatprep.subr.mxu0 0.0
        %1384 = vmatpush2.msra.mxu0 0.0
        %1385 = vmatprep.subr.mxu0 0.0
        %1386 = vmatpush2.msra.mxu0 0.0
        %1387 = vmatprep.mubr.f32.mxu0 0.0
        %1388 = vmatmul.mubr.f32.gmra.mxu0 %v1313
        %v1389 = vpop.f32.mrf.mxu0
        %v1390 = vadd.f32 0.0, %v1389
        %v1391 = vpop.f32.mrf.mxu0
        %1392 = vmatprep.mubr.f32.mxu0 0.0
        %1393 = vmatmul.mubr.f32.gmra.mxu0 %v1316
        %v1394 = vpop.f32.mrf.mxu0
        %v1395 = vadd.f32 0.0, %v1394
        %v1396 = vpop.f32.mrf.mxu0
        %1397 = vmatprep.mubr.f32.mxu0 0.0
        %1398 = vmatmul.mubr.f32.gmra.mxu0 %v1319
        %v1399 = vpop.f32.mrf.mxu0
        %v1400 = vadd.f32 0.0, %v1399
        %v1401 = vpop.f32.mrf.mxu0
        %1402 = vdwg.mxu0
        %1403 = vrot.lane.b32.xlu0 %v672, 104
        %v1404 = vpop.permute.xlu0 %1403
        %1405 = vrot.lane.b32.xlu0 %v675, 104
        %v1406 = vpop.permute.xlu0 %1405
        %1407 = vrot.lane.b32.xlu0 %v680, 104
        %v1408 = vpop.permute.xlu0 %1407
        %1409 = vrot.lane.b32.xlu0 %v672, 72
        %v1410 = vpop.permute.xlu0 %1409
        %1411 = vrot.lane.b32.xlu0 %v675, 72
        %v1412 = vpop.permute.xlu0 %1411
        %1413 = vrot.lane.b32.xlu0 %v680, 72
        %v1414 = vpop.permute.xlu0 %1413
        %v1415 = vsel %vm694, %v1404, 0
        %v1417 = vsel %vm694, %v1406, 0
        %v1419 = vsel %vm694, %v1408, 0
        %v1421 = vsel %vm694, %v1410, 0
        %v1423 = vsel %vm694, %v1412, 0
        %v1425 = vsel %vm694, %v1414, 0
        %1427 = vmatprep.subr.mxu0 0.0
        %1428 = vmatpush1.xpose.msra.mxu0 0.0
        %1429 = vmatprep.subr.mxu0 0.0
        %1430 = vmatpush1.xpose.msra.mxu0 0.0
        %1431 = vmatprep.subr.mxu0 0.0
        %1432 = vmatpush1.xpose.msra.mxu0 0.0
        %1433 = vmatprep.subr.mxu0 0.0
        %1434 = vmatpush1.xpose.msra.mxu0 0.0
        %1435 = vmatprep.subr.mxu0 0.0
        %1436 = vmatpush1.xpose.msra.mxu0 0.0
        %1437 = vmatprep.subr.mxu0 0.0
        %1438 = vmatpush1.xpose.msra.mxu0 0.0
        %1439 = vmatprep.subr.mxu0 0.0
        %1440 = vmatpush1.xpose.msra.mxu0 0.0
        %1441 = vmatprep.subr.mxu0 0.0
        %1442 = vmatpush1.xpose.msra.mxu0 0.0
        %1443 = vmatprep.subr.mxu0 0.0
        %1444 = vmatpush1.xpose.msra.mxu0 0.0
        %1445 = vmatprep.subr.mxu0 0.0
        %1446 = vmatpush1.xpose.msra.mxu0 0.0
        %1447 = vmatprep.subr.mxu0 0.0
        %1448 = vmatpush1.xpose.msra.mxu0 0.0
        %1449 = vmatprep.subr.mxu0 0.0
        %1450 = vmatpush1.xpose.msra.mxu0 0.0
        %1451 = vmatprep.subr.mxu0 0.0
        %1452 = vmatpush1.xpose.msra.mxu0 0.0
        %1453 = vmatprep.subr.mxu0 0.0
        %1454 = vmatpush1.xpose.msra.mxu0 %v1425
        %1455 = vmatprep.subr.mxu0 0.0
        %1456 = vmatpush1.xpose.msra.mxu0 %v1423
        %1457 = vmatprep.subr.mxu0 0.0
        %1458 = vmatpush1.xpose.msra.mxu0 %v1421
        %1459 = vmatprep.subr.mxu0 0.0
        %1460 = vmatpush2.xpose.msra.mxu0 0.0
        %1461 = vmatprep.subr.mxu0 0.0
        %1462 = vmatpush2.xpose.msra.mxu0 0.0
        %1463 = vmatprep.subr.mxu0 0.0
        %1464 = vmatpush2.xpose.msra.mxu0 0.0
        %1465 = vmatprep.subr.mxu0 0.0
        %1466 = vmatpush2.xpose.msra.mxu0 0.0
        %1467 = vmatprep.subr.mxu0 0.0
        %1468 = vmatpush2.xpose.msra.mxu0 0.0
        %1469 = vmatprep.subr.mxu0 0.0
        %1470 = vmatpush2.xpose.msra.mxu0 0.0
        %1471 = vmatprep.subr.mxu0 0.0
        %1472 = vmatpush2.xpose.msra.mxu0 0.0
        %1473 = vmatprep.subr.mxu0 0.0
        %1474 = vmatpush2.xpose.msra.mxu0 0.0
        %1475 = vmatprep.subr.mxu0 0.0
        %1476 = vmatpush2.xpose.msra.mxu0 0.0
        %1477 = vmatprep.subr.mxu0 0.0
        %1478 = vmatpush2.xpose.msra.mxu0 0.0
        %1479 = vmatprep.subr.mxu0 0.0
        %1480 = vmatpush2.xpose.msra.mxu0 0.0
        %1481 = vmatprep.subr.mxu0 0.0
        %1482 = vmatpush2.xpose.msra.mxu0 0.0
        %1483 = vmatprep.subr.mxu0 0.0
        %1484 = vmatpush2.xpose.msra.mxu0 0.0
        %1485 = vmatprep.subr.mxu0 0.0
        %1486 = vmatpush2.xpose.msra.mxu0 0.0
        %1487 = vmatprep.subr.mxu0 0.0
        %1488 = vmatpush2.xpose.msra.mxu0 0.0
        %1489 = vmatprep.subr.mxu0 0.0
        %1490 = vmatpush2.xpose.msra.mxu0 0.0
        %1491 = vmatprep.mubr.f32.mxu0 0.0
        %1492 = vmatmul.mubr.f32.gmra.mxu0 %v1415
        %v1493 = vpop.f32.mrf.mxu0
        %v1494 = vadd.f32 0.0, %v1493
        %v1495 = vpop.f32.mrf.mxu0
        %1496 = vmatprep.mubr.f32.mxu0 0.0
        %1497 = vmatmul.mubr.f32.gmra.mxu0 %v1417
        %v1498 = vpop.f32.mrf.mxu0
        %v1499 = vadd.f32 0.0, %v1498
        %v1500 = vpop.f32.mrf.mxu0
        %1501 = vmatprep.mubr.f32.mxu0 0.0
        %1502 = vmatmul.mubr.f32.gmra.mxu0 %v1419
        %v1503 = vpop.f32.mrf.mxu0
        %v1504 = vadd.f32 0.0, %v1503
        %v1505 = vpop.f32.mrf.mxu0
        %1506 = vdwg.mxu0
        %v1507 = vmul.f32 %v1494, 0.35355338
        %v1508 = vmul.f32 %v1499, 0.35355338
        %v1509 = vmul.f32 %v1504, 0.35355338
        %v1510 = vsel %vm790, %v1507, -inf
        %1511 = vmax.xlane.f32.xlu0 %v1510
        %v1512 = vpop.xlane.xlu0 %1511
        %v1513 = vsel %vm790, %v1508, -inf
        %1514 = vmax.xlane.f32.xlu0 %v1513
        %v1515 = vpop.xlane.xlu0 %1514
        %v1516 = vsel %vm797, %v1509, -inf
        %1517 = vmax.xlane.f32.xlu0 %v1516
        %v1518 = vpop.xlane.xlu0 %1517
        %v1519 = vsub.f32 %v1507, %v1512
        %v1520 = vsub.f32 %v1508, %v1515
        %v1521 = vsub.f32 %v1509, %v1518
        %v1522 = vmul.f32 %v1519, 1.442695
        %v1523 = vpow.pop %v1522
        %v1524 = vmul.f32 %v1520, 1.442695
        %v1525 = vpow.pop %v1524
        %v1526 = vmul.f32 %v1521, 1.442695
        %v1527 = vpow.pop %v1526
        %v1528 = vsel %vm790, %v1523, 0.0
        %1529 = vadd.xlane.f32.xlu0 %v1528
        %v1530 = vpop.xlane.xlu0 %1529
        %v1531 = vsel %vm790, %v1525, 0.0
        %1532 = vadd.xlane.f32.xlu0 %v1531
        %v1533 = vpop.xlane.xlu0 %1532
        %v1534 = vsel %vm797, %v1527, 0.0
        %1535 = vadd.xlane.f32.xlu0 %v1534
        %v1536 = vpop.xlane.xlu0 %1535
        %v1537 = vrcp.pop %v1530
        %v1538 = vrcp.pop %v1533
        %v1539 = vrcp.pop %v1536
        %v1540 = vmul.f32 %v1523, %v1537
        %v1541 = vmul.f32 %v1525, %v1538
        %v1542 = vmul.f32 %v1527, %v1539
        %1543 = vrot.lane.b32.xlu0 %v672, 40
        %v1544 = vpop.permute.xlu0 %1543
        %1545 = vrot.lane.b32.xlu0 %v675, 40
        %v1546 = vpop.permute.xlu0 %1545
        %1547 = vrot.lane.b32.xlu0 %v680, 40
        %v1548 = vpop.permute.xlu0 %1547
        %v1552 = vsel %vm790, %v1540, 0
        %v1555 = vsel %vm790, %v1541, 0
        %v1558 = vsel %vm790, %v1542, 0
        %v1560 = vsel %vm842, %v1548, 0
        %1562 = vmatprep.subr.mxu0 0.0
        %1563 = vmatpush1.msra.mxu0 0.0
        %1564 = vmatprep.subr.mxu0 0.0
        %1565 = vmatpush1.msra.mxu0 0.0
        %1566 = vmatprep.subr.mxu0 0.0
        %1567 = vmatpush1.msra.mxu0 0.0
        %1568 = vmatprep.subr.mxu0 0.0
        %1569 = vmatpush1.msra.mxu0 0.0
        %1570 = vmatprep.subr.mxu0 0.0
        %1571 = vmatpush1.msra.mxu0 0.0
        %1572 = vmatprep.subr.mxu0 0.0
        %1573 = vmatpush1.msra.mxu0 0.0
        %1574 = vmatprep.subr.mxu0 0.0
        %1575 = vmatpush1.msra.mxu0 0.0
        %1576 = vmatprep.subr.mxu0 0.0
        %1577 = vmatpush1.msra.mxu0 0.0
        %1578 = vmatprep.subr.mxu0 0.0
        %1579 = vmatpush1.msra.mxu0 0.0
        %1580 = vmatprep.subr.mxu0 0.0
        %1581 = vmatpush1.msra.mxu0 0.0
        %1582 = vmatprep.subr.mxu0 0.0
        %1583 = vmatpush1.msra.mxu0 0.0
        %1584 = vmatprep.subr.mxu0 0.0
        %1585 = vmatpush1.msra.mxu0 0.0
        %1586 = vmatprep.subr.mxu0 0.0
        %1587 = vmatpush1.msra.mxu0 0.0
        %1588 = vmatprep.subr.mxu0 0.0
        %1589 = vmatpush1.msra.mxu0 %v1560
        %1590 = vmatprep.subr.mxu0 0.0
        %1591 = vmatpush1.msra.mxu0 %v1546
        %1592 = vmatprep.subr.mxu0 0.0
        %1593 = vmatpush1.msra.mxu0 %v1544
        %1594 = vmatprep.subr.mxu0 0.0
        %1595 = vmatpush2.msra.mxu0 0.0
        %1596 = vmatprep.subr.mxu0 0.0
        %1597 = vmatpush2.msra.mxu0 0.0
        %1598 = vmatprep.subr.mxu0 0.0
        %1599 = vmatpush2.msra.mxu0 0.0
        %1600 = vmatprep.subr.mxu0 0.0
        %1601 = vmatpush2.msra.mxu0 0.0
        %1602 = vmatprep.subr.mxu0 0.0
        %1603 = vmatpush2.msra.mxu0 0.0
        %1604 = vmatprep.subr.mxu0 0.0
        %1605 = vmatpush2.msra.mxu0 0.0
        %1606 = vmatprep.subr.mxu0 0.0
        %1607 = vmatpush2.msra.mxu0 0.0
        %1608 = vmatprep.subr.mxu0 0.0
        %1609 = vmatpush2.msra.mxu0 0.0
        %1610 = vmatprep.subr.mxu0 0.0
        %1611 = vmatpush2.msra.mxu0 0.0
        %1612 = vmatprep.subr.mxu0 0.0
        %1613 = vmatpush2.msra.mxu0 0.0
        %1614 = vmatprep.subr.mxu0 0.0
        %1615 = vmatpush2.msra.mxu0 0.0
        %1616 = vmatprep.subr.mxu0 0.0
        %1617 = vmatpush2.msra.mxu0 0.0
        %1618 = vmatprep.subr.mxu0 0.0
        %1619 = vmatpush2.msra.mxu0 0.0
        %1620 = vmatprep.subr.mxu0 0.0
        %1621 = vmatpush2.msra.mxu0 0.0
        %1622 = vmatprep.subr.mxu0 0.0
        %1623 = vmatpush2.msra.mxu0 0.0
        %1624 = vmatprep.subr.mxu0 0.0
        %1625 = vmatpush2.msra.mxu0 0.0
        %1626 = vmatprep.mubr.f32.mxu0 0.0
        %1627 = vmatmul.mubr.f32.gmra.mxu0 %v1552
        %v1628 = vpop.f32.mrf.mxu0
        %v1629 = vadd.f32 0.0, %v1628
        %v1630 = vpop.f32.mrf.mxu0
        %1631 = vmatprep.mubr.f32.mxu0 0.0
        %1632 = vmatmul.mubr.f32.gmra.mxu0 %v1555
        %v1633 = vpop.f32.mrf.mxu0
        %v1634 = vadd.f32 0.0, %v1633
        %v1635 = vpop.f32.mrf.mxu0
        %1636 = vmatprep.mubr.f32.mxu0 0.0
        %1637 = vmatmul.mubr.f32.gmra.mxu0 %v1558
        %v1638 = vpop.f32.mrf.mxu0
        %v1639 = vadd.f32 0.0, %v1638
        %v1640 = vpop.f32.mrf.mxu0
        %1641 = vdwg.mxu0
        %1645 = vrot.lane.b32.xlu0 %v1151, 8
        %v1646 = vpop.permute.xlu0 %1645
        %1647 = vrot.lane.b32.xlu0 %v1156, 8
        %v1648 = vpop.permute.xlu0 %1647
        %1649 = vrot.lane.b32.xlu0 %v1161, 8
        %v1650 = vpop.permute.xlu0 %1649
        %1657 = vrot.lane.b32.xlu0 %v1390, 16
        %v1658 = vpop.permute.xlu0 %1657
        %1659 = vrot.lane.b32.xlu0 %v1395, 16
        %v1660 = vpop.permute.xlu0 %1659
        %1661 = vrot.lane.b32.xlu0 %v1400, 16
        %v1662 = vpop.permute.xlu0 %1661
        %1669 = vrot.lane.b32.xlu0 %v1629, 24
        %v1670 = vpop.permute.xlu0 %1669
        %1671 = vrot.lane.b32.xlu0 %v1634, 24
        %v1672 = vpop.permute.xlu0 %1671
        %1673 = vrot.lane.b32.xlu0 %v1639, 24
        %v1674 = vpop.permute.xlu0 %1673
        %v1678 = vsel %vm694, %v912, %v1646
        %v1679 = vsel %vm694, %v917, %v1648
        %v1680 = vsel %vm694, %v922, %v1650
        %vm1681 = vcmask 130048
        %v1682 = vsel %vm1681, %v1678, %v1658
        %v1683 = vsel %vm1681, %v1679, %v1660
        %v1684 = vsel %vm1681, %v1680, %v1662
        %vm1685 = vcmask 195584
        %v1686 = vsel %vm1685, %v1682, %v1670
        %v1687 = vsel %vm1685, %v1683, %v1672
        %v1688 = vsel %vm1685, %v1684, %v1674
        %v1689 = vld [vmem:[%s6] sm:$0xf]
        %v1690 = vld [vmem:[%s6 + $0x4] sm:$0xf]
        %v1691 = vld [vmem:[%s6 + $0x8] sm:$0xf]
        %v1692 = vld [vmem:[%s6 + $0xc] sm:$0xf]
        %v1693 = vpack.c.bf16 %v1687, %v1686
        %v1694 = vpack.c.bf16 %v1688, %v1688
        %v1699 = vunpack.c.l.b16 %v1689
        %v1700 = vunpack.c.l.b16 %v1690
        %v1701 = vunpack.c.l.b16 %v1691
        %v1702 = vunpack.c.l.b16 %v1692
        %v1703 = vpack.c.b16 %v1700, %v1699
        %v1704 = vpack.c.b16 %v1702, %v1701
        %v1708 = vsel %vm550, %v1693, 0
        %v1711 = vsel %vm550, %v1694, 0
        %1713 = vmatprep.subr.bf16.mxu0 0
        %1714 = vmatpush1.bf16.msra.mxu0 0
        %1715 = vmatprep.subr.bf16.mxu0 0
        %1716 = vmatpush1.bf16.msra.mxu0 0
        %1717 = vmatprep.subr.bf16.mxu0 0
        %1718 = vmatpush1.bf16.msra.mxu0 0
        %1719 = vmatprep.subr.bf16.mxu0 0
        %1720 = vmatpush1.bf16.msra.mxu0 0
        %1721 = vmatprep.subr.bf16.mxu0 0
        %1722 = vmatpush1.bf16.msra.mxu0 0
        %1723 = vmatprep.subr.bf16.mxu0 0
        %1724 = vmatpush1.bf16.msra.mxu0 0
        %1725 = vmatprep.subr.bf16.mxu0 0
        %1726 = vmatpush1.bf16.msra.mxu0 %v1704
        %1727 = vmatprep.subr.bf16.mxu0 0
        %1728 = vmatpush1.bf16.msra.mxu0 %v1703
        %1729 = vmatprep.subr.bf16.mxu0 0
        %1730 = vmatpush2.bf16.msra.mxu0 0
        %1731 = vmatprep.subr.bf16.mxu0 0
        %1732 = vmatpush2.bf16.msra.mxu0 0
        %1733 = vmatprep.subr.bf16.mxu0 0
        %1734 = vmatpush2.bf16.msra.mxu0 0
        %1735 = vmatprep.subr.bf16.mxu0 0
        %1736 = vmatpush2.bf16.msra.mxu0 0
        %1737 = vmatprep.subr.bf16.mxu0 0
        %1738 = vmatpush2.bf16.msra.mxu0 0
        %1739 = vmatprep.subr.bf16.mxu0 0
        %1740 = vmatpush2.bf16.msra.mxu0 0
        %1741 = vmatprep.subr.bf16.mxu0 0
        %1742 = vmatpush2.bf16.msra.mxu0 0
        %1743 = vmatprep.subr.bf16.mxu0 0
        %1744 = vmatpush2.bf16.msra.mxu0 0
        %1745 = vmatprep.mubr.bf16.mxu0 0
        %1746 = vmatmul.mubr.bf16.gmra.mxu0 %v1708
        %v1747 = vpop.f32.mrf.mxu0
        %v1748 = vadd.f32 0.0, %v1747
        %v1749 = vpop.f32.mrf.mxu0
        %v1750 = vpop.f32.mrf.mxu0
        %v1751 = vadd.f32 0.0, %v1750
        %v1752 = vpop.f32.mrf.mxu0
        %1753 = vmatprep.mubr.bf16.mxu0 0
        %1754 = vmatmul.mubr.bf16.gmra.mxu0 %v1711
        %v1755 = vpop.f32.mrf.mxu0
        %v1756 = vadd.f32 0.0, %v1755
        %v1757 = vpop.f32.mrf.mxu0
        %v1758 = vpop.f32.mrf.mxu0
        %v1759 = vpop.f32.mrf.mxu0
        %1760 = vdwg.mxu0
        %v1761 = vadd.f32 %v546, %v1748
        %v1762 = vadd.f32 %v547, %v1751
        %v1763 = vadd.f32 %v548, %v1756
        %v1764 = vlaneseq
        %v1765 = vshrl.u32 %v1764, 7
        %v1766 = vsub.s32 2, %v1765
        %v1767 = vrot.slane %v549, %v1766
        %v1768 = vadd.f32 %v1761, %v1767
        %v1769 = vadd.f32 %v1762, %v1767
        %v1770 = vadd.f32 %v1763, %v1767
        %v1771 = vsel %vm550, %v1768, 0.0
        %1772 = vadd.xlane.f32.xlu0 %v1771
        %v1773 = vpop.xlane.xlu0 %1772
        %v1774 = vsel %vm550, %v1769, 0.0
        %1775 = vadd.xlane.f32.xlu0 %v1774
        %v1776 = vpop.xlane.xlu0 %1775
        %v1777 = vsel %vm557, %v1770, 0.0
        %1778 = vadd.xlane.f32.xlu0 %v1777
        %v1779 = vpop.xlane.xlu0 %1778
        %v1780 = vmul.f32 %v1773, %v561
        %v1781 = vmul.f32 %v1776, %v561
        %v1782 = vmul.f32 %v1779, %v561
        %v1783 = vsub.f32 %v1768, %v1780
        %v1784 = vsub.f32 %v1769, %v1781
        %v1785 = vsub.f32 %v1770, %v1782
        %v1786 = vmul.f32 %v1783, %v1783
        %v1787 = vmul.f32 %v1784, %v1784
        %v1788 = vmul.f32 %v1785, %v1785
        %v1789 = vsel %vm550, %v1786, 0.0
        %1790 = vadd.xlane.f32.xlu0 %v1789
        %v1791 = vpop.xlane.xlu0 %1790
        %v1792 = vsel %vm550, %v1787, 0.0
        %1793 = vadd.xlane.f32.xlu0 %v1792
        %v1794 = vpop.xlane.xlu0 %1793
        %v1795 = vsel %vm557, %v1788, 0.0
        %1796 = vadd.xlane.f32.xlu0 %v1795
        %v1797 = vpop.xlane.xlu0 %1796
        %v1798 = vmul.f32 %v1791, %v561
        %v1799 = vmul.f32 %v1794, %v561
        %v1800 = vmul.f32 %v1797, %v561
        %v1801 = vadd.f32 %v1798, 1e-05
        %v1802 = vadd.f32 %v1799, 1e-05
        %v1803 = vadd.f32 %v1800, 1e-05
        %v1804 = vrsqrt.pop %v1801
        %v1805 = vrsqrt.pop %v1802
        %v1806 = vrsqrt.pop %v1803
        %v1807 = vmul.f32 %v1783, %v1804
        %v1808 = vmul.f32 %v1784, %v1805
        %v1809 = vmul.f32 %v1785, %v1806
        %v1810 = vlaneseq
        %v1811 = vshrl.u32 %v1810, 7
        %v1812 = vsub.s32 3, %v1811
        %v1813 = vrot.slane %v549, %v1812
        %v1814 = vmul.f32 %v1807, %v1813
        %v1815 = vmul.f32 %v1808, %v1813
        %v1816 = vmul.f32 %v1809, %v1813
        %v1817 = vlaneseq
        %v1818 = vshrl.u32 %v1817, 7
        %v1819 = vsub.s32 4, %v1818
        %v1820 = vrot.slane %v549, %v1819
        %v1821 = vadd.f32 %v1814, %v1820
        %v1822 = vadd.f32 %v1815, %v1820
        %v1823 = vadd.f32 %v1816, %v1820
        %v1824 = vld [vmem:[%s7] sm:$0xf]
        %v1825 = vld [vmem:[%s7 + $0x4] sm:$0xf]
        %v1826 = vld [vmem:[%s7 + $0x8] sm:$0xf]
        %v1827 = vld [vmem:[%s7 + $0xc] sm:$0xf]
        %v1828 = vpack.c.bf16 %v1822, %v1821
        %v1829 = vpack.c.bf16 %v1823, %v1823
        %v1830 = vld [vmem:[%s8] sm:$0x1]
        %v1832 = vlaneseq
        %v1833 = vshrl.u32 %v1832, 7
        %v1834 = vsub.s32 0, %v1833
        %v1835 = vrot.slane %v1830, %v1834
        %v1841 = vunpack.c.l.b16 %v1824
        %v1842 = vunpack.c.l.b16 %v1825
        %v1843 = vunpack.c.l.b16 %v1826
        %v1844 = vunpack.c.l.b16 %v1827
        %v1845 = vpack.c.b16 %v1842, %v1841
        %v1846 = vpack.c.b16 %v1844, %v1843
        %v1850 = vsel %vm550, %v1828, 0
        %v1853 = vsel %vm550, %v1829, 0
        %1855 = vmatprep.subr.bf16.mxu0 0
        %1856 = vmatpush1.bf16.msra.mxu0 0
        %1857 = vmatprep.subr.bf16.mxu0 0
        %1858 = vmatpush1.bf16.msra.mxu0 0
        %1859 = vmatprep.subr.bf16.mxu0 0
        %1860 = vmatpush1.bf16.msra.mxu0 0
        %1861 = vmatprep.subr.bf16.mxu0 0
        %1862 = vmatpush1.bf16.msra.mxu0 0
        %1863 = vmatprep.subr.bf16.mxu0 0
        %1864 = vmatpush1.bf16.msra.mxu0 0
        %1865 = vmatprep.subr.bf16.mxu0 0
        %1866 = vmatpush1.bf16.msra.mxu0 0
        %1867 = vmatprep.subr.bf16.mxu0 0
        %1868 = vmatpush1.bf16.msra.mxu0 %v1846
        %1869 = vmatprep.subr.bf16.mxu0 0
        %1870 = vmatpush1.bf16.msra.mxu0 %v1845
        %1871 = vmatprep.subr.bf16.mxu0 0
        %1872 = vmatpush2.bf16.msra.mxu0 0
        %1873 = vmatprep.subr.bf16.mxu0 0
        %1874 = vmatpush2.bf16.msra.mxu0 0
        %1875 = vmatprep.subr.bf16.mxu0 0
        %1876 = vmatpush2.bf16.msra.mxu0 0
        %1877 = vmatprep.subr.bf16.mxu0 0
        %1878 = vmatpush2.bf16.msra.mxu0 0
        %1879 = vmatprep.subr.bf16.mxu0 0
        %1880 = vmatpush2.bf16.msra.mxu0 0
        %1881 = vmatprep.subr.bf16.mxu0 0
        %1882 = vmatpush2.bf16.msra.mxu0 0
        %1883 = vmatprep.subr.bf16.mxu0 0
        %1884 = vmatpush2.bf16.msra.mxu0 0
        %1885 = vmatprep.subr.bf16.mxu0 0
        %1886 = vmatpush2.bf16.msra.mxu0 0
        %1887 = vmatprep.mubr.bf16.mxu0 0
        %1888 = vmatmul.mubr.bf16.gmra.mxu0 %v1850
        %v1889 = vpop.f32.mrf.mxu0
        %v1890 = vadd.f32 %v1835, %v1889
        %v1891 = vpop.f32.mrf.mxu0
        %v1892 = vpop.f32.mrf.mxu0
        %v1893 = vadd.f32 %v1835, %v1892
        %v1894 = vpop.f32.mrf.mxu0
        %1895 = vmatprep.mubr.bf16.mxu0 0
        %1896 = vmatmul.mubr.bf16.gmra.mxu0 %v1853
        %v1897 = vpop.f32.mrf.mxu0
        %v1898 = vadd.f32 %v1835, %v1897
        %v1899 = vpop.f32.mrf.mxu0
        %v1900 = vpop.f32.mrf.mxu0
        %v1901 = vpop.f32.mrf.mxu0
        %1902 = vdwg.mxu0
        %v1903 = vmul.f32 %v1890, 0.5
        %v1904 = vmul.f32 %v1893, 0.5
        %v1905 = vmul.f32 %v1898, 0.5
        %v1906 = vmul.f32 %v1890, 0.70710677
        %v1907 = vmul.f32 %v1893, 0.70710677
        %v1908 = vmul.f32 %v1898, 0.70710677
        %v1909 = vand.u32 2147483647, %v1906
        %v1910 = vand.u32 2147483647, %v1907
        %v1911 = vand.u32 2147483647, %v1908
        %v1912 = vmul.f32 %v1909, 0.3275911
        %v1913 = vmul.f32 %v1910, 0.3275911
        %v1914 = vmul.f32 %v1911, 0.3275911
        %v1915 = vadd.f32 %v1912, 1.0
        %v1916 = vadd.f32 %v1913, 1.0
        %v1917 = vadd.f32 %v1914, 1.0
        %v1918 = vrcp.pop %v1915
        %v1919 = vmul.f32 1.0, %v1918
        %v1920 = vrcp.pop %v1916
        %v1921 = vmul.f32 1.0, %v1920
        %v1922 = vrcp.pop %v1917
        %v1923 = vmul.f32 1.0, %v1922
        %v1924 = vmul.f32 %v1919, 1.0614054
        %v1925 = vmul.f32 %v1921, 1.0614054
        %v1926 = vmul.f32 %v1923, 1.0614054
        %v1927 = vadd.f32 %v1924, -1.4531521
        %v1928 = vadd.f32 %v1925, -1.4531521
        %v1929 = vadd.f32 %v1926, -1.4531521
        %v1930 = vmul.f32 %v1927, %v1919
        %v1931 = vmul.f32 %v1928, %v1921
        %v1932 = vmul.f32 %v1929, %v1923
        %v1933 = vadd.f32 %v1930, 1.4214138
        %v1934 = vadd.f32 %v1931, 1.4214138
        %v1935 = vadd.f32 %v1932, 1.4214138
        %v1936 = vmul.f32 %v1933, %v1919
        %v1937 = vmul.f32 %v1934, %v1921
        %v1938 = vmul.f32 %v1935, %v1923
        %v1939 = vadd.f32 %v1936, -0.28449672
        %v1940 = vadd.f32 %v1937, -0.28449672
        %v1941 = vadd.f32 %v1938, -0.28449672
        %v1942 = vmul.f32 %v1939, %v1919
        %v1943 = vmul.f32 %v1940, %v1921
        %v1944 = vmul.f32 %v1941, %v1923
        %v1945 = vadd.f32 %v1942, 0.2548296
        %v1946 = vadd.f32 %v1943, 0.2548296
        %v1947 = vadd.f32 %v1944, 0.2548296
        %v1948 = vmul.f32 %v1945, %v1919
        %v1949 = vmul.f32 %v1946, %v1921
        %v1950 = vmul.f32 %v1947, %v1923
        %v1951 = vsub.f32 0.0, %v1909
        %v1952 = vsub.f32 0.0, %v1910
        %v1953 = vsub.f32 0.0, %v1911
        %v1954 = vmul.f32 %v1951, %v1909
        %v1955 = vmul.f32 %v1952, %v1910
        %v1956 = vmul.f32 %v1953, %v1911
        %v1957 = vmul.f32 %v1954, 1.442695
        %v1958 = vpow.pop %v1957
        %v1959 = vmul.f32 %v1955, 1.442695
        %v1960 = vpow.pop %v1959
        %v1961 = vmul.f32 %v1956, 1.442695
        %v1962 = vpow.pop %v1961
        %v1963 = vmul.f32 %v1948, %v1958
        %v1964 = vmul.f32 %v1949, %v1960
        %v1965 = vmul.f32 %v1950, %v1962
        %v1966 = vsub.f32 1.0, %v1963
        %v1967 = vsub.f32 1.0, %v1964
        %v1968 = vsub.f32 1.0, %v1965
        %vm1969 = vcmp.ge.f32.partialorder %v1906, 0.0
        %vm1970 = vcmp.ge.f32.partialorder %v1907, 0.0
        %vm1971 = vcmp.ge.f32.partialorder %v1908, 0.0
        %v1972 = vsub.f32 0.0, %v1966
        %v1973 = vsub.f32 0.0, %v1967
        %v1974 = vsub.f32 0.0, %v1968
        %v1975 = vsel %vm1969, %v1966, %v1972
        %v1976 = vsel %vm1970, %v1967, %v1973
        %v1977 = vsel %vm1971, %v1968, %v1974
        %v1978 = vadd.f32 %v1975, 1.0
        %v1979 = vadd.f32 %v1976, 1.0
        %v1980 = vadd.f32 %v1977, 1.0
        %v1981 = vmul.f32 %v1903, %v1978
        %v1982 = vmul.f32 %v1904, %v1979
        %v1983 = vmul.f32 %v1905, %v1980
        %v1984 = vld [vmem:[%s9] sm:$0xf]
        %v1985 = vld [vmem:[%s9 + $0x4] sm:$0xf]
        %v1986 = vld [vmem:[%s9 + $0x8] sm:$0xf]
        %v1987 = vld [vmem:[%s9 + $0xc] sm:$0xf]
        %v1988 = vld [vmem:[%s9 + $0x10] sm:$0xf]
        %v1989 = vld [vmem:[%s9 + $0x14] sm:$0xf]
        %v1990 = vld [vmem:[%s9 + $0x18] sm:$0xf]
        %v1991 = vld [vmem:[%s9 + $0x1c] sm:$0xf]
        %v1992 = vld [vmem:[%s9 + $0x20] sm:$0xf]
        %v1993 = vld [vmem:[%s9 + $0x24] sm:$0xf]
        %v1994 = vld [vmem:[%s9 + $0x28] sm:$0xf]
        %v1995 = vld [vmem:[%s9 + $0x2c] sm:$0xf]
        %v1996 = vld [vmem:[%s9 + $0x30] sm:$0xf]
        %v1997 = vld [vmem:[%s9 + $0x34] sm:$0xf]
        %v1998 = vld [vmem:[%s9 + $0x38] sm:$0xf]
        %v1999 = vld [vmem:[%s9 + $0x3c] sm:$0xf]
        %v2000 = vpack.c.bf16 %v1982, %v1981
        %v2001 = vpack.c.bf16 %v1983, %v1983
        %v2018 = vunpack.c.l.b16 %v1984
        %v2019 = vunpack.c.l.b16 %v1985
        %v2020 = vunpack.c.l.b16 %v1986
        %v2021 = vunpack.c.l.b16 %v1987
        %v2022 = vunpack.c.l.b16 %v1988
        %v2023 = vunpack.c.l.b16 %v1989
        %v2024 = vunpack.c.l.b16 %v1990
        %v2025 = vunpack.c.l.b16 %v1991
        %v2026 = vunpack.c.l.b16 %v1992
        %v2027 = vunpack.c.l.b16 %v1993
        %v2028 = vunpack.c.l.b16 %v1994
        %v2029 = vunpack.c.l.b16 %v1995
        %v2030 = vunpack.c.l.b16 %v1996
        %v2031 = vunpack.c.l.b16 %v1997
        %v2032 = vunpack.c.l.b16 %v1998
        %v2033 = vunpack.c.l.b16 %v1999
        %v2034 = vpack.c.b16 %v2019, %v2018
        %v2035 = vpack.c.b16 %v2021, %v2020
        %v2036 = vpack.c.b16 %v2023, %v2022
        %v2037 = vpack.c.b16 %v2025, %v2024
        %v2038 = vpack.c.b16 %v2027, %v2026
        %v2039 = vpack.c.b16 %v2029, %v2028
        %v2040 = vpack.c.b16 %v2031, %v2030
        %v2041 = vpack.c.b16 %v2033, %v2032
        %2050 = vmatprep.subr.bf16.mxu0 0
        %2051 = vmatpush1.bf16.msra.mxu0 %v2041
        %2052 = vmatprep.subr.bf16.mxu0 0
        %2053 = vmatpush1.bf16.msra.mxu0 %v2040
        %2054 = vmatprep.subr.bf16.mxu0 0
        %2055 = vmatpush1.bf16.msra.mxu0 %v2039
        %2056 = vmatprep.subr.bf16.mxu0 0
        %2057 = vmatpush1.bf16.msra.mxu0 %v2038
        %2058 = vmatprep.subr.bf16.mxu0 0
        %2059 = vmatpush1.bf16.msra.mxu0 %v2037
        %2060 = vmatprep.subr.bf16.mxu0 0
        %2061 = vmatpush1.bf16.msra.mxu0 %v2036
        %2062 = vmatprep.subr.bf16.mxu0 0
        %2063 = vmatpush1.bf16.msra.mxu0 %v2035
        %2064 = vmatprep.subr.bf16.mxu0 0
        %2065 = vmatpush1.bf16.msra.mxu0 %v2034
        %2066 = vmatprep.subr.bf16.mxu0 0
        %2067 = vmatpush2.bf16.msra.mxu0 0
        %2068 = vmatprep.subr.bf16.mxu0 0
        %2069 = vmatpush2.bf16.msra.mxu0 0
        %2070 = vmatprep.subr.bf16.mxu0 0
        %2071 = vmatpush2.bf16.msra.mxu0 0
        %2072 = vmatprep.subr.bf16.mxu0 0
        %2073 = vmatpush2.bf16.msra.mxu0 0
        %2074 = vmatprep.subr.bf16.mxu0 0
        %2075 = vmatpush2.bf16.msra.mxu0 0
        %2076 = vmatprep.subr.bf16.mxu0 0
        %2077 = vmatpush2.bf16.msra.mxu0 0
        %2078 = vmatprep.subr.bf16.mxu0 0
        %2079 = vmatpush2.bf16.msra.mxu0 0
        %2080 = vmatprep.subr.bf16.mxu0 0
        %2081 = vmatpush2.bf16.msra.mxu0 0
        %2082 = vmatprep.mubr.bf16.mxu0 0
        %2083 = vmatmul.mubr.bf16.gmra.mxu0 %v2000
        %v2084 = vpop.f32.mrf.mxu0
        %v2085 = vadd.f32 0.0, %v2084
        %v2086 = vpop.f32.mrf.mxu0
        %v2087 = vpop.f32.mrf.mxu0
        %v2088 = vadd.f32 0.0, %v2087
        %v2089 = vpop.f32.mrf.mxu0
        %2090 = vmatprep.mubr.bf16.mxu0 0
        %2091 = vmatmul.mubr.bf16.gmra.mxu0 %v2001
        %v2092 = vpop.f32.mrf.mxu0
        %v2093 = vadd.f32 0.0, %v2092
        %v2094 = vpop.f32.mrf.mxu0
        %v2095 = vpop.f32.mrf.mxu0
        %v2096 = vpop.f32.mrf.mxu0
        %2097 = vdwg.mxu0
        %v2098 = vadd.f32 %v1768, %v2085
        %v2099 = vadd.f32 %v1769, %v2088
        %v2100 = vadd.f32 %v1770, %v2093
        %v2101 = vlaneseq
        %v2102 = vshrl.u32 %v2101, 7
        %v2103 = vsub.s32 5, %v2102
        %v2104 = vrot.slane %v549, %v2103
        %v2105 = vadd.f32 %v2098, %v2104
        %v2106 = vadd.f32 %v2099, %v2104
        %v2107 = vadd.f32 %v2100, %v2104
        %s2108 = scalar_lea.vmem %s10, 8
        %v2109 = vld [vmem:[%s2108] sm:$0x3f]
        %v2110 = vsel %vm550, %v2105, 0.0
        %2111 = vadd.xlane.f32.xlu0 %v2110
        %v2112 = vpop.xlane.xlu0 %2111
        %v2113 = vsel %vm550, %v2106, 0.0
        %2114 = vadd.xlane.f32.xlu0 %v2113
        %v2115 = vpop.xlane.xlu0 %2114
        %v2116 = vsel %vm557, %v2107, 0.0
        %2117 = vadd.xlane.f32.xlu0 %v2116
        %v2118 = vpop.xlane.xlu0 %2117
        %v2119 = vmul.f32 %v2112, %v561
        %v2120 = vmul.f32 %v2115, %v561
        %v2121 = vmul.f32 %v2118, %v561
        %v2122 = vsub.f32 %v2105, %v2119
        %v2123 = vsub.f32 %v2106, %v2120
        %v2124 = vsub.f32 %v2107, %v2121
        %v2125 = vmul.f32 %v2122, %v2122
        %v2126 = vmul.f32 %v2123, %v2123
        %v2127 = vmul.f32 %v2124, %v2124
        %v2128 = vsel %vm550, %v2125, 0.0
        %2129 = vadd.xlane.f32.xlu0 %v2128
        %v2130 = vpop.xlane.xlu0 %2129
        %v2131 = vsel %vm550, %v2126, 0.0
        %2132 = vadd.xlane.f32.xlu0 %v2131
        %v2133 = vpop.xlane.xlu0 %2132
        %v2134 = vsel %vm557, %v2127, 0.0
        %2135 = vadd.xlane.f32.xlu0 %v2134
        %v2136 = vpop.xlane.xlu0 %2135
        %v2137 = vmul.f32 %v2130, %v561
        %v2138 = vmul.f32 %v2133, %v561
        %v2139 = vmul.f32 %v2136, %v561
        %v2140 = vadd.f32 %v2137, 1e-05
        %v2141 = vadd.f32 %v2138, 1e-05
        %v2142 = vadd.f32 %v2139, 1e-05
        %v2143 = vrsqrt.pop %v2140
        %v2144 = vrsqrt.pop %v2141
        %v2145 = vrsqrt.pop %v2142
        %v2146 = vmul.f32 %v2122, %v2143
        %v2147 = vmul.f32 %v2123, %v2144
        %v2148 = vmul.f32 %v2124, %v2145
        %v2149 = vlaneseq
        %v2150 = vshrl.u32 %v2149, 7
        %v2151 = vsub.s32 0, %v2150
        %v2152 = vrot.slane %v2109, %v2151
        %v2153 = vmul.f32 %v2146, %v2152
        %v2154 = vmul.f32 %v2147, %v2152
        %v2155 = vmul.f32 %v2148, %v2152
        %v2156 = vlaneseq
        %v2157 = vshrl.u32 %v2156, 7
        %v2158 = vsub.s32 1, %v2157
        %v2159 = vrot.slane %v2109, %v2158
        %v2160 = vadd.f32 %v2153, %v2159
        %v2161 = vadd.f32 %v2154, %v2159
        %v2162 = vadd.f32 %v2155, %v2159
        %s2163 = scalar_lea.vmem %s4, 16
        %v2164 = vld [vmem:[%s2163] sm:$0xf]
        %v2165 = vld [vmem:[%s2163 + $0x4] sm:$0xf]
        %v2166 = vld [vmem:[%s2163 + $0x8] sm:$0xf]
        %v2167 = vld [vmem:[%s2163 + $0xc] sm:$0xf]
        %v2168 = vpack.c.bf16 %v2161, %v2160
        %v2169 = vpack.c.bf16 %v2162, %v2162
        %s2170 = scalar_lea.vmem %s5, 1
        %v2171 = vld [vmem:[%s2170] sm:$0x1]
        %v2173 = vlaneseq
        %v2174 = vshrl.u32 %v2173, 7
        %v2175 = vsub.s32 0, %v2174
        %v2176 = vrot.slane %v2171, %v2175
        %v2182 = vunpack.c.l.b16 %v2164
        %v2183 = vunpack.c.l.b16 %v2165
        %v2184 = vunpack.c.l.b16 %v2166
        %v2185 = vunpack.c.l.b16 %v2167
        %v2186 = vpack.c.b16 %v2183, %v2182
        %v2187 = vpack.c.b16 %v2185, %v2184
        %v2191 = vsel %vm550, %v2168, 0
        %v2194 = vsel %vm550, %v2169, 0
        %2196 = vmatprep.subr.bf16.mxu0 0
        %2197 = vmatpush1.bf16.msra.mxu0 0
        %2198 = vmatprep.subr.bf16.mxu0 0
        %2199 = vmatpush1.bf16.msra.mxu0 0
        %2200 = vmatprep.subr.bf16.mxu0 0
        %2201 = vmatpush1.bf16.msra.mxu0 0
        %2202 = vmatprep.subr.bf16.mxu0 0
        %2203 = vmatpush1.bf16.msra.mxu0 0
        %2204 = vmatprep.subr.bf16.mxu0 0
        %2205 = vmatpush1.bf16.msra.mxu0 0
        %2206 = vmatprep.subr.bf16.mxu0 0
        %2207 = vmatpush1.bf16.msra.mxu0 0
        %2208 = vmatprep.subr.bf16.mxu0 0
        %2209 = vmatpush1.bf16.msra.mxu0 %v2187
        %2210 = vmatprep.subr.bf16.mxu0 0
        %2211 = vmatpush1.bf16.msra.mxu0 %v2186
        %2212 = vmatprep.subr.bf16.mxu0 0
        %2213 = vmatpush2.bf16.msra.mxu0 0
        %2214 = vmatprep.subr.bf16.mxu0 0
        %2215 = vmatpush2.bf16.msra.mxu0 0
        %2216 = vmatprep.subr.bf16.mxu0 0
        %2217 = vmatpush2.bf16.msra.mxu0 0
        %2218 = vmatprep.subr.bf16.mxu0 0
        %2219 = vmatpush2.bf16.msra.mxu0 0
        %2220 = vmatprep.subr.bf16.mxu0 0
        %2221 = vmatpush2.bf16.msra.mxu0 0
        %2222 = vmatprep.subr.bf16.mxu0 0
        %2223 = vmatpush2.bf16.msra.mxu0 0
        %2224 = vmatprep.subr.bf16.mxu0 0
        %2225 = vmatpush2.bf16.msra.mxu0 0
        %2226 = vmatprep.subr.bf16.mxu0 0
        %2227 = vmatpush2.bf16.msra.mxu0 0
        %2228 = vmatprep.mubr.bf16.mxu0 0
        %2229 = vmatmul.mubr.bf16.gmra.mxu0 %v2191
        %v2230 = vpop.f32.mrf.mxu0
        %v2231 = vadd.f32 %v2176, %v2230
        %v2232 = vpop.f32.mrf.mxu0
        %v2233 = vpop.f32.mrf.mxu0
        %v2234 = vadd.f32 %v2176, %v2233
        %v2235 = vpop.f32.mrf.mxu0
        %2236 = vmatprep.mubr.bf16.mxu0 0
        %2237 = vmatmul.mubr.bf16.gmra.mxu0 %v2194
        %v2238 = vpop.f32.mrf.mxu0
        %v2239 = vadd.f32 %v2176, %v2238
        %v2240 = vpop.f32.mrf.mxu0
        %v2241 = vpop.f32.mrf.mxu0
        %v2242 = vpop.f32.mrf.mxu0
        %2243 = vdwg.mxu0
        %2247 = vrot.lane.b32.xlu0 %v2231, 96
        %v2248 = vpop.permute.xlu0 %2247
        %2249 = vrot.lane.b32.xlu0 %v2234, 96
        %v2250 = vpop.permute.xlu0 %2249
        %2251 = vrot.lane.b32.xlu0 %v2239, 96
        %v2252 = vpop.permute.xlu0 %2251
        %v2253 = vsel %vm694, %v2231, 0
        %v2255 = vsel %vm694, %v2234, 0
        %v2257 = vsel %vm694, %v2239, 0
        %v2259 = vsel %vm694, %v2248, 0
        %v2261 = vsel %vm694, %v2250, 0
        %v2263 = vsel %vm694, %v2252, 0
        %2265 = vmatprep.subr.mxu0 0.0
        %2266 = vmatpush1.xpose.msra.mxu0 0.0
        %2267 = vmatprep.subr.mxu0 0.0
        %2268 = vmatpush1.xpose.msra.mxu0 0.0
        %2269 = vmatprep.subr.mxu0 0.0
        %2270 = vmatpush1.xpose.msra.mxu0 0.0
        %2271 = vmatprep.subr.mxu0 0.0
        %2272 = vmatpush1.xpose.msra.mxu0 0.0
        %2273 = vmatprep.subr.mxu0 0.0
        %2274 = vmatpush1.xpose.msra.mxu0 0.0
        %2275 = vmatprep.subr.mxu0 0.0
        %2276 = vmatpush1.xpose.msra.mxu0 0.0
        %2277 = vmatprep.subr.mxu0 0.0
        %2278 = vmatpush1.xpose.msra.mxu0 0.0
        %2279 = vmatprep.subr.mxu0 0.0
        %2280 = vmatpush1.xpose.msra.mxu0 0.0
        %2281 = vmatprep.subr.mxu0 0.0
        %2282 = vmatpush1.xpose.msra.mxu0 0.0
        %2283 = vmatprep.subr.mxu0 0.0
        %2284 = vmatpush1.xpose.msra.mxu0 0.0
        %2285 = vmatprep.subr.mxu0 0.0
        %2286 = vmatpush1.xpose.msra.mxu0 0.0
        %2287 = vmatprep.subr.mxu0 0.0
        %2288 = vmatpush1.xpose.msra.mxu0 0.0
        %2289 = vmatprep.subr.mxu0 0.0
        %2290 = vmatpush1.xpose.msra.mxu0 0.0
        %2291 = vmatprep.subr.mxu0 0.0
        %2292 = vmatpush1.xpose.msra.mxu0 %v2263
        %2293 = vmatprep.subr.mxu0 0.0
        %2294 = vmatpush1.xpose.msra.mxu0 %v2261
        %2295 = vmatprep.subr.mxu0 0.0
        %2296 = vmatpush1.xpose.msra.mxu0 %v2259
        %2297 = vmatprep.subr.mxu0 0.0
        %2298 = vmatpush2.xpose.msra.mxu0 0.0
        %2299 = vmatprep.subr.mxu0 0.0
        %2300 = vmatpush2.xpose.msra.mxu0 0.0
        %2301 = vmatprep.subr.mxu0 0.0
        %2302 = vmatpush2.xpose.msra.mxu0 0.0
        %2303 = vmatprep.subr.mxu0 0.0
        %2304 = vmatpush2.xpose.msra.mxu0 0.0
        %2305 = vmatprep.subr.mxu0 0.0
        %2306 = vmatpush2.xpose.msra.mxu0 0.0
        %2307 = vmatprep.subr.mxu0 0.0
        %2308 = vmatpush2.xpose.msra.mxu0 0.0
        %2309 = vmatprep.subr.mxu0 0.0
        %2310 = vmatpush2.xpose.msra.mxu0 0.0
        %2311 = vmatprep.subr.mxu0 0.0
        %2312 = vmatpush2.xpose.msra.mxu0 0.0
        %2313 = vmatprep.subr.mxu0 0.0
        %2314 = vmatpush2.xpose.msra.mxu0 0.0
        %2315 = vmatprep.subr.mxu0 0.0
        %2316 = vmatpush2.xpose.msra.mxu0 0.0
        %2317 = vmatprep.subr.mxu0 0.0
        %2318 = vmatpush2.xpose.msra.mxu0 0.0
        %2319 = vmatprep.subr.mxu0 0.0
        %2320 = vmatpush2.xpose.msra.mxu0 0.0
        %2321 = vmatprep.subr.mxu0 0.0
        %2322 = vmatpush2.xpose.msra.mxu0 0.0
        %2323 = vmatprep.subr.mxu0 0.0
        %2324 = vmatpush2.xpose.msra.mxu0 0.0
        %2325 = vmatprep.subr.mxu0 0.0
        %2326 = vmatpush2.xpose.msra.mxu0 0.0
        %2327 = vmatprep.subr.mxu0 0.0
        %2328 = vmatpush2.xpose.msra.mxu0 0.0
        %2329 = vmatprep.mubr.f32.mxu0 0.0
        %2330 = vmatmul.mubr.f32.gmra.mxu0 %v2253
        %v2331 = vpop.f32.mrf.mxu0
        %v2332 = vadd.f32 0.0, %v2331
        %v2333 = vpop.f32.mrf.mxu0
        %2334 = vmatprep.mubr.f32.mxu0 0.0
        %2335 = vmatmul.mubr.f32.gmra.mxu0 %v2255
        %v2336 = vpop.f32.mrf.mxu0
        %v2337 = vadd.f32 0.0, %v2336
        %v2338 = vpop.f32.mrf.mxu0
        %2339 = vmatprep.mubr.f32.mxu0 0.0
        %2340 = vmatmul.mubr.f32.gmra.mxu0 %v2257
        %v2341 = vpop.f32.mrf.mxu0
        %v2342 = vadd.f32 0.0, %v2341
        %v2343 = vpop.f32.mrf.mxu0
        %2344 = vdwg.mxu0
        %v2345 = vmul.f32 %v2332, 0.35355338
        %v2346 = vmul.f32 %v2337, 0.35355338
        %v2347 = vmul.f32 %v2342, 0.35355338
        %v2348 = vsel %vm790, %v2345, -inf
        %2349 = vmax.xlane.f32.xlu0 %v2348
        %v2350 = vpop.xlane.xlu0 %2349
        %v2351 = vsel %vm790, %v2346, -inf
        %2352 = vmax.xlane.f32.xlu0 %v2351
        %v2353 = vpop.xlane.xlu0 %2352
        %v2354 = vsel %vm797, %v2347, -inf
        %2355 = vmax.xlane.f32.xlu0 %v2354
        %v2356 = vpop.xlane.xlu0 %2355
        %v2357 = vsub.f32 %v2345, %v2350
        %v2358 = vsub.f32 %v2346, %v2353
        %v2359 = vsub.f32 %v2347, %v2356
        %v2360 = vmul.f32 %v2357, 1.442695
        %v2361 = vpow.pop %v2360
        %v2362 = vmul.f32 %v2358, 1.442695
        %v2363 = vpow.pop %v2362
        %v2364 = vmul.f32 %v2359, 1.442695
        %v2365 = vpow.pop %v2364
        %v2366 = vsel %vm790, %v2361, 0.0
        %2367 = vadd.xlane.f32.xlu0 %v2366
        %v2368 = vpop.xlane.xlu0 %2367
        %v2369 = vsel %vm790, %v2363, 0.0
        %2370 = vadd.xlane.f32.xlu0 %v2369
        %v2371 = vpop.xlane.xlu0 %2370
        %v2372 = vsel %vm797, %v2365, 0.0
        %2373 = vadd.xlane.f32.xlu0 %v2372
        %v2374 = vpop.xlane.xlu0 %2373
        %v2375 = vrcp.pop %v2368
        %v2376 = vrcp.pop %v2371
        %v2377 = vrcp.pop %v2374
        %v2378 = vmul.f32 %v2361, %v2375
        %v2379 = vmul.f32 %v2363, %v2376
        %v2380 = vmul.f32 %v2365, %v2377
        %2381 = vrot.lane.b32.xlu0 %v2231, 64
        %v2382 = vpop.permute.xlu0 %2381
        %2383 = vrot.lane.b32.xlu0 %v2234, 64
        %v2384 = vpop.permute.xlu0 %2383
        %2385 = vrot.lane.b32.xlu0 %v2239, 64
        %v2386 = vpop.permute.xlu0 %2385
        %v2390 = vsel %vm790, %v2378, 0
        %v2393 = vsel %vm790, %v2379, 0
        %v2396 = vsel %vm790, %v2380, 0
        %v2398 = vsel %vm842, %v2386, 0
        %2400 = vmatprep.subr.mxu0 0.0
        %2401 = vmatpush1.msra.mxu0 0.0
        %2402 = vmatprep.subr.mxu0 0.0
        %2403 = vmatpush1.msra.mxu0 0.0
        %2404 = vmatprep.subr.mxu0 0.0
        %2405 = vmatpush1.msra.mxu0 0.0
        %2406 = vmatprep.subr.mxu0 0.0
        %2407 = vmatpush1.msra.mxu0 0.0
        %2408 = vmatprep.subr.mxu0 0.0
        %2409 = vmatpush1.msra.mxu0 0.0
        %2410 = vmatprep.subr.mxu0 0.0
        %2411 = vmatpush1.msra.mxu0 0.0
        %2412 = vmatprep.subr.mxu0 0.0
        %2413 = vmatpush1.msra.mxu0 0.0
        %2414 = vmatprep.subr.mxu0 0.0
        %2415 = vmatpush1.msra.mxu0 0.0
        %2416 = vmatprep.subr.mxu0 0.0
        %2417 = vmatpush1.msra.mxu0 0.0
        %2418 = vmatprep.subr.mxu0 0.0
        %2419 = vmatpush1.msra.mxu0 0.0
        %2420 = vmatprep.subr.mxu0 0.0
        %2421 = vmatpush1.msra.mxu0 0.0
        %2422 = vmatprep.subr.mxu0 0.0
        %2423 = vmatpush1.msra.mxu0 0.0
        %2424 = vmatprep.subr.mxu0 0.0
        %2425 = vmatpush1.msra.mxu0 0.0
        %2426 = vmatprep.subr.mxu0 0.0
        %2427 = vmatpush1.msra.mxu0 %v2398
        %2428 = vmatprep.subr.mxu0 0.0
        %2429 = vmatpush1.msra.mxu0 %v2384
        %2430 = vmatprep.subr.mxu0 0.0
        %2431 = vmatpush1.msra.mxu0 %v2382
        %2432 = vmatprep.subr.mxu0 0.0
        %2433 = vmatpush2.msra.mxu0 0.0
        %2434 = vmatprep.subr.mxu0 0.0
        %2435 = vmatpush2.msra.mxu0 0.0
        %2436 = vmatprep.subr.mxu0 0.0
        %2437 = vmatpush2.msra.mxu0 0.0
        %2438 = vmatprep.subr.mxu0 0.0
        %2439 = vmatpush2.msra.mxu0 0.0
        %2440 = vmatprep.subr.mxu0 0.0
        %2441 = vmatpush2.msra.mxu0 0.0
        %2442 = vmatprep.subr.mxu0 0.0
        %2443 = vmatpush2.msra.mxu0 0.0
        %2444 = vmatprep.subr.mxu0 0.0
        %2445 = vmatpush2.msra.mxu0 0.0
        %2446 = vmatprep.subr.mxu0 0.0
        %2447 = vmatpush2.msra.mxu0 0.0
        %2448 = vmatprep.subr.mxu0 0.0
        %2449 = vmatpush2.msra.mxu0 0.0
        %2450 = vmatprep.subr.mxu0 0.0
        %2451 = vmatpush2.msra.mxu0 0.0
        %2452 = vmatprep.subr.mxu0 0.0
        %2453 = vmatpush2.msra.mxu0 0.0
        %2454 = vmatprep.subr.mxu0 0.0
        %2455 = vmatpush2.msra.mxu0 0.0
        %2456 = vmatprep.subr.mxu0 0.0
        %2457 = vmatpush2.msra.mxu0 0.0
        %2458 = vmatprep.subr.mxu0 0.0
        %2459 = vmatpush2.msra.mxu0 0.0
        %2460 = vmatprep.subr.mxu0 0.0
        %2461 = vmatpush2.msra.mxu0 0.0
        %2462 = vmatprep.subr.mxu0 0.0
        %2463 = vmatpush2.msra.mxu0 0.0
        %2464 = vmatprep.mubr.f32.mxu0 0.0
        %2465 = vmatmul.mubr.f32.gmra.mxu0 %v2390
        %v2466 = vpop.f32.mrf.mxu0
        %v2467 = vadd.f32 0.0, %v2466
        %v2468 = vpop.f32.mrf.mxu0
        %2469 = vmatprep.mubr.f32.mxu0 0.0
        %2470 = vmatmul.mubr.f32.gmra.mxu0 %v2393
        %v2471 = vpop.f32.mrf.mxu0
        %v2472 = vadd.f32 0.0, %v2471
        %v2473 = vpop.f32.mrf.mxu0
        %2474 = vmatprep.mubr.f32.mxu0 0.0
        %2475 = vmatmul.mubr.f32.gmra.mxu0 %v2396
        %v2476 = vpop.f32.mrf.mxu0
        %v2477 = vadd.f32 0.0, %v2476
        %v2478 = vpop.f32.mrf.mxu0
        %2479 = vdwg.mxu0
        %2480 = vrot.lane.b32.xlu0 %v2231, 120
        %v2481 = vpop.permute.xlu0 %2480
        %2482 = vrot.lane.b32.xlu0 %v2234, 120
        %v2483 = vpop.permute.xlu0 %2482
        %2484 = vrot.lane.b32.xlu0 %v2239, 120
        %v2485 = vpop.permute.xlu0 %2484
        %2486 = vrot.lane.b32.xlu0 %v2231, 88
        %v2487 = vpop.permute.xlu0 %2486
        %2488 = vrot.lane.b32.xlu0 %v2234, 88
        %v2489 = vpop.permute.xlu0 %2488
        %2490 = vrot.lane.b32.xlu0 %v2239, 88
        %v2491 = vpop.permute.xlu0 %2490
        %v2492 = vsel %vm694, %v2481, 0
        %v2494 = vsel %vm694, %v2483, 0
        %v2496 = vsel %vm694, %v2485, 0
        %v2498 = vsel %vm694, %v2487, 0
        %v2500 = vsel %vm694, %v2489, 0
        %v2502 = vsel %vm694, %v2491, 0
        %2504 = vmatprep.subr.mxu0 0.0
        %2505 = vmatpush1.xpose.msra.mxu0 0.0
        %2506 = vmatprep.subr.mxu0 0.0
        %2507 = vmatpush1.xpose.msra.mxu0 0.0
        %2508 = vmatprep.subr.mxu0 0.0
        %2509 = vmatpush1.xpose.msra.mxu0 0.0
        %2510 = vmatprep.subr.mxu0 0.0
        %2511 = vmatpush1.xpose.msra.mxu0 0.0
        %2512 = vmatprep.subr.mxu0 0.0
        %2513 = vmatpush1.xpose.msra.mxu0 0.0
        %2514 = vmatprep.subr.mxu0 0.0
        %2515 = vmatpush1.xpose.msra.mxu0 0.0
        %2516 = vmatprep.subr.mxu0 0.0
        %2517 = vmatpush1.xpose.msra.mxu0 0.0
        %2518 = vmatprep.subr.mxu0 0.0
        %2519 = vmatpush1.xpose.msra.mxu0 0.0
        %2520 = vmatprep.subr.mxu0 0.0
        %2521 = vmatpush1.xpose.msra.mxu0 0.0
        %2522 = vmatprep.subr.mxu0 0.0
        %2523 = vmatpush1.xpose.msra.mxu0 0.0
        %2524 = vmatprep.subr.mxu0 0.0
        %2525 = vmatpush1.xpose.msra.mxu0 0.0
        %2526 = vmatprep.subr.mxu0 0.0
        %2527 = vmatpush1.xpose.msra.mxu0 0.0
        %2528 = vmatprep.subr.mxu0 0.0
        %2529 = vmatpush1.xpose.msra.mxu0 0.0
        %2530 = vmatprep.subr.mxu0 0.0
        %2531 = vmatpush1.xpose.msra.mxu0 %v2502
        %2532 = vmatprep.subr.mxu0 0.0
        %2533 = vmatpush1.xpose.msra.mxu0 %v2500
        %2534 = vmatprep.subr.mxu0 0.0
        %2535 = vmatpush1.xpose.msra.mxu0 %v2498
        %2536 = vmatprep.subr.mxu0 0.0
        %2537 = vmatpush2.xpose.msra.mxu0 0.0
        %2538 = vmatprep.subr.mxu0 0.0
        %2539 = vmatpush2.xpose.msra.mxu0 0.0
        %2540 = vmatprep.subr.mxu0 0.0
        %2541 = vmatpush2.xpose.msra.mxu0 0.0
        %2542 = vmatprep.subr.mxu0 0.0
        %2543 = vmatpush2.xpose.msra.mxu0 0.0
        %2544 = vmatprep.subr.mxu0 0.0
        %2545 = vmatpush2.xpose.msra.mxu0 0.0
        %2546 = vmatprep.subr.mxu0 0.0
        %2547 = vmatpush2.xpose.msra.mxu0 0.0
        %2548 = vmatprep.subr.mxu0 0.0
        %2549 = vmatpush2.xpose.msra.mxu0 0.0
        %2550 = vmatprep.subr.mxu0 0.0
        %2551 = vmatpush2.xpose.msra.mxu0 0.0
        %2552 = vmatprep.subr.mxu0 0.0
        %2553 = vmatpush2.xpose.msra.mxu0 0.0
        %2554 = vmatprep.subr.mxu0 0.0
        %2555 = vmatpush2.xpose.msra.mxu0 0.0
        %2556 = vmatprep.subr.mxu0 0.0
        %2557 = vmatpush2.xpose.msra.mxu0 0.0
        %2558 = vmatprep.subr.mxu0 0.0
        %2559 = vmatpush2.xpose.msra.mxu0 0.0
        %2560 = vmatprep.subr.mxu0 0.0
        %2561 = vmatpush2.xpose.msra.mxu0 0.0
        %2562 = vmatprep.subr.mxu0 0.0
        %2563 = vmatpush2.xpose.msra.mxu0 0.0
        %2564 = vmatprep.subr.mxu0 0.0
        %2565 = vmatpush2.xpose.msra.mxu0 0.0
        %2566 = vmatprep.subr.mxu0 0.0
        %2567 = vmatpush2.xpose.msra.mxu0 0.0
        %2568 = vmatprep.mubr.f32.mxu0 0.0
        %2569 = vmatmul.mubr.f32.gmra.mxu0 %v2492
        %v2570 = vpop.f32.mrf.mxu0
        %v2571 = vadd.f32 0.0, %v2570
        %v2572 = vpop.f32.mrf.mxu0
        %2573 = vmatprep.mubr.f32.mxu0 0.0
        %2574 = vmatmul.mubr.f32.gmra.mxu0 %v2494
        %v2575 = vpop.f32.mrf.mxu0
        %v2576 = vadd.f32 0.0, %v2575
        %v2577 = vpop.f32.mrf.mxu0
        %2578 = vmatprep.mubr.f32.mxu0 0.0
        %2579 = vmatmul.mubr.f32.gmra.mxu0 %v2496
        %v2580 = vpop.f32.mrf.mxu0
        %v2581 = vadd.f32 0.0, %v2580
        %v2582 = vpop.f32.mrf.mxu0
        %2583 = vdwg.mxu0
        %v2584 = vmul.f32 %v2571, 0.35355338
        %v2585 = vmul.f32 %v2576, 0.35355338
        %v2586 = vmul.f32 %v2581, 0.35355338
        %v2587 = vsel %vm790, %v2584, -inf
        %2588 = vmax.xlane.f32.xlu0 %v2587
        %v2589 = vpop.xlane.xlu0 %2588
        %v2590 = vsel %vm790, %v2585, -inf
        %2591 = vmax.xlane.f32.xlu0 %v2590
        %v2592 = vpop.xlane.xlu0 %2591
        %v2593 = vsel %vm797, %v2586, -inf
        %2594 = vmax.xlane.f32.xlu0 %v2593
        %v2595 = vpop.xlane.xlu0 %2594
        %v2596 = vsub.f32 %v2584, %v2589
        %v2597 = vsub.f32 %v2585, %v2592
        %v2598 = vsub.f32 %v2586, %v2595
        %v2599 = vmul.f32 %v2596, 1.442695
        %v2600 = vpow.pop %v2599
        %v2601 = vmul.f32 %v2597, 1.442695
        %v2602 = vpow.pop %v2601
        %v2603 = vmul.f32 %v2598, 1.442695
        %v2604 = vpow.pop %v2603
        %v2605 = vsel %vm790, %v2600, 0.0
        %2606 = vadd.xlane.f32.xlu0 %v2605
        %v2607 = vpop.xlane.xlu0 %2606
        %v2608 = vsel %vm790, %v2602, 0.0
        %2609 = vadd.xlane.f32.xlu0 %v2608
        %v2610 = vpop.xlane.xlu0 %2609
        %v2611 = vsel %vm797, %v2604, 0.0
        %2612 = vadd.xlane.f32.xlu0 %v2611
        %v2613 = vpop.xlane.xlu0 %2612
        %v2614 = vrcp.pop %v2607
        %v2615 = vrcp.pop %v2610
        %v2616 = vrcp.pop %v2613
        %v2617 = vmul.f32 %v2600, %v2614
        %v2618 = vmul.f32 %v2602, %v2615
        %v2619 = vmul.f32 %v2604, %v2616
        %2620 = vrot.lane.b32.xlu0 %v2231, 56
        %v2621 = vpop.permute.xlu0 %2620
        %2622 = vrot.lane.b32.xlu0 %v2234, 56
        %v2623 = vpop.permute.xlu0 %2622
        %2624 = vrot.lane.b32.xlu0 %v2239, 56
        %v2625 = vpop.permute.xlu0 %2624
        %v2629 = vsel %vm790, %v2617, 0
        %v2632 = vsel %vm790, %v2618, 0
        %v2635 = vsel %vm790, %v2619, 0
        %v2637 = vsel %vm842, %v2625, 0
        %2639 = vmatprep.subr.mxu0 0.0
        %2640 = vmatpush1.msra.mxu0 0.0
        %2641 = vmatprep.subr.mxu0 0.0
        %2642 = vmatpush1.msra.mxu0 0.0
        %2643 = vmatprep.subr.mxu0 0.0
        %2644 = vmatpush1.msra.mxu0 0.0
        %2645 = vmatprep.subr.mxu0 0.0
        %2646 = vmatpush1.msra.mxu0 0.0
        %2647 = vmatprep.subr.mxu0 0.0
        %2648 = vmatpush1.msra.mxu0 0.0
        %2649 = vmatprep.subr.mxu0 0.0
        %2650 = vmatpush1.msra.mxu0 0.0
        %2651 = vmatprep.subr.mxu0 0.0
        %2652 = vmatpush1.msra.mxu0 0.0
        %2653 = vmatprep.subr.mxu0 0.0
        %2654 = vmatpush1.msra.mxu0 0.0
        %2655 = vmatprep.subr.mxu0 0.0
        %2656 = vmatpush1.msra.mxu0 0.0
        %2657 = vmatprep.subr.mxu0 0.0
        %2658 = vmatpush1.msra.mxu0 0.0
        %2659 = vmatprep.subr.mxu0 0.0
        %2660 = vmatpush1.msra.mxu0 0.0
        %2661 = vmatprep.subr.mxu0 0.0
        %2662 = vmatpush1.msra.mxu0 0.0
        %2663 = vmatprep.subr.mxu0 0.0
        %2664 = vmatpush1.msra.mxu0 0.0
        %2665 = vmatprep.subr.mxu0 0.0
        %2666 = vmatpush1.msra.mxu0 %v2637
        %2667 = vmatprep.subr.mxu0 0.0
        %2668 = vmatpush1.msra.mxu0 %v2623
        %2669 = vmatprep.subr.mxu0 0.0
        %2670 = vmatpush1.msra.mxu0 %v2621
        %2671 = vmatprep.subr.mxu0 0.0
        %2672 = vmatpush2.msra.mxu0 0.0
        %2673 = vmatprep.subr.mxu0 0.0
        %2674 = vmatpush2.msra.mxu0 0.0
        %2675 = vmatprep.subr.mxu0 0.0
        %2676 = vmatpush2.msra.mxu0 0.0
        %2677 = vmatprep.subr.mxu0 0.0
        %2678 = vmatpush2.msra.mxu0 0.0
        %2679 = vmatprep.subr.mxu0 0.0
        %2680 = vmatpush2.msra.mxu0 0.0
        %2681 = vmatprep.subr.mxu0 0.0
        %2682 = vmatpush2.msra.mxu0 0.0
        %2683 = vmatprep.subr.mxu0 0.0
        %2684 = vmatpush2.msra.mxu0 0.0
        %2685 = vmatprep.subr.mxu0 0.0
        %2686 = vmatpush2.msra.mxu0 0.0
        %2687 = vmatprep.subr.mxu0 0.0
        %2688 = vmatpush2.msra.mxu0 0.0
        %2689 = vmatprep.subr.mxu0 0.0
        %2690 = vmatpush2.msra.mxu0 0.0
        %2691 = vmatprep.subr.mxu0 0.0
        %2692 = vmatpush2.msra.mxu0 0.0
        %2693 = vmatprep.subr.mxu0 0.0
        %2694 = vmatpush2.msra.mxu0 0.0
        %2695 = vmatprep.subr.mxu0 0.0
        %2696 = vmatpush2.msra.mxu0 0.0
        %2697 = vmatprep.subr.mxu0 0.0
        %2698 = vmatpush2.msra.mxu0 0.0
        %2699 = vmatprep.subr.mxu0 0.0
        %2700 = vmatpush2.msra.mxu0 0.0
        %2701 = vmatprep.subr.mxu0 0.0
        %2702 = vmatpush2.msra.mxu0 0.0
        %2703 = vmatprep.mubr.f32.mxu0 0.0
        %2704 = vmatmul.mubr.f32.gmra.mxu0 %v2629
        %v2705 = vpop.f32.mrf.mxu0
        %v2706 = vadd.f32 0.0, %v2705
        %v2707 = vpop.f32.mrf.mxu0
        %2708 = vmatprep.mubr.f32.mxu0 0.0
        %2709 = vmatmul.mubr.f32.gmra.mxu0 %v2632
        %v2710 = vpop.f32.mrf.mxu0
        %v2711 = vadd.f32 0.0, %v2710
        %v2712 = vpop.f32.mrf.mxu0
        %2713 = vmatprep.mubr.f32.mxu0 0.0
        %2714 = vmatmul.mubr.f32.gmra.mxu0 %v2635
        %v2715 = vpop.f32.mrf.mxu0
        %v2716 = vadd.f32 0.0, %v2715
        %v2717 = vpop.f32.mrf.mxu0
        %2718 = vdwg.mxu0
        %2719 = vrot.lane.b32.xlu0 %v2231, 112
        %v2720 = vpop.permute.xlu0 %2719
        %2721 = vrot.lane.b32.xlu0 %v2234, 112
        %v2722 = vpop.permute.xlu0 %2721
        %2723 = vrot.lane.b32.xlu0 %v2239, 112
        %v2724 = vpop.permute.xlu0 %2723
        %2725 = vrot.lane.b32.xlu0 %v2231, 80
        %v2726 = vpop.permute.xlu0 %2725
        %2727 = vrot.lane.b32.xlu0 %v2234, 80
        %v2728 = vpop.permute.xlu0 %2727
        %2729 = vrot.lane.b32.xlu0 %v2239, 80
        %v2730 = vpop.permute.xlu0 %2729
        %v2731 = vsel %vm694, %v2720, 0
        %v2733 = vsel %vm694, %v2722, 0
        %v2735 = vsel %vm694, %v2724, 0
        %v2737 = vsel %vm694, %v2726, 0
        %v2739 = vsel %vm694, %v2728, 0
        %v2741 = vsel %vm694, %v2730, 0
        %2743 = vmatprep.subr.mxu0 0.0
        %2744 = vmatpush1.xpose.msra.mxu0 0.0
        %2745 = vmatprep.subr.mxu0 0.0
        %2746 = vmatpush1.xpose.msra.mxu0 0.0
        %2747 = vmatprep.subr.mxu0 0.0
        %2748 = vmatpush1.xpose.msra.mxu0 0.0
        %2749 = vmatprep.subr.mxu0 0.0
        %2750 = vmatpush1.xpose.msra.mxu0 0.0
        %2751 = vmatprep.subr.mxu0 0.0
        %2752 = vmatpush1.xpose.msra.mxu0 0.0
        %2753 = vmatprep.subr.mxu0 0.0
        %2754 = vmatpush1.xpose.msra.mxu0 0.0
        %2755 = vmatprep.subr.mxu0 0.0
        %2756 = vmatpush1.xpose.msra.mxu0 0.0
        %2757 = vmatprep.subr.mxu0 0.0
        %2758 = vmatpush1.xpose.msra.mxu0 0.0
        %2759 = vmatprep.subr.mxu0 0.0
        %2760 = vmatpush1.xpose.msra.mxu0 0.0
        %2761 = vmatprep.subr.mxu0 0.0
        %2762 = vmatpush1.xpose.msra.mxu0 0.0
        %2763 = vmatprep.subr.mxu0 0.0
        %2764 = vmatpush1.xpose.msra.mxu0 0.0
        %2765 = vmatprep.subr.mxu0 0.0
        %2766 = vmatpush1.xpose.msra.mxu0 0.0
        %2767 = vmatprep.subr.mxu0 0.0
        %2768 = vmatpush1.xpose.msra.mxu0 0.0
        %2769 = vmatprep.subr.mxu0 0.0
        %2770 = vmatpush1.xpose.msra.mxu0 %v2741
        %2771 = vmatprep.subr.mxu0 0.0
        %2772 = vmatpush1.xpose.msra.mxu0 %v2739
        %2773 = vmatprep.subr.mxu0 0.0
        %2774 = vmatpush1.xpose.msra.mxu0 %v2737
        %2775 = vmatprep.subr.mxu0 0.0
        %2776 = vmatpush2.xpose.msra.mxu0 0.0
        %2777 = vmatprep.subr.mxu0 0.0
        %2778 = vmatpush2.xpose.msra.mxu0 0.0
        %2779 = vmatprep.subr.mxu0 0.0
        %2780 = vmatpush2.xpose.msra.mxu0 0.0
        %2781 = vmatprep.subr.mxu0 0.0
        %2782 = vmatpush2.xpose.msra.mxu0 0.0
        %2783 = vmatprep.subr.mxu0 0.0
        %2784 = vmatpush2.xpose.msra.mxu0 0.0
        %2785 = vmatprep.subr.mxu0 0.0
        %2786 = vmatpush2.xpose.msra.mxu0 0.0
        %2787 = vmatprep.subr.mxu0 0.0
        %2788 = vmatpush2.xpose.msra.mxu0 0.0
        %2789 = vmatprep.subr.mxu0 0.0
        %2790 = vmatpush2.xpose.msra.mxu0 0.0
        %2791 = vmatprep.subr.mxu0 0.0
        %2792 = vmatpush2.xpose.msra.mxu0 0.0
        %2793 = vmatprep.subr.mxu0 0.0
        %2794 = vmatpush2.xpose.msra.mxu0 0.0
        %2795 = vmatprep.subr.mxu0 0.0
        %2796 = vmatpush2.xpose.msra.mxu0 0.0
        %2797 = vmatprep.subr.mxu0 0.0
        %2798 = vmatpush2.xpose.msra.mxu0 0.0
        %2799 = vmatprep.subr.mxu0 0.0
        %2800 = vmatpush2.xpose.msra.mxu0 0.0
        %2801 = vmatprep.subr.mxu0 0.0
        %2802 = vmatpush2.xpose.msra.mxu0 0.0
        %2803 = vmatprep.subr.mxu0 0.0
        %2804 = vmatpush2.xpose.msra.mxu0 0.0
        %2805 = vmatprep.subr.mxu0 0.0
        %2806 = vmatpush2.xpose.msra.mxu0 0.0
        %2807 = vmatprep.mubr.f32.mxu0 0.0
        %2808 = vmatmul.mubr.f32.gmra.mxu0 %v2731
        %v2809 = vpop.f32.mrf.mxu0
        %v2810 = vadd.f32 0.0, %v2809
        %v2811 = vpop.f32.mrf.mxu0
        %2812 = vmatprep.mubr.f32.mxu0 0.0
        %2813 = vmatmul.mubr.f32.gmra.mxu0 %v2733
        %v2814 = vpop.f32.mrf.mxu0
        %v2815 = vadd.f32 0.0, %v2814
        %v2816 = vpop.f32.mrf.mxu0
        %2817 = vmatprep.mubr.f32.mxu0 0.0
        %2818 = vmatmul.mubr.f32.gmra.mxu0 %v2735
        %v2819 = vpop.f32.mrf.mxu0
        %v2820 = vadd.f32 0.0, %v2819
        %v2821 = vpop.f32.mrf.mxu0
        %2822 = vdwg.mxu0
        %v2823 = vmul.f32 %v2810, 0.35355338
        %v2824 = vmul.f32 %v2815, 0.35355338
        %v2825 = vmul.f32 %v2820, 0.35355338
        %v2826 = vsel %vm790, %v2823, -inf
        %2827 = vmax.xlane.f32.xlu0 %v2826
        %v2828 = vpop.xlane.xlu0 %2827
        %v2829 = vsel %vm790, %v2824, -inf
        %2830 = vmax.xlane.f32.xlu0 %v2829
        %v2831 = vpop.xlane.xlu0 %2830
        %v2832 = vsel %vm797, %v2825, -inf
        %2833 = vmax.xlane.f32.xlu0 %v2832
        %v2834 = vpop.xlane.xlu0 %2833
        %v2835 = vsub.f32 %v2823, %v2828
        %v2836 = vsub.f32 %v2824, %v2831
        %v2837 = vsub.f32 %v2825, %v2834
        %v2838 = vmul.f32 %v2835, 1.442695
        %v2839 = vpow.pop %v2838
        %v2840 = vmul.f32 %v2836, 1.442695
        %v2841 = vpow.pop %v2840
        %v2842 = vmul.f32 %v2837, 1.442695
        %v2843 = vpow.pop %v2842
        %v2844 = vsel %vm790, %v2839, 0.0
        %2845 = vadd.xlane.f32.xlu0 %v2844
        %v2846 = vpop.xlane.xlu0 %2845
        %v2847 = vsel %vm790, %v2841, 0.0
        %2848 = vadd.xlane.f32.xlu0 %v2847
        %v2849 = vpop.xlane.xlu0 %2848
        %v2850 = vsel %vm797, %v2843, 0.0
        %2851 = vadd.xlane.f32.xlu0 %v2850
        %v2852 = vpop.xlane.xlu0 %2851
        %v2853 = vrcp.pop %v2846
        %v2854 = vrcp.pop %v2849
        %v2855 = vrcp.pop %v2852
        %v2856 = vmul.f32 %v2839, %v2853
        %v2857 = vmul.f32 %v2841, %v2854
        %v2858 = vmul.f32 %v2843, %v2855
        %2859 = vrot.lane.b32.xlu0 %v2231, 48
        %v2860 = vpop.permute.xlu0 %2859
        %2861 = vrot.lane.b32.xlu0 %v2234, 48
        %v2862 = vpop.permute.xlu0 %2861
        %2863 = vrot.lane.b32.xlu0 %v2239, 48
        %v2864 = vpop.permute.xlu0 %2863
        %v2868 = vsel %vm790, %v2856, 0
        %v2871 = vsel %vm790, %v2857, 0
        %v2874 = vsel %vm790, %v2858, 0
        %v2876 = vsel %vm842, %v2864, 0
        %2878 = vmatprep.subr.mxu0 0.0
        %2879 = vmatpush1.msra.mxu0 0.0
        %2880 = vmatprep.subr.mxu0 0.0
        %2881 = vmatpush1.msra.mxu0 0.0
        %2882 = vmatprep.subr.mxu0 0.0
        %2883 = vmatpush1.msra.mxu0 0.0
        %2884 = vmatprep.subr.mxu0 0.0
        %2885 = vmatpush1.msra.mxu0 0.0
        %2886 = vmatprep.subr.mxu0 0.0
        %2887 = vmatpush1.msra.mxu0 0.0
        %2888 = vmatprep.subr.mxu0 0.0
        %2889 = vmatpush1.msra.mxu0 0.0
        %2890 = vmatprep.subr.mxu0 0.0
        %2891 = vmatpush1.msra.mxu0 0.0
        %2892 = vmatprep.subr.mxu0 0.0
        %2893 = vmatpush1.msra.mxu0 0.0
        %2894 = vmatprep.subr.mxu0 0.0
        %2895 = vmatpush1.msra.mxu0 0.0
        %2896 = vmatprep.subr.mxu0 0.0
        %2897 = vmatpush1.msra.mxu0 0.0
        %2898 = vmatprep.subr.mxu0 0.0
        %2899 = vmatpush1.msra.mxu0 0.0
        %2900 = vmatprep.subr.mxu0 0.0
        %2901 = vmatpush1.msra.mxu0 0.0
        %2902 = vmatprep.subr.mxu0 0.0
        %2903 = vmatpush1.msra.mxu0 0.0
        %2904 = vmatprep.subr.mxu0 0.0
        %2905 = vmatpush1.msra.mxu0 %v2876
        %2906 = vmatprep.subr.mxu0 0.0
        %2907 = vmatpush1.msra.mxu0 %v2862
        %2908 = vmatprep.subr.mxu0 0.0
        %2909 = vmatpush1.msra.mxu0 %v2860
        %2910 = vmatprep.subr.mxu0 0.0
        %2911 = vmatpush2.msra.mxu0 0.0
        %2912 = vmatprep.subr.mxu0 0.0
        %2913 = vmatpush2.msra.mxu0 0.0
        %2914 = vmatprep.subr.mxu0 0.0
        %2915 = vmatpush2.msra.mxu0 0.0
        %2916 = vmatprep.subr.mxu0 0.0
        %2917 = vmatpush2.msra.mxu0 0.0
        %2918 = vmatprep.subr.mxu0 0.0
        %2919 = vmatpush2.msra.mxu0 0.0
        %2920 = vmatprep.subr.mxu0 0.0
        %2921 = vmatpush2.msra.mxu0 0.0
        %2922 = vmatprep.subr.mxu0 0.0
        %2923 = vmatpush2.msra.mxu0 0.0
        %2924 = vmatprep.subr.mxu0 0.0
        %2925 = vmatpush2.msra.mxu0 0.0
        %2926 = vmatprep.subr.mxu0 0.0
        %2927 = vmatpush2.msra.mxu0 0.0
        %2928 = vmatprep.subr.mxu0 0.0
        %2929 = vmatpush2.msra.mxu0 0.0
        %2930 = vmatprep.subr.mxu0 0.0
        %2931 = vmatpush2.msra.mxu0 0.0
        %2932 = vmatprep.subr.mxu0 0.0
        %2933 = vmatpush2.msra.mxu0 0.0
        %2934 = vmatprep.subr.mxu0 0.0
        %2935 = vmatpush2.msra.mxu0 0.0
        %2936 = vmatprep.subr.mxu0 0.0
        %2937 = vmatpush2.msra.mxu0 0.0
        %2938 = vmatprep.subr.mxu0 0.0
        %2939 = vmatpush2.msra.mxu0 0.0
        %2940 = vmatprep.subr.mxu0 0.0
        %2941 = vmatpush2.msra.mxu0 0.0
        %2942 = vmatprep.mubr.f32.mxu0 0.0
        %2943 = vmatmul.mubr.f32.gmra.mxu0 %v2868
        %v2944 = vpop.f32.mrf.mxu0
        %v2945 = vadd.f32 0.0, %v2944
        %v2946 = vpop.f32.mrf.mxu0
        %2947 = vmatprep.mubr.f32.mxu0 0.0
        %2948 = vmatmul.mubr.f32.gmra.mxu0 %v2871
        %v2949 = vpop.f32.mrf.mxu0
        %v2950 = vadd.f32 0.0, %v2949
        %v2951 = vpop.f32.mrf.mxu0
        %2952 = vmatprep.mubr.f32.mxu0 0.0
        %2953 = vmatmul.mubr.f32.gmra.mxu0 %v2874
        %v2954 = vpop.f32.mrf.mxu0
        %v2955 = vadd.f32 0.0, %v2954
        %v2956 = vpop.f32.mrf.mxu0
        %2957 = vdwg.mxu0
        %2958 = vrot.lane.b32.xlu0 %v2231, 104
        %v2959 = vpop.permute.xlu0 %2958
        %2960 = vrot.lane.b32.xlu0 %v2234, 104
        %v2961 = vpop.permute.xlu0 %2960
        %2962 = vrot.lane.b32.xlu0 %v2239, 104
        %v2963 = vpop.permute.xlu0 %2962
        %2964 = vrot.lane.b32.xlu0 %v2231, 72
        %v2965 = vpop.permute.xlu0 %2964
        %2966 = vrot.lane.b32.xlu0 %v2234, 72
        %v2967 = vpop.permute.xlu0 %2966
        %2968 = vrot.lane.b32.xlu0 %v2239, 72
        %v2969 = vpop.permute.xlu0 %2968
        %v2970 = vsel %vm694, %v2959, 0
        %v2972 = vsel %vm694, %v2961, 0
        %v2974 = vsel %vm694, %v2963, 0
        %v2976 = vsel %vm694, %v2965, 0
        %v2978 = vsel %vm694, %v2967, 0
        %v2980 = vsel %vm694, %v2969, 0
        %2982 = vmatprep.subr.mxu0 0.0
        %2983 = vmatpush1.xpose.msra.mxu0 0.0
        %2984 = vmatprep.subr.mxu0 0.0
        %2985 = vmatpush1.xpose.msra.mxu0 0.0
        %2986 = vmatprep.subr.mxu0 0.0
        %2987 = vmatpush1.xpose.msra.mxu0 0.0
        %2988 = vmatprep.subr.mxu0 0.0
        %2989 = vmatpush1.xpose.msra.mxu0 0.0
        %2990 = vmatprep.subr.mxu0 0.0
        %2991 = vmatpush1.xpose.msra.mxu0 0.0
        %2992 = vmatprep.subr.mxu0 0.0
        %2993 = vmatpush1.xpose.msra.mxu0 0.0
        %2994 = vmatprep.subr.mxu0 0.0
        %2995 = vmatpush1.xpose.msra.mxu0 0.0
        %2996 = vmatprep.subr.mxu0 0.0
        %2997 = vmatpush1.xpose.msra.mxu0 0.0
        %2998 = vmatprep.subr.mxu0 0.0
        %2999 = vmatpush1.xpose.msra.mxu0 0.0
        %3000 = vmatprep.subr.mxu0 0.0
        %3001 = vmatpush1.xpose.msra.mxu0 0.0
        %3002 = vmatprep.subr.mxu0 0.0
        %3003 = vmatpush1.xpose.msra.mxu0 0.0
        %3004 = vmatprep.subr.mxu0 0.0
        %3005 = vmatpush1.xpose.msra.mxu0 0.0
        %3006 = vmatprep.subr.mxu0 0.0
        %3007 = vmatpush1.xpose.msra.mxu0 0.0
        %3008 = vmatprep.subr.mxu0 0.0
        %3009 = vmatpush1.xpose.msra.mxu0 %v2980
        %3010 = vmatprep.subr.mxu0 0.0
        %3011 = vmatpush1.xpose.msra.mxu0 %v2978
        %3012 = vmatprep.subr.mxu0 0.0
        %3013 = vmatpush1.xpose.msra.mxu0 %v2976
        %3014 = vmatprep.subr.mxu0 0.0
        %3015 = vmatpush2.xpose.msra.mxu0 0.0
        %3016 = vmatprep.subr.mxu0 0.0
        %3017 = vmatpush2.xpose.msra.mxu0 0.0
        %3018 = vmatprep.subr.mxu0 0.0
        %3019 = vmatpush2.xpose.msra.mxu0 0.0
        %3020 = vmatprep.subr.mxu0 0.0
        %3021 = vmatpush2.xpose.msra.mxu0 0.0
        %3022 = vmatprep.subr.mxu0 0.0
        %3023 = vmatpush2.xpose.msra.mxu0 0.0
        %3024 = vmatprep.subr.mxu0 0.0
        %3025 = vmatpush2.xpose.msra.mxu0 0.0
        %3026 = vmatprep.subr.mxu0 0.0
        %3027 = vmatpush2.xpose.msra.mxu0 0.0
        %3028 = vmatprep.subr.mxu0 0.0
        %3029 = vmatpush2.xpose.msra.mxu0 0.0
        %3030 = vmatprep.subr.mxu0 0.0
        %3031 = vmatpush2.xpose.msra.mxu0 0.0
        %3032 = vmatprep.subr.mxu0 0.0
        %3033 = vmatpush2.xpose.msra.mxu0 0.0
        %3034 = vmatprep.subr.mxu0 0.0
        %3035 = vmatpush2.xpose.msra.mxu0 0.0
        %3036 = vmatprep.subr.mxu0 0.0
        %3037 = vmatpush2.xpose.msra.mxu0 0.0
        %3038 = vmatprep.subr.mxu0 0.0
        %3039 = vmatpush2.xpose.msra.mxu0 0.0
        %3040 = vmatprep.subr.mxu0 0.0
        %3041 = vmatpush2.xpose.msra.mxu0 0.0
        %3042 = vmatprep.subr.mxu0 0.0
        %3043 = vmatpush2.xpose.msra.mxu0 0.0
        %3044 = vmatprep.subr.mxu0 0.0
        %3045 = vmatpush2.xpose.msra.mxu0 0.0
        %3046 = vmatprep.mubr.f32.mxu0 0.0
        %3047 = vmatmul.mubr.f32.gmra.mxu0 %v2970
        %v3048 = vpop.f32.mrf.mxu0
        %v3049 = vadd.f32 0.0, %v3048
        %v3050 = vpop.f32.mrf.mxu0
        %3051 = vmatprep.mubr.f32.mxu0 0.0
        %3052 = vmatmul.mubr.f32.gmra.mxu0 %v2972
        %v3053 = vpop.f32.mrf.mxu0
        %v3054 = vadd.f32 0.0, %v3053
        %v3055 = vpop.f32.mrf.mxu0
        %3056 = vmatprep.mubr.f32.mxu0 0.0
        %3057 = vmatmul.mubr.f32.gmra.mxu0 %v2974
        %v3058 = vpop.f32.mrf.mxu0
        %v3059 = vadd.f32 0.0, %v3058
        %v3060 = vpop.f32.mrf.mxu0
        %3061 = vdwg.mxu0
        %v3062 = vmul.f32 %v3049, 0.35355338
        %v3063 = vmul.f32 %v3054, 0.35355338
        %v3064 = vmul.f32 %v3059, 0.35355338
        %v3065 = vsel %vm790, %v3062, -inf
        %3066 = vmax.xlane.f32.xlu0 %v3065
        %v3067 = vpop.xlane.xlu0 %3066
        %v3068 = vsel %vm790, %v3063, -inf
        %3069 = vmax.xlane.f32.xlu0 %v3068
        %v3070 = vpop.xlane.xlu0 %3069
        %v3071 = vsel %vm797, %v3064, -inf
        %3072 = vmax.xlane.f32.xlu0 %v3071
        %v3073 = vpop.xlane.xlu0 %3072
        %v3074 = vsub.f32 %v3062, %v3067
        %v3075 = vsub.f32 %v3063, %v3070
        %v3076 = vsub.f32 %v3064, %v3073
        %v3077 = vmul.f32 %v3074, 1.442695
        %v3078 = vpow.pop %v3077
        %v3079 = vmul.f32 %v3075, 1.442695
        %v3080 = vpow.pop %v3079
        %v3081 = vmul.f32 %v3076, 1.442695
        %v3082 = vpow.pop %v3081
        %v3083 = vsel %vm790, %v3078, 0.0
        %3084 = vadd.xlane.f32.xlu0 %v3083
        %v3085 = vpop.xlane.xlu0 %3084
        %v3086 = vsel %vm790, %v3080, 0.0
        %3087 = vadd.xlane.f32.xlu0 %v3086
        %v3088 = vpop.xlane.xlu0 %3087
        %v3089 = vsel %vm797, %v3082, 0.0
        %3090 = vadd.xlane.f32.xlu0 %v3089
        %v3091 = vpop.xlane.xlu0 %3090
        %v3092 = vrcp.pop %v3085
        %v3093 = vrcp.pop %v3088
        %v3094 = vrcp.pop %v3091
        %v3095 = vmul.f32 %v3078, %v3092
        %v3096 = vmul.f32 %v3080, %v3093
        %v3097 = vmul.f32 %v3082, %v3094
        %3098 = vrot.lane.b32.xlu0 %v2231, 40
        %v3099 = vpop.permute.xlu0 %3098
        %3100 = vrot.lane.b32.xlu0 %v2234, 40
        %v3101 = vpop.permute.xlu0 %3100
        %3102 = vrot.lane.b32.xlu0 %v2239, 40
        %v3103 = vpop.permute.xlu0 %3102
        %v3107 = vsel %vm790, %v3095, 0
        %v3110 = vsel %vm790, %v3096, 0
        %v3113 = vsel %vm790, %v3097, 0
        %v3115 = vsel %vm842, %v3103, 0
        %3117 = vmatprep.subr.mxu0 0.0
        %3118 = vmatpush1.msra.mxu0 0.0
        %3119 = vmatprep.subr.mxu0 0.0
        %3120 = vmatpush1.msra.mxu0 0.0
        %3121 = vmatprep.subr.mxu0 0.0
        %3122 = vmatpush1.msra.mxu0 0.0
        %3123 = vmatprep.subr.mxu0 0.0
        %3124 = vmatpush1.msra.mxu0 0.0
        %3125 = vmatprep.subr.mxu0 0.0
        %3126 = vmatpush1.msra.mxu0 0.0
        %3127 = vmatprep.subr.mxu0 0.0
        %3128 = vmatpush1.msra.mxu0 0.0
        %3129 = vmatprep.subr.mxu0 0.0
        %3130 = vmatpush1.msra.mxu0 0.0
        %3131 = vmatprep.subr.mxu0 0.0
        %3132 = vmatpush1.msra.mxu0 0.0
        %3133 = vmatprep.subr.mxu0 0.0
        %3134 = vmatpush1.msra.mxu0 0.0
        %3135 = vmatprep.subr.mxu0 0.0
        %3136 = vmatpush1.msra.mxu0 0.0
        %3137 = vmatprep.subr.mxu0 0.0
        %3138 = vmatpush1.msra.mxu0 0.0
        %3139 = vmatprep.subr.mxu0 0.0
        %3140 = vmatpush1.msra.mxu0 0.0
        %3141 = vmatprep.subr.mxu0 0.0
        %3142 = vmatpush1.msra.mxu0 0.0
        %3143 = vmatprep.subr.mxu0 0.0
        %3144 = vmatpush1.msra.mxu0 %v3115
        %3145 = vmatprep.subr.mxu0 0.0
        %3146 = vmatpush1.msra.mxu0 %v3101
        %3147 = vmatprep.subr.mxu0 0.0
        %3148 = vmatpush1.msra.mxu0 %v3099
        %3149 = vmatprep.subr.mxu0 0.0
        %3150 = vmatpush2.msra.mxu0 0.0
        %3151 = vmatprep.subr.mxu0 0.0
        %3152 = vmatpush2.msra.mxu0 0.0
        %3153 = vmatprep.subr.mxu0 0.0
        %3154 = vmatpush2.msra.mxu0 0.0
        %3155 = vmatprep.subr.mxu0 0.0
        %3156 = vmatpush2.msra.mxu0 0.0
        %3157 = vmatprep.subr.mxu0 0.0
        %3158 = vmatpush2.msra.mxu0 0.0
        %3159 = vmatprep.subr.mxu0 0.0
        %3160 = vmatpush2.msra.mxu0 0.0
        %3161 = vmatprep.subr.mxu0 0.0
        %3162 = vmatpush2.msra.mxu0 0.0
        %3163 = vmatprep.subr.mxu0 0.0
        %3164 = vmatpush2.msra.mxu0 0.0
        %3165 = vmatprep.subr.mxu0 0.0
        %3166 = vmatpush2.msra.mxu0 0.0
        %3167 = vmatprep.subr.mxu0 0.0
        %3168 = vmatpush2.msra.mxu0 0.0
        %3169 = vmatprep.subr.mxu0 0.0
        %3170 = vmatpush2.msra.mxu0 0.0
        %3171 = vmatprep.subr.mxu0 0.0
        %3172 = vmatpush2.msra.mxu0 0.0
        %3173 = vmatprep.subr.mxu0 0.0
        %3174 = vmatpush2.msra.mxu0 0.0
        %3175 = vmatprep.subr.mxu0 0.0
        %3176 = vmatpush2.msra.mxu0 0.0
        %3177 = vmatprep.subr.mxu0 0.0
        %3178 = vmatpush2.msra.mxu0 0.0
        %3179 = vmatprep.subr.mxu0 0.0
        %3180 = vmatpush2.msra.mxu0 0.0
        %3181 = vmatprep.mubr.f32.mxu0 0.0
        %3182 = vmatmul.mubr.f32.gmra.mxu0 %v3107
        %v3183 = vpop.f32.mrf.mxu0
        %v3184 = vadd.f32 0.0, %v3183
        %v3185 = vpop.f32.mrf.mxu0
        %3186 = vmatprep.mubr.f32.mxu0 0.0
        %3187 = vmatmul.mubr.f32.gmra.mxu0 %v3110
        %v3188 = vpop.f32.mrf.mxu0
        %v3189 = vadd.f32 0.0, %v3188
        %v3190 = vpop.f32.mrf.mxu0
        %3191 = vmatprep.mubr.f32.mxu0 0.0
        %3192 = vmatmul.mubr.f32.gmra.mxu0 %v3113
        %v3193 = vpop.f32.mrf.mxu0
        %v3194 = vadd.f32 0.0, %v3193
        %v3195 = vpop.f32.mrf.mxu0
        %3196 = vdwg.mxu0
        %3200 = vrot.lane.b32.xlu0 %v2706, 8
        %v3201 = vpop.permute.xlu0 %3200
        %3202 = vrot.lane.b32.xlu0 %v2711, 8
        %v3203 = vpop.permute.xlu0 %3202
        %3204 = vrot.lane.b32.xlu0 %v2716, 8
        %v3205 = vpop.permute.xlu0 %3204
        %3212 = vrot.lane.b32.xlu0 %v2945, 16
        %v3213 = vpop.permute.xlu0 %3212
        %3214 = vrot.lane.b32.xlu0 %v2950, 16
        %v3215 = vpop.permute.xlu0 %3214
        %3216 = vrot.lane.b32.xlu0 %v2955, 16
        %v3217 = vpop.permute.xlu0 %3216
        %3224 = vrot.lane.b32.xlu0 %v3184, 24
        %v3225 = vpop.permute.xlu0 %3224
        %3226 = vrot.lane.b32.xlu0 %v3189, 24
        %v3227 = vpop.permute.xlu0 %3226
        %3228 = vrot.lane.b32.xlu0 %v3194, 24
        %v3229 = vpop.permute.xlu0 %3228
        %v3233 = vsel %vm694, %v2467, %v3201
        %v3234 = vsel %vm694, %v2472, %v3203
        %v3235 = vsel %vm694, %v2477, %v3205
        %v3236 = vsel %vm1681, %v3233, %v3213
        %v3237 = vsel %vm1681, %v3234, %v3215
        %v3238 = vsel %vm1681, %v3235, %v3217
        %v3239 = vsel %vm1685, %v3236, %v3225
        %v3240 = vsel %vm1685, %v3237, %v3227
        %v3241 = vsel %vm1685, %v3238, %v3229
        %s3242 = scalar_lea.vmem %s6, 16
        %v3243 = vld [vmem:[%s3242] sm:$0xf]
        %v3244 = vld [vmem:[%s3242 + $0x4] sm:$0xf]
        %v3245 = vld [vmem:[%s3242 + $0x8] sm:$0xf]
        %v3246 = vld [vmem:[%s3242 + $0xc] sm:$0xf]
        %v3247 = vpack.c.bf16 %v3240, %v3239
        %v3248 = vpack.c.bf16 %v3241, %v3241
        %v3253 = vunpack.c.l.b16 %v3243
        %v3254 = vunpack.c.l.b16 %v3244
        %v3255 = vunpack.c.l.b16 %v3245
        %v3256 = vunpack.c.l.b16 %v3246
        %v3257 = vpack.c.b16 %v3254, %v3253
        %v3258 = vpack.c.b16 %v3256, %v3255
        %v3262 = vsel %vm550, %v3247, 0
        %v3265 = vsel %vm550, %v3248, 0
        %3267 = vmatprep.subr.bf16.mxu0 0
        %3268 = vmatpush1.bf16.msra.mxu0 0
        %3269 = vmatprep.subr.bf16.mxu0 0
        %3270 = vmatpush1.bf16.msra.mxu0 0
        %3271 = vmatprep.subr.bf16.mxu0 0
        %3272 = vmatpush1.bf16.msra.mxu0 0
        %3273 = vmatprep.subr.bf16.mxu0 0
        %3274 = vmatpush1.bf16.msra.mxu0 0
        %3275 = vmatprep.subr.bf16.mxu0 0
        %3276 = vmatpush1.bf16.msra.mxu0 0
        %3277 = vmatprep.subr.bf16.mxu0 0
        %3278 = vmatpush1.bf16.msra.mxu0 0
        %3279 = vmatprep.subr.bf16.mxu0 0
        %3280 = vmatpush1.bf16.msra.mxu0 %v3258
        %3281 = vmatprep.subr.bf16.mxu0 0
        %3282 = vmatpush1.bf16.msra.mxu0 %v3257
        %3283 = vmatprep.subr.bf16.mxu0 0
        %3284 = vmatpush2.bf16.msra.mxu0 0
        %3285 = vmatprep.subr.bf16.mxu0 0
        %3286 = vmatpush2.bf16.msra.mxu0 0
        %3287 = vmatprep.subr.bf16.mxu0 0
        %3288 = vmatpush2.bf16.msra.mxu0 0
        %3289 = vmatprep.subr.bf16.mxu0 0
        %3290 = vmatpush2.bf16.msra.mxu0 0
        %3291 = vmatprep.subr.bf16.mxu0 0
        %3292 = vmatpush2.bf16.msra.mxu0 0
        %3293 = vmatprep.subr.bf16.mxu0 0
        %3294 = vmatpush2.bf16.msra.mxu0 0
        %3295 = vmatprep.subr.bf16.mxu0 0
        %3296 = vmatpush2.bf16.msra.mxu0 0
        %3297 = vmatprep.subr.bf16.mxu0 0
        %3298 = vmatpush2.bf16.msra.mxu0 0
        %3299 = vmatprep.mubr.bf16.mxu0 0
        %3300 = vmatmul.mubr.bf16.gmra.mxu0 %v3262
        %v3301 = vpop.f32.mrf.mxu0
        %v3302 = vadd.f32 0.0, %v3301
        %v3303 = vpop.f32.mrf.mxu0
        %v3304 = vpop.f32.mrf.mxu0
        %v3305 = vadd.f32 0.0, %v3304
        %v3306 = vpop.f32.mrf.mxu0
        %3307 = vmatprep.mubr.bf16.mxu0 0
        %3308 = vmatmul.mubr.bf16.gmra.mxu0 %v3265
        %v3309 = vpop.f32.mrf.mxu0
        %v3310 = vadd.f32 0.0, %v3309
        %v3311 = vpop.f32.mrf.mxu0
        %v3312 = vpop.f32.mrf.mxu0
        %v3313 = vpop.f32.mrf.mxu0
        %3314 = vdwg.mxu0
        %v3315 = vadd.f32 %v2105, %v3302
        %v3316 = vadd.f32 %v2106, %v3305
        %v3317 = vadd.f32 %v2107, %v3310
        %v3318 = vlaneseq
        %v3319 = vshrl.u32 %v3318, 7
        %v3320 = vsub.s32 2, %v3319
        %v3321 = vrot.slane %v2109, %v3320
        %v3322 = vadd.f32 %v3315, %v3321
        %v3323 = vadd.f32 %v3316, %v3321
        %v3324 = vadd.f32 %v3317, %v3321
        %v3325 = vsel %vm550, %v3322, 0.0
        %3326 = vadd.xlane.f32.xlu0 %v3325
        %v3327 = vpop.xlane.xlu0 %3326
        %v3328 = vsel %vm550, %v3323, 0.0
        %3329 = vadd.xlane.f32.xlu0 %v3328
        %v3330 = vpop.xlane.xlu0 %3329
        %v3331 = vsel %vm557, %v3324, 0.0
        %3332 = vadd.xlane.f32.xlu0 %v3331
        %v3333 = vpop.xlane.xlu0 %3332
        %v3334 = vmul.f32 %v3327, %v561
        %v3335 = vmul.f32 %v3330, %v561
        %v3336 = vmul.f32 %v3333, %v561
        %v3337 = vsub.f32 %v3322, %v3334
        %v3338 = vsub.f32 %v3323, %v3335
        %v3339 = vsub.f32 %v3324, %v3336
        %v3340 = vmul.f32 %v3337, %v3337
        %v3341 = vmul.f32 %v3338, %v3338
        %v3342 = vmul.f32 %v3339, %v3339
        %v3343 = vsel %vm550, %v3340, 0.0
        %3344 = vadd.xlane.f32.xlu0 %v3343
        %v3345 = vpop.xlane.xlu0 %3344
        %v3346 = vsel %vm550, %v3341, 0.0
        %3347 = vadd.xlane.f32.xlu0 %v3346
        %v3348 = vpop.xlane.xlu0 %3347
        %v3349 = vsel %vm557, %v3342, 0.0
        %3350 = vadd.xlane.f32.xlu0 %v3349
        %v3351 = vpop.xlane.xlu0 %3350
        %v3352 = vmul.f32 %v3345, %v561
        %v3353 = vmul.f32 %v3348, %v561
        %v3354 = vmul.f32 %v3351, %v561
        %v3355 = vadd.f32 %v3352, 1e-05
        %v3356 = vadd.f32 %v3353, 1e-05
        %v3357 = vadd.f32 %v3354, 1e-05
        %v3358 = vrsqrt.pop %v3355
        %v3359 = vrsqrt.pop %v3356
        %v3360 = vrsqrt.pop %v3357
        %v3361 = vmul.f32 %v3337, %v3358
        %v3362 = vmul.f32 %v3338, %v3359
        %v3363 = vmul.f32 %v3339, %v3360
        %v3364 = vlaneseq
        %v3365 = vshrl.u32 %v3364, 7
        %v3366 = vsub.s32 3, %v3365
        %v3367 = vrot.slane %v2109, %v3366
        %v3368 = vmul.f32 %v3361, %v3367
        %v3369 = vmul.f32 %v3362, %v3367
        %v3370 = vmul.f32 %v3363, %v3367
        %v3371 = vlaneseq
        %v3372 = vshrl.u32 %v3371, 7
        %v3373 = vsub.s32 4, %v3372
        %v3374 = vrot.slane %v2109, %v3373
        %v3375 = vadd.f32 %v3368, %v3374
        %v3376 = vadd.f32 %v3369, %v3374
        %v3377 = vadd.f32 %v3370, %v3374
        %s3378 = scalar_lea.vmem %s7, 16
        %v3379 = vld [vmem:[%s3378] sm:$0xf]
        %v3380 = vld [vmem:[%s3378 + $0x4] sm:$0xf]
        %v3381 = vld [vmem:[%s3378 + $0x8] sm:$0xf]
        %v3382 = vld [vmem:[%s3378 + $0xc] sm:$0xf]
        %v3383 = vpack.c.bf16 %v3376, %v3375
        %v3384 = vpack.c.bf16 %v3377, %v3377
        %s3385 = scalar_lea.vmem %s8, 1
        %v3386 = vld [vmem:[%s3385] sm:$0x1]
        %v3388 = vlaneseq
        %v3389 = vshrl.u32 %v3388, 7
        %v3390 = vsub.s32 0, %v3389
        %v3391 = vrot.slane %v3386, %v3390
        %v3397 = vunpack.c.l.b16 %v3379
        %v3398 = vunpack.c.l.b16 %v3380
        %v3399 = vunpack.c.l.b16 %v3381
        %v3400 = vunpack.c.l.b16 %v3382
        %v3401 = vpack.c.b16 %v3398, %v3397
        %v3402 = vpack.c.b16 %v3400, %v3399
        %v3406 = vsel %vm550, %v3383, 0
        %v3409 = vsel %vm550, %v3384, 0
        %3411 = vmatprep.subr.bf16.mxu0 0
        %3412 = vmatpush1.bf16.msra.mxu0 0
        %3413 = vmatprep.subr.bf16.mxu0 0
        %3414 = vmatpush1.bf16.msra.mxu0 0
        %3415 = vmatprep.subr.bf16.mxu0 0
        %3416 = vmatpush1.bf16.msra.mxu0 0
        %3417 = vmatprep.subr.bf16.mxu0 0
        %3418 = vmatpush1.bf16.msra.mxu0 0
        %3419 = vmatprep.subr.bf16.mxu0 0
        %3420 = vmatpush1.bf16.msra.mxu0 0
        %3421 = vmatprep.subr.bf16.mxu0 0
        %3422 = vmatpush1.bf16.msra.mxu0 0
        %3423 = vmatprep.subr.bf16.mxu0 0
        %3424 = vmatpush1.bf16.msra.mxu0 %v3402
        %3425 = vmatprep.subr.bf16.mxu0 0
        %3426 = vmatpush1.bf16.msra.mxu0 %v3401
        %3427 = vmatprep.subr.bf16.mxu0 0
        %3428 = vmatpush2.bf16.msra.mxu0 0
        %3429 = vmatprep.subr.bf16.mxu0 0
        %3430 = vmatpush2.bf16.msra.mxu0 0
        %3431 = vmatprep.subr.bf16.mxu0 0
        %3432 = vmatpush2.bf16.msra.mxu0 0
        %3433 = vmatprep.subr.bf16.mxu0 0
        %3434 = vmatpush2.bf16.msra.mxu0 0
        %3435 = vmatprep.subr.bf16.mxu0 0
        %3436 = vmatpush2.bf16.msra.mxu0 0
        %3437 = vmatprep.subr.bf16.mxu0 0
        %3438 = vmatpush2.bf16.msra.mxu0 0
        %3439 = vmatprep.subr.bf16.mxu0 0
        %3440 = vmatpush2.bf16.msra.mxu0 0
        %3441 = vmatprep.subr.bf16.mxu0 0
        %3442 = vmatpush2.bf16.msra.mxu0 0
        %3443 = vmatprep.mubr.bf16.mxu0 0
        %3444 = vmatmul.mubr.bf16.gmra.mxu0 %v3406
        %v3445 = vpop.f32.mrf.mxu0
        %v3446 = vadd.f32 %v3391, %v3445
        %v3447 = vpop.f32.mrf.mxu0
        %v3448 = vpop.f32.mrf.mxu0
        %v3449 = vadd.f32 %v3391, %v3448
        %v3450 = vpop.f32.mrf.mxu0
        %3451 = vmatprep.mubr.bf16.mxu0 0
        %3452 = vmatmul.mubr.bf16.gmra.mxu0 %v3409
        %v3453 = vpop.f32.mrf.mxu0
        %v3454 = vadd.f32 %v3391, %v3453
        %v3455 = vpop.f32.mrf.mxu0
        %v3456 = vpop.f32.mrf.mxu0
        %v3457 = vpop.f32.mrf.mxu0
        %3458 = vdwg.mxu0
        %v3459 = vmul.f32 %v3446, 0.5
        %v3460 = vmul.f32 %v3449, 0.5
        %v3461 = vmul.f32 %v3454, 0.5
        %v3462 = vmul.f32 %v3446, 0.70710677
        %v3463 = vmul.f32 %v3449, 0.70710677
        %v3464 = vmul.f32 %v3454, 0.70710677
        %v3465 = vand.u32 2147483647, %v3462
        %v3466 = vand.u32 2147483647, %v3463
        %v3467 = vand.u32 2147483647, %v3464
        %v3468 = vmul.f32 %v3465, 0.3275911
        %v3469 = vmul.f32 %v3466, 0.3275911
        %v3470 = vmul.f32 %v3467, 0.3275911
        %v3471 = vadd.f32 %v3468, 1.0
        %v3472 = vadd.f32 %v3469, 1.0
        %v3473 = vadd.f32 %v3470, 1.0
        %v3474 = vrcp.pop %v3471
        %v3475 = vmul.f32 1.0, %v3474
        %v3476 = vrcp.pop %v3472
        %v3477 = vmul.f32 1.0, %v3476
        %v3478 = vrcp.pop %v3473
        %v3479 = vmul.f32 1.0, %v3478
        %v3480 = vmul.f32 %v3475, 1.0614054
        %v3481 = vmul.f32 %v3477, 1.0614054
        %v3482 = vmul.f32 %v3479, 1.0614054
        %v3483 = vadd.f32 %v3480, -1.4531521
        %v3484 = vadd.f32 %v3481, -1.4531521
        %v3485 = vadd.f32 %v3482, -1.4531521
        %v3486 = vmul.f32 %v3483, %v3475
        %v3487 = vmul.f32 %v3484, %v3477
        %v3488 = vmul.f32 %v3485, %v3479
        %v3489 = vadd.f32 %v3486, 1.4214138
        %v3490 = vadd.f32 %v3487, 1.4214138
        %v3491 = vadd.f32 %v3488, 1.4214138
        %v3492 = vmul.f32 %v3489, %v3475
        %v3493 = vmul.f32 %v3490, %v3477
        %v3494 = vmul.f32 %v3491, %v3479
        %v3495 = vadd.f32 %v3492, -0.28449672
        %v3496 = vadd.f32 %v3493, -0.28449672
        %v3497 = vadd.f32 %v3494, -0.28449672
        %v3498 = vmul.f32 %v3495, %v3475
        %v3499 = vmul.f32 %v3496, %v3477
        %v3500 = vmul.f32 %v3497, %v3479
        %v3501 = vadd.f32 %v3498, 0.2548296
        %v3502 = vadd.f32 %v3499, 0.2548296
        %v3503 = vadd.f32 %v3500, 0.2548296
        %v3504 = vmul.f32 %v3501, %v3475
        %v3505 = vmul.f32 %v3502, %v3477
        %v3506 = vmul.f32 %v3503, %v3479
        %v3507 = vsub.f32 0.0, %v3465
        %v3508 = vsub.f32 0.0, %v3466
        %v3509 = vsub.f32 0.0, %v3467
        %v3510 = vmul.f32 %v3507, %v3465
        %v3511 = vmul.f32 %v3508, %v3466
        %v3512 = vmul.f32 %v3509, %v3467
        %v3513 = vmul.f32 %v3510, 1.442695
        %v3514 = vpow.pop %v3513
        %v3515 = vmul.f32 %v3511, 1.442695
        %v3516 = vpow.pop %v3515
        %v3517 = vmul.f32 %v3512, 1.442695
        %v3518 = vpow.pop %v3517
        %v3519 = vmul.f32 %v3504, %v3514
        %v3520 = vmul.f32 %v3505, %v3516
        %v3521 = vmul.f32 %v3506, %v3518
        %v3522 = vsub.f32 1.0, %v3519
        %v3523 = vsub.f32 1.0, %v3520
        %v3524 = vsub.f32 1.0, %v3521
        %vm3525 = vcmp.ge.f32.partialorder %v3462, 0.0
        %vm3526 = vcmp.ge.f32.partialorder %v3463, 0.0
        %vm3527 = vcmp.ge.f32.partialorder %v3464, 0.0
        %v3528 = vsub.f32 0.0, %v3522
        %v3529 = vsub.f32 0.0, %v3523
        %v3530 = vsub.f32 0.0, %v3524
        %v3531 = vsel %vm3525, %v3522, %v3528
        %v3532 = vsel %vm3526, %v3523, %v3529
        %v3533 = vsel %vm3527, %v3524, %v3530
        %v3534 = vadd.f32 %v3531, 1.0
        %v3535 = vadd.f32 %v3532, 1.0
        %v3536 = vadd.f32 %v3533, 1.0
        %v3537 = vmul.f32 %v3459, %v3534
        %v3538 = vmul.f32 %v3460, %v3535
        %v3539 = vmul.f32 %v3461, %v3536
        %s3540 = scalar_lea.vmem %s9, 64
        %v3541 = vld [vmem:[%s3540] sm:$0xf]
        %v3542 = vld [vmem:[%s3540 + $0x4] sm:$0xf]
        %v3543 = vld [vmem:[%s3540 + $0x8] sm:$0xf]
        %v3544 = vld [vmem:[%s3540 + $0xc] sm:$0xf]
        %v3545 = vld [vmem:[%s3540 + $0x10] sm:$0xf]
        %v3546 = vld [vmem:[%s3540 + $0x14] sm:$0xf]
        %v3547 = vld [vmem:[%s3540 + $0x18] sm:$0xf]
        %v3548 = vld [vmem:[%s3540 + $0x1c] sm:$0xf]
        %v3549 = vld [vmem:[%s3540 + $0x20] sm:$0xf]
        %v3550 = vld [vmem:[%s3540 + $0x24] sm:$0xf]
        %v3551 = vld [vmem:[%s3540 + $0x28] sm:$0xf]
        %v3552 = vld [vmem:[%s3540 + $0x2c] sm:$0xf]
        %v3553 = vld [vmem:[%s3540 + $0x30] sm:$0xf]
        %v3554 = vld [vmem:[%s3540 + $0x34] sm:$0xf]
        %v3555 = vld [vmem:[%s3540 + $0x38] sm:$0xf]
        %v3556 = vld [vmem:[%s3540 + $0x3c] sm:$0xf]
        %v3557 = vpack.c.bf16 %v3538, %v3537
        %v3558 = vpack.c.bf16 %v3539, %v3539
        %v3575 = vunpack.c.l.b16 %v3541
        %v3576 = vunpack.c.l.b16 %v3542
        %v3577 = vunpack.c.l.b16 %v3543
        %v3578 = vunpack.c.l.b16 %v3544
        %v3579 = vunpack.c.l.b16 %v3545
        %v3580 = vunpack.c.l.b16 %v3546
        %v3581 = vunpack.c.l.b16 %v3547
        %v3582 = vunpack.c.l.b16 %v3548
        %v3583 = vunpack.c.l.b16 %v3549
        %v3584 = vunpack.c.l.b16 %v3550
        %v3585 = vunpack.c.l.b16 %v3551
        %v3586 = vunpack.c.l.b16 %v3552
        %v3587 = vunpack.c.l.b16 %v3553
        %v3588 = vunpack.c.l.b16 %v3554
        %v3589 = vunpack.c.l.b16 %v3555
        %v3590 = vunpack.c.l.b16 %v3556
        %v3591 = vpack.c.b16 %v3576, %v3575
        %v3592 = vpack.c.b16 %v3578, %v3577
        %v3593 = vpack.c.b16 %v3580, %v3579
        %v3594 = vpack.c.b16 %v3582, %v3581
        %v3595 = vpack.c.b16 %v3584, %v3583
        %v3596 = vpack.c.b16 %v3586, %v3585
        %v3597 = vpack.c.b16 %v3588, %v3587
        %v3598 = vpack.c.b16 %v3590, %v3589
        %3607 = vmatprep.subr.bf16.mxu0 0
        %3608 = vmatpush1.bf16.msra.mxu0 %v3598
        %3609 = vmatprep.subr.bf16.mxu0 0
        %3610 = vmatpush1.bf16.msra.mxu0 %v3597
        %3611 = vmatprep.subr.bf16.mxu0 0
        %3612 = vmatpush1.bf16.msra.mxu0 %v3596
        %3613 = vmatprep.subr.bf16.mxu0 0
        %3614 = vmatpush1.bf16.msra.mxu0 %v3595
        %3615 = vmatprep.subr.bf16.mxu0 0
        %3616 = vmatpush1.bf16.msra.mxu0 %v3594
        %3617 = vmatprep.subr.bf16.mxu0 0
        %3618 = vmatpush1.bf16.msra.mxu0 %v3593
        %3619 = vmatprep.subr.bf16.mxu0 0
        %3620 = vmatpush1.bf16.msra.mxu0 %v3592
        %3621 = vmatprep.subr.bf16.mxu0 0
        %3622 = vmatpush1.bf16.msra.mxu0 %v3591
        %3623 = vmatprep.subr.bf16.mxu0 0
        %3624 = vmatpush2.bf16.msra.mxu0 0
        %3625 = vmatprep.subr.bf16.mxu0 0
        %3626 = vmatpush2.bf16.msra.mxu0 0
        %3627 = vmatprep.subr.bf16.mxu0 0
        %3628 = vmatpush2.bf16.msra.mxu0 0
        %3629 = vmatprep.subr.bf16.mxu0 0
        %3630 = vmatpush2.bf16.msra.mxu0 0
        %3631 = vmatprep.subr.bf16.mxu0 0
        %3632 = vmatpush2.bf16.msra.mxu0 0
        %3633 = vmatprep.subr.bf16.mxu0 0
        %3634 = vmatpush2.bf16.msra.mxu0 0
        %3635 = vmatprep.subr.bf16.mxu0 0
        %3636 = vmatpush2.bf16.msra.mxu0 0
        %3637 = vmatprep.subr.bf16.mxu0 0
        %3638 = vmatpush2.bf16.msra.mxu0 0
        %3639 = vmatprep.mubr.bf16.mxu0 0
        %3640 = vmatmul.mubr.bf16.gmra.mxu0 %v3557
        %v3641 = vpop.f32.mrf.mxu0
        %v3642 = vadd.f32 0.0, %v3641
        %v3643 = vpop.f32.mrf.mxu0
        %v3644 = vpop.f32.mrf.mxu0
        %v3645 = vpop.f32.mrf.mxu0
        %3646 = vmatprep.mubr.bf16.mxu0 0
        %3647 = vmatmul.mubr.bf16.gmra.mxu0 %v3558
        %v3648 = vpop.f32.mrf.mxu0
        %v3649 = vpop.f32.mrf.mxu0
        %v3650 = vpop.f32.mrf.mxu0
        %v3651 = vpop.f32.mrf.mxu0
        %3652 = vdwg.mxu0
        %v3653 = vadd.f32 %v3322, %v3642
        %v3654 = vlaneseq
        %v3655 = vshrl.u32 %v3654, 7
        %v3656 = vsub.s32 5, %v3655
        %v3657 = vrot.slane %v2109, %v3656
        %v3658 = vadd.f32 %v3653, %v3657
        %v3659 = vld [vmem:[%s2 + $0x2] sm:$0x1]
        %v3660 = vld [vmem:[%s2 + $0x3] sm:$0x1]
        %v3661 = vsel %vm557, %v3658, 0.0
        %3662 = vadd.xlane.f32.xlu0 %v3661
        %v3663 = vpop.xlane.xlu0 %3662
        %v3664 = vmul.f32 %v3663, %v561
        %v3665 = vsub.f32 %v3658, %v3664
        %v3666 = vmul.f32 %v3665, %v3665
        %v3667 = vsel %vm557, %v3666, 0.0
        %3668 = vadd.xlane.f32.xlu0 %v3667
        %v3669 = vpop.xlane.xlu0 %3668
        %v3670 = vmul.f32 %v3669, %v561
        %v3671 = vadd.f32 %v3670, 1e-05
        %v3672 = vrsqrt.pop %v3671
        %v3673 = vmul.f32 %v3665, %v3672
        %v3674 = vmul.f32 %v3673, %v3659
        %v3675 = vadd.f32 %v3674, %v3660
        %v3676 = vld [vmem:[%s11] sm:$0xf]
        %v3677 = vld [vmem:[%s11 + $0x4] sm:$0xf]
        %v3678 = vld [vmem:[%s11 + $0x8] sm:$0xf]
        %v3679 = vld [vmem:[%s11 + $0xc] sm:$0xf]
        %v3680 = vpack.c.bf16 %v3675, %v3675
        %v3681 = vld [vmem:[%s12] sm:$0x1]
        %v3686 = vunpack.c.l.b16 %v3676
        %v3687 = vunpack.c.l.b16 %v3677
        %v3688 = vunpack.c.l.b16 %v3678
        %v3689 = vunpack.c.l.b16 %v3679
        %v3690 = vpack.c.b16 %v3687, %v3686
        %v3691 = vpack.c.b16 %v3689, %v3688
        %v3695 = vsel %vm550, %v3680, 0
        %3697 = vmatprep.subr.bf16.mxu0 0
        %3698 = vmatpush1.bf16.msra.mxu0 0
        %3699 = vmatprep.subr.bf16.mxu0 0
        %3700 = vmatpush1.bf16.msra.mxu0 0
        %3701 = vmatprep.subr.bf16.mxu0 0
        %3702 = vmatpush1.bf16.msra.mxu0 0
        %3703 = vmatprep.subr.bf16.mxu0 0
        %3704 = vmatpush1.bf16.msra.mxu0 0
        %3705 = vmatprep.subr.bf16.mxu0 0
        %3706 = vmatpush1.bf16.msra.mxu0 0
        %3707 = vmatprep.subr.bf16.mxu0 0
        %3708 = vmatpush1.bf16.msra.mxu0 0
        %3709 = vmatprep.subr.bf16.mxu0 0
        %3710 = vmatpush1.bf16.msra.mxu0 %v3691
        %3711 = vmatprep.subr.bf16.mxu0 0
        %3712 = vmatpush1.bf16.msra.mxu0 %v3690
        %3713 = vmatprep.subr.bf16.mxu0 0
        %3714 = vmatpush2.bf16.msra.mxu0 0
        %3715 = vmatprep.subr.bf16.mxu0 0
        %3716 = vmatpush2.bf16.msra.mxu0 0
        %3717 = vmatprep.subr.bf16.mxu0 0
        %3718 = vmatpush2.bf16.msra.mxu0 0
        %3719 = vmatprep.subr.bf16.mxu0 0
        %3720 = vmatpush2.bf16.msra.mxu0 0
        %3721 = vmatprep.subr.bf16.mxu0 0
        %3722 = vmatpush2.bf16.msra.mxu0 0
        %3723 = vmatprep.subr.bf16.mxu0 0
        %3724 = vmatpush2.bf16.msra.mxu0 0
        %3725 = vmatprep.subr.bf16.mxu0 0
        %3726 = vmatpush2.bf16.msra.mxu0 0
        %3727 = vmatprep.subr.bf16.mxu0 0
        %3728 = vmatpush2.bf16.msra.mxu0 0
        %3729 = vmatprep.mubr.bf16.mxu0 0
        %3730 = vmatmul.mubr.bf16.gmra.mxu0 %v3695
        %v3731 = vpop.f32.mrf.mxu0
        %v3732 = vadd.f32 %v3681, %v3731
        %v3733 = vpop.f32.mrf.mxu0
        %v3734 = vpop.f32.mrf.mxu0
        %v3735 = vpop.f32.mrf.mxu0
        %3736 = vdwg.mxu0
        %vm3737 = vcmask 73728
        %3738 = vst.msk [vmem:[%s432] sm:$0x1] %vm3737, %v3732
        %s3739 = sand.u32 %s313, 1
        %s3740 = scalar_lea.sflag [#allocation3], %s3739
        %s3741 = sand.u32 %s313, 1
        %s3742 = scalar_lea.vmem [#allocation2], %s3741
        // Predicated region
        $region73: #{vit_forward.1} parent=71 // pred_check
          %p3743 = pneg %p323
        $region74: #{vit_forward.1} parent=71 // pred_check_branch
          %3745 = sbr.rel (%p3743) target = $region76
        $region75: #{vit_forward.1} parent=71 // pred_region
          %s3747 = ssub.s32 16, 16
          %3748 = vsyncadd %s3740, %s3747
          %s3749 = smul.addr %s27, 16
          %s3750 = scalar_lea.hbm %s13, %s3749
          %s3752 = sshll.u32 %s3742, 4
          %s3753 = int_to_ptr.vmem [resolvable:$true] %s3752
          %3755 = dma.vmem_to_hbm [thread:$0]  %s3753, 16, %s3750, %s3740
        $region76: #{vit_forward.1} parent=71 // pred_fallthru
          _
      $region72: #{vit_forward.1} parent=5 // pred_fallthru
        _
      %p3756 = scmp.le.s32.totalorder 2, %s22
      // Predicated region
      $region77: #{vit_forward.1} parent=5 // pred_check
        %p3757 = pneg %p3756
      $region78: #{vit_forward.1} parent=5 // pred_check_branch
        %3759 = sbr.rel (%p3757) target = $region80
      $region79: #{vit_forward.1} parent=5 // pred_region
        %s3760 = ssub.s32 %s22, 2
        // Predicated region
        $region81: #{vit_forward.1} parent=79 // pred_check
          %p3761 = pneg %p329
        $region82: #{vit_forward.1} parent=79 // pred_check_branch
          %3763 = sbr.rel (%p3761) target = $region84
        $region83: #{vit_forward.1} parent=79 // pred_region
          %s3764 = sand.u32 %s314, 1
          %s3765 = scalar_lea.sflag [#allocation3], %s3764
          %s3766 = sand.u32 %s314, 1
          %s3767 = scalar_lea.vmem [#allocation2], %s3766
          %3768 = dma.done %s3765, 16
        $region84: #{vit_forward.1} parent=79 // pred_fallthru
          _
      $region80: #{vit_forward.1} parent=5 // pred_fallthru
        _
    $region6: #{vit_forward.1} parent=1 // loop_footer
      %s26 = sadd.s32 1, %s22
    $region7: #{vit_forward.1} parent=1 // loop_footer_branch
      %21 = sbr.rel target = $region3
    $region8: #{vit_forward.1} parent=1 // loop_exit
      _
    %3769 = vsyncpa [#allocation3], 1
    %s3770 = scalar_lea.sflag [#allocation3], 1
    %3771 = vsyncpa %s3770, 1

</llo_original>
